<compile_context>
chip_gen: v7x
topology: tpu7x:2x2x1
jax: 0.10.0
libtpu: 0.0.40
codegen_flags: <defaults>
</compile_context>

<pallas_src>
import functools

import jax
import jax.numpy as jnp
from jax.experimental import pallas as pl
from jax.experimental.pallas import tpu as pltpu


def _round_up(x, m):
    return (x + m - 1) // m * m


# ---------------- fused GEMM kernel (+ optional column stats, activation) ---
def _gemm_kernel(*refs, act, with_stats):
    """o = act(a @ b); optional stats rows 0/1 = per-column sum / sum-of-sq."""
    a_ref, b_ref, o_ref = refs[:3]
    acc = jnp.dot(a_ref[...], b_ref[...], preferred_element_type=jnp.float32)
    if with_stats:
        stat_ref = refs[3]
        # Two direct sublane stores; rows 2-7 are never read downstream.
        stat_ref[0:1, :] = jnp.sum(acc, axis=0, keepdims=True)
        stat_ref[1:2, :] = jnp.sum(acc * acc, axis=0, keepdims=True)
    y = acc
    if act == "relu":
        y = jnp.maximum(y, 0.0)
    elif act == "tanh":
        y = jnp.tanh(y)                               # EUP slot, free in epilogue
    o_ref[...] = y.astype(o_ref.dtype)


def _vmem_budget_bytes():
    """Scoped-VMEM budget: half of physical, capped at 64 MiB."""
    try:
        cap = int(pltpu.get_tpu_info().vmem_capacity_bytes)
    except Exception:
        cap = 128 * 1024 * 1024
    return max(16 * 1024 * 1024, min(cap // 2, 64 * 1024 * 1024))


def _choose_tn(np_, cap=512):
    if np_ <= cap:
        return np_
    for t in (512, 256):              # largest multiple of the 256-wide MXU
        if t <= cap and np_ % t == 0:
            return t
    return 128


def _step_vmem_bytes(tm, tn, kp, out_bytes, with_stats):
    a = 2 * tm * kp * 2               # double-buffered bf16 A block
    b = 2 * kp * tn * 2               # double-buffered bf16 B block
    o = 2 * tm * tn * out_bytes       # double-buffered output block
    s = 2 * 8 * tn * 4 if with_stats else 0
    work = 3 * tm * tn * 4            # f32 acc / square / activated temporaries
    return a + b + o + s + work


def fused_gemm(a_padded, m_rows, b_padded, n_cols, *, act="none",
               out_dtype=jnp.bfloat16, with_stats=True):
    """act(a @ b)[:m_rows, :n_cols] (+ per-column sum / sumsq of a @ b).

    a_padded: (Mp, Kp) bf16 zero-padded patch matrix (Mp % 8 == 0, Kp % 128 == 0).
    b_padded: (Kp, Np) bf16 zero-padded weight (Np % 128 == 0).
    """
    mp, kp = a_padded.shape
    kp2, np_ = b_padded.shape
    assert kp == kp2 and n_cols <= np_ and m_rows <= mp
    assert mp % 8 == 0 and kp % 128 == 0 and np_ % 128 == 0

    budget = _vmem_budget_bytes()
    out_bytes = jnp.dtype(out_dtype).itemsize
    tm = 512 if (mp >= 512 and mp % 512 == 0) else mp
    tn = _choose_tn(np_)
    headroom = int(budget * 0.85)
    while _step_vmem_bytes(tm, tn, kp, out_bytes, with_stats) > headroom:
        if tm >= tn and tm > 64 and mp % (tm // 2) == 0:
            tm //= 2
        elif tn > 128 and np_ % (tn // 2) == 0:
            tn //= 2
        else:
            break
    # Megacore (v7x): never leave a layer as a single grid step if splittable.
    if mp // tm == 1 and np_ // tn == 1 and mp >= 256 and mp % (tm // 2) == 0:
        tm //= 2
    gm, gn = mp // tm, np_ // tn

    if with_stats:
        out_shape = (jax.ShapeDtypeStruct((mp, np_), out_dtype),
                     jax.ShapeDtypeStruct((gm * 8, np_), jnp.float32))
        out_specs = (pl.BlockSpec((tm, tn), lambda i, j: (i, j)),
                     pl.BlockSpec((8, tn), lambda i, j: (i, j)))
    else:
        out_shape = jax.ShapeDtypeStruct((mp, np_), out_dtype)
        out_specs = pl.BlockSpec((tm, tn), lambda i, j: (i, j))

    res = pl.pallas_call(
        functools.partial(_gemm_kernel, act=act, with_stats=with_stats),
        out_shape=out_shape,
        grid_spec=pltpu.PrefetchScalarGridSpec(
            num_scalar_prefetch=0,
            grid=(gm, gn),
            in_specs=[pl.BlockSpec((tm, kp), lambda i, j: (i, 0)),
                      pl.BlockSpec((kp, tn), lambda i, j: (0, j))],
            out_specs=out_specs),
        compiler_params=pltpu.CompilerParams(
            dimension_semantics=("parallel", "parallel"),
            vmem_limit_bytes=budget),
    )(a_padded, b_padded)

    if with_stats:
        out, stats = res
        stats = stats.reshape(gm, 8, np_)
        col_sum = jnp.sum(stats[:, 0, :n_cols], axis=0)
        col_sumsq = jnp.sum(stats[:, 1, :n_cols], axis=0)
        return out[:m_rows, :n_cols], col_sum, col_sumsq
    return res[:m_rows, :n_cols]


# --------------------- one-time weight repacking (host side) ----------------
def _prep_convt_s2_weight(w):
    """ConvTranspose2d(k=4, s=2, p=1) weight (Cin, Cout, 4, 4) -> padded bf16
    GEMM weight (round_up(9*Cin, 128), round_up(4*Cout, 128)).

    Row    = (dh*3 + dw)*Cin + ci  for 3x3 window tap (dh, dw) of padded input.
    Column = (a*2 + b)*Cout + co   for output-pixel parity (a, b).
    Entry  = w[ci, co, 3+a-2*dh, 3+b-2*dw] when that kernel index is in [0, 3].
    """
    cin, cout = w.shape[0], w.shape[1]
    k, n = 9 * cin, 4 * cout
    wg = jnp.zeros((k, n), jnp.float32)
    for a in range(2):
        for b in range(2):
            for dh in range(3):
                kh = 3 + a - 2 * dh
                if not 0 <= kh <= 3:
                    continue
                for dw in range(3):
                    kw = 3 + b - 2 * dw
                    if not 0 <= kw <= 3:
                        continue
                    r0 = (dh * 3 + dw) * cin
                    c0 = (a * 2 + b) * cout
                    wg = wg.at[r0:r0 + cin, c0:c0 + cout].set(w[:, :, kh, kw])
    wg = jnp.pad(wg, ((0, _round_up(k, 128) - k), (0, _round_up(n, 128) - n)))
    return wg.astype(jnp.bfloat16)


def prepare_params(params):
    """One-time repack of PyTorch-layout params into GEMM weights."""
    (w1, g1, b1, w2, g2, b2, w3, g3, b3, w4, g4, b4, w5) = params
    nz, c1 = w1.shape[0], w1.shape[1]
    # layer 1 (1x1 input, s=1, p=0): columns ordered (kh, kw, co) so the GEMM
    # output reshapes straight to NHWC; plain XLA dot, no padding needed.
    w1g = w1.transpose(0, 2, 3, 1).reshape(nz, 16 * c1)
    prepped = (w1g,
               _prep_convt_s2_weight(w2), _prep_convt_s2_weight(w3),
               _prep_convt_s2_weight(w4), _prep_convt_s2_weight(w5),
               g1, b1, g2, b2, g3, b3, g4, b4)
    dims = (c1, w2.shape[1], w3.shape[1], w4.shape[1], w5.shape[1])
    return prepped, dims


# ------------------------------ XLA glue ------------------------------------
def _im2col_3x3(feat_nhwc):
    """(N, H, W, C) activation -> zero-padded (Mp, Kp) bf16 patch matrix, M.

    Column order (dh*3 + dw)*C + c over the zero-padded 3x3 neighbourhood;
    M/K padding is emitted inside this fusion (no extra pad pass in the GEMM).
    """
    n, h, w, c = feat_nhwc.shape
    m = n * h * w
    mp = _round_up(m, 512) if m >= 512 else _round_up(m, 64)
    kp = _round_up(9 * c, 128)
    xp = jnp.pad(feat_nhwc, ((0, 0), (1, 1), (1, 1), (0, 0)))
    taps = [xp[:, dh:dh + h, dw:dw + w, :] for dh in range(3) for dw in range(3)]
    p = jnp.stack(taps, axis=3).astype(jnp.bfloat16).reshape(m, 9 * c)
    p = jnp.pad(p, ((0, mp - m), (0, kp - 9 * c)))
    return p, m


def _depth_to_space(y2d, n, h, w, c):
    """(N*H*W, 4*C) with columns (a, b, c) -> NHWC (N, 2H, 2W, C)."""
    y = y2d.reshape(n, h, w, 2, 2, c)
    return y.transpose(0, 1, 3, 2, 4, 5).reshape(n, 2 * h, 2 * w, c)


def _bn_affine(col_sum, col_sumsq, count, gamma, beta, groups, c, eps=1e-5):
    """Per-channel (scale, shift) for training-mode BatchNorm2d from the
    GEMM-epilogue column stats (columns = `groups` copies of `c` channels)."""
    csum = col_sum.reshape(groups, c).sum(axis=0)
    csumsq = col_sumsq.reshape(groups, c).sum(axis=0)
    mean = csum / count
    var = jnp.maximum(csumsq / count - mean * mean, 0.0)   # biased, as PyTorch
    inv = gamma * jax.lax.rsqrt(var + eps)
    return inv, beta - mean * inv


# ------------------------------ Generator -----------------------------------
def generator_forward(x, prepped, dims):
    """x: (N, nz, 1, 1) -> (N, nc, 64, 64), matching the PyTorch Generator."""
    (w1g, w2g, w3g, w4g, w5g, g1, b1, g2, b2, g3, b3, g4, b4) = prepped
    c1, c2, c3, c4, nc = dims
    n, nz = x.shape[0], x.shape[1]

    # layer 1: ConvT(nz, c1, k=4, s=1, p=0) on a 1x1 input == tiny GEMM (XLA).
    y = jnp.dot(x.reshape(n, nz), w1g).reshape(n, 4, 4, c1)
    mean = jnp.mean(y, axis=(0, 1, 2))
    var = jnp.var(y, axis=(0, 1, 2))
    inv = g1 * jax.lax.rsqrt(var + 1e-5)
    feat = jnp.maximum(y * inv + (b1 - mean * inv), 0.0)
    h = w = 4

    # layers 2-4: sub-pixel ConvT(k=4, s=2, p=1) + BN + ReLU, NHWC throughout.
    # BN affine + ReLU applied lazily; it fuses into the next layer's im2col.
    for wg, cout, g, b in ((w2g, c2, g2, b2), (w3g, c3, g3, b3), (w4g, c4, g4, b4)):
        a_p, m = _im2col_3x3(feat)
        y2d, s1_, s2_ = fused_gemm(a_p, m, wg, 4 * cout, with_stats=True)
        inv, shift = _bn_affine(s1_, s2_, n * h * w * 4, g, b, groups=4, c=cout)
        yds = _depth_to_space(y2d, n, h, w, cout)
        feat = jnp.maximum(yds * inv + shift, 0.0)
        h, w = 2 * h, 2 * w

    # layer 5: sub-pixel ConvT with tanh fused in the epilogue, no stats.
    a_p, m = _im2col_3x3(feat)
    y2d = fused_gemm(a_p, m, w5g, 4 * nc, act="tanh",
                     out_dtype=jnp.float32, with_stats=False)
    out = _depth_to_space(y2d, n, h, w, nc)              # (N, 64, 64, nc)
    return out.transpose(0, 3, 1, 2)                     # NCHW, matches PyTorch


# ------------------------------ pure-JAX reference --------------------------
def _convt_ref(x, wt, stride, pad):
    kh, kw = wt.shape[2], wt.shape[3]
    rhs = jnp.transpose(wt[:, :, ::-1, ::-1], (1, 0, 2, 3))   # (Cout, Cin, kh, kw)
    return jax.lax.conv_general_dilated(
        x, rhs, window_strides=(1, 1),
        padding=[(kh - 1 - pad, kh - 1 - pad), (kw - 1 - pad, kw - 1 - pad)],
        lhs_dilation=(stride, stride),
        dimension_numbers=("NCHW", "OIHW", "NCHW"))


def _bn_relu_ref(x, g, b, eps=1e-5):
    mean = jnp.mean(x, axis=(0, 2, 3), keepdims=True)
    var = jnp.mean(jnp.square(x - mean), axis=(0, 2, 3), keepdims=True)
    y = (x - mean) * jax.lax.rsqrt(var + eps)
    return jnp.maximum(y * g.reshape(1, -1, 1, 1) + b.reshape(1, -1, 1, 1), 0.0)


def reference_forward(x, params):
    (w1, g1, b1, w2, g2, b2, w3, g3, b3, w4, g4, b4, w5) = params
    y = _bn_relu_ref(_convt_ref(x, w1, 1, 0), g1, b1)
    y = _bn_relu_ref(_convt_ref(y, w2, 2, 1), g2, b2)
    y = _bn_relu_ref(_convt_ref(y, w3, 2, 1), g3, b3)
    y = _bn_relu_ref(_convt_ref(y, w4, 2, 1), g4, b4)
    return jnp.tanh(_convt_ref(y, w5, 2, 1))


# ------------------------------ params --------------------------------------
def init_params(key, nz=16, ngf=16, nc=3):
    ks = jax.random.split(key, 9)

    def conv_w(k, cin, cout):  # PyTorch ConvTranspose2d weight: (Cin, Cout, kH, kW)
        return 0.02 * jax.random.normal(k, (cin, cout, 4, 4), jnp.float32)

    def bn_gb(k, c):
        g = 1.0 + 0.02 * jax.random.normal(k, (c,), jnp.float32)
        return g, jnp.zeros((c,), jnp.float32)

    w1 = conv_w(ks[0], nz, ngf * 8)
    w2 = conv_w(ks[1], ngf * 8, ngf * 4)
    w3 = conv_w(ks[2], ngf * 4, ngf * 2)
    w4 = conv_w(ks[3], ngf * 2, ngf)
    w5 = conv_w(ks[4], ngf, nc)
    g1, b1 = bn_gb(ks[5], ngf * 8)
    g2, b2 = bn_gb(ks[6], ngf * 4)
    g3, b3 = bn_gb(ks[7], ngf * 2)
    g4, b4 = bn_gb(ks[8], ngf)
    return (w1, g1, b1, w2, g2, b2, w3, g3, b3, w4, g4, b4, w5)


if __name__ == "__main__":
    key = jax.random.PRNGKey(0)
    kx, kp = jax.random.split(key)
    N, nz, ngf, nc = 2, 16, 16, 3                 # small, forward-consistent dims
    x = jax.random.normal(kx, (N, nz, 1, 1), jnp.float32)
    params = init_params(kp, nz=nz, ngf=ngf, nc=nc)

    prepped, dims = prepare_params(params)        # one-time weight repack/pad
    fwd = jax.jit(functools.partial(generator_forward, dims=dims))
    out = jax.block_until_ready(fwd(x, prepped))

    assert out.shape == (N, nc, 64, 64), out.shape
    assert bool(jnp.all(jnp.isfinite(out)))
    assert bool(jnp.all(jnp.abs(out) <= 1.0))     # tanh output range

    # Numerical check vs a pure-JAX transposed-conv reference (bf16 tolerance).
    ref = jax.block_until_ready(reference_forward(x, params))
    max_err = float(jnp.max(jnp.abs(out - ref)))
    assert max_err < 0.15, max_err
    print("KERNEL_OK")
</pallas_src>

<mosaic_0001>
module attributes {stable_mosaic.version = 11 : i64} {
  func.func @_gemm_kernel(%arg0: i32, %arg1: i32, %arg2: memref<64x1152xbf16, #tpu.memory_space<vmem>>, %arg3: memref<1152x256xbf16, #tpu.memory_space<vmem>>, %arg4: memref<64x256xbf16, #tpu.memory_space<vmem>>, %arg5: memref<8x256xf32, #tpu.memory_space<vmem>>) attributes {dimension_semantics = [#tpu.dimension_semantics<parallel>, #tpu.dimension_semantics<parallel>], iteration_bounds = array<i64: 1, 1>, scalar_prefetch = 0 : i64, scratch_operands = 0 : i64, tpu.core_type = #tpu.core_type<tc>, window_params = [{transform_indices = @transform_0, window_bounds = array<i64: 64, 1152>}, {transform_indices = @transform_1, window_bounds = array<i64: 1152, 256>}, {transform_indices = @transform_2, window_bounds = array<i64: 64, 256>}, {transform_indices = @transform_3, window_bounds = array<i64: 8, 256>}]} {
    %c0 = arith.constant 0 : index
    %c0_0 = arith.constant 0 : index
    %0 = vector.load %arg2[%c0, %c0_0] : memref<64x1152xbf16, #tpu.memory_space<vmem>>, vector<64x1152xbf16>
    %c0_1 = arith.constant 0 : index
    %c0_2 = arith.constant 0 : index
    %1 = vector.load %arg3[%c0_1, %c0_2] : memref<1152x256xbf16, #tpu.memory_space<vmem>>, vector<1152x256xbf16>
    %cst = arith.constant dense<0.000000e+00> : vector<64x256xf32>
    %2 = tpu.matmul %0, %1, %cst {dimension_numbers = #tpu.dot_dimension_numbers<[1], [0], [0], [1], [0, 0, 1, 1], [], []>} : vector<64x1152xbf16>, vector<1152x256xbf16>, vector<64x256xf32> -> vector<64x256xf32>
    %cst_3 = arith.constant dense<0.000000e+00> : vector<256xf32>
    %3 = vector.multi_reduction <add>, %2, %cst_3 [0] : vector<64x256xf32> to vector<256xf32>
    %4 = vector.shape_cast %3 : vector<256xf32> to vector<1x256xf32>
    %c0_4 = arith.constant 0 : index
    %c0_5 = arith.constant 0 : index
    %5 = vector.load %arg5[%c0_4, %c0_5] : memref<8x256xf32, #tpu.memory_space<vmem>>, vector<1x256xf32>
    tpu.vector_store %arg5[%c0_4, %c0_5], %4 {strides = array<i32>} : memref<8x256xf32, #tpu.memory_space<vmem>>, vector<1x256xf32>,
    %6 = arith.mulf %2, %2 : vector<64x256xf32>
    %cst_6 = arith.constant dense<0.000000e+00> : vector<256xf32>
    %7 = vector.multi_reduction <add>, %6, %cst_6 [0] : vector<64x256xf32> to vector<256xf32>
    %8 = vector.shape_cast %7 : vector<256xf32> to vector<1x256xf32>
    %c1 = arith.constant 1 : index
    %c0_7 = arith.constant 0 : index
    %9 = vector.load %arg5[%c1, %c0_7] : memref<8x256xf32, #tpu.memory_space<vmem>>, vector<1x256xf32>
    tpu.vector_store %arg5[%c1, %c0_7], %8 {strides = array<i32>} : memref<8x256xf32, #tpu.memory_space<vmem>>, vector<1x256xf32>,
    %10 = arith.truncf %2 : vector<64x256xf32> to vector<64x256xbf16>
    %c0_8 = arith.constant 0 : index
    %c0_9 = arith.constant 0 : index
    %11 = vector.load %arg4[%c0_8, %c0_9] : memref<64x256xbf16, #tpu.memory_space<vmem>>, vector<64x256xbf16>
    tpu.vector_store %arg4[%c0_8, %c0_9], %10 {strides = array<i32>} : memref<64x256xbf16, #tpu.memory_space<vmem>>, vector<64x256xbf16>,
    return
  }
  func.func @transform_0(%arg0: i32, %arg1: i32) -> (i32, i32) {
    %c0_i32 = arith.constant 0 : i32
    %c0_i32_0 = arith.constant 0 : i32
    return %arg0, %c0_i32 : i32, i32
  }
  func.func @transform_1(%arg0: i32, %arg1: i32) -> (i32, i32) {
    %c0_i32 = arith.constant 0 : i32
    %c0_i32_0 = arith.constant 0 : i32
    return %c0_i32, %arg1 : i32, i32
  }
  func.func @transform_2(%arg0: i32, %arg1: i32) -> (i32, i32) {
    %c0_i32 = arith.constant 0 : i32
    return %arg0, %arg1 : i32, i32
  }
  func.func @transform_3(%arg0: i32, %arg1: i32) -> (i32, i32) {
    %c0_i32 = arith.constant 0 : i32
    return %arg0, %arg1 : i32, i32
  }
}

module attributes {stable_mosaic.version = 11 : i64} {
  func.func @_gemm_kernel(%arg0: i32, %arg1: i32, %arg2: memref<128x640xbf16, #tpu.memory_space<vmem>>, %arg3: memref<640x128xbf16, #tpu.memory_space<vmem>>, %arg4: memref<128x128xbf16, #tpu.memory_space<vmem>>, %arg5: memref<8x128xf32, #tpu.memory_space<vmem>>) attributes {dimension_semantics = [#tpu.dimension_semantics<parallel>, #tpu.dimension_semantics<parallel>], iteration_bounds = array<i64: 1, 1>, scalar_prefetch = 0 : i64, scratch_operands = 0 : i64, tpu.core_type = #tpu.core_type<tc>, window_params = [{transform_indices = @transform_0, window_bounds = array<i64: 128, 640>}, {transform_indices = @transform_1, window_bounds = array<i64: 640, 128>}, {transform_indices = @transform_2, window_bounds = array<i64: 128, 128>}, {transform_indices = @transform_3, window_bounds = array<i64: 8, 128>}]} {
    %c0 = arith.constant 0 : index
    %c0_0 = arith.constant 0 : index
    %0 = vector.load %arg2[%c0, %c0_0] : memref<128x640xbf16, #tpu.memory_space<vmem>>, vector<128x640xbf16>
    %c0_1 = arith.constant 0 : index
    %c0_2 = arith.constant 0 : index
    %1 = vector.load %arg3[%c0_1, %c0_2] : memref<640x128xbf16, #tpu.memory_space<vmem>>, vector<640x128xbf16>
    %cst = arith.constant dense<0.000000e+00> : vector<128x128xf32>
    %2 = tpu.matmul %0, %1, %cst {dimension_numbers = #tpu.dot_dimension_numbers<[1], [0], [0], [1], [0, 0, 1, 1], [], []>} : vector<128x640xbf16>, vector<640x128xbf16>, vector<128x128xf32> -> vector<128x128xf32>
    %cst_3 = arith.constant dense<0.000000e+00> : vector<128xf32>
    %3 = vector.multi_reduction <add>, %2, %cst_3 [0] : vector<128x128xf32> to vector<128xf32>
    %4 = vector.shape_cast %3 : vector<128xf32> to vector<1x128xf32>
    %c0_4 = arith.constant 0 : index
    %c0_5 = arith.constant 0 : index
    %5 = vector.load %arg5[%c0_4, %c0_5] : memref<8x128xf32, #tpu.memory_space<vmem>>, vector<1x128xf32>
    tpu.vector_store %arg5[%c0_4, %c0_5], %4 {strides = array<i32>} : memref<8x128xf32, #tpu.memory_space<vmem>>, vector<1x128xf32>,
    %6 = arith.mulf %2, %2 : vector<128x128xf32>
    %cst_6 = arith.constant dense<0.000000e+00> : vector<128xf32>
    %7 = vector.multi_reduction <add>, %6, %cst_6 [0] : vector<128x128xf32> to vector<128xf32>
    %8 = vector.shape_cast %7 : vector<128xf32> to vector<1x128xf32>
    %c1 = arith.constant 1 : index
    %c0_7 = arith.constant 0 : index
    %9 = vector.load %arg5[%c1, %c0_7] : memref<8x128xf32, #tpu.memory_space<vmem>>, vector<1x128xf32>
    tpu.vector_store %arg5[%c1, %c0_7], %8 {strides = array<i32>} : memref<8x128xf32, #tpu.memory_space<vmem>>, vector<1x128xf32>,
    %10 = arith.truncf %2 : vector<128x128xf32> to vector<128x128xbf16>
    %c0_8 = arith.constant 0 : index
    %c0_9 = arith.constant 0 : index
    %11 = vector.load %arg4[%c0_8, %c0_9] : memref<128x128xbf16, #tpu.memory_space<vmem>>, vector<128x128xbf16>
    tpu.vector_store %arg4[%c0_8, %c0_9], %10 {strides = array<i32>} : memref<128x128xbf16, #tpu.memory_space<vmem>>, vector<128x128xbf16>,
    return
  }
  func.func @transform_0(%arg0: i32, %arg1: i32) -> (i32, i32) {
    %c0_i32 = arith.constant 0 : i32
    %c0_i32_0 = arith.constant 0 : i32
    return %arg0, %c0_i32 : i32, i32
  }
  func.func @transform_1(%arg0: i32, %arg1: i32) -> (i32, i32) {
    %c0_i32 = arith.constant 0 : i32
    %c0_i32_0 = arith.constant 0 : i32
    return %c0_i32, %arg1 : i32, i32
  }
  func.func @transform_2(%arg0: i32, %arg1: i32) -> (i32, i32) {
    %c0_i32 = arith.constant 0 : i32
    return %arg0, %arg1 : i32, i32
  }
  func.func @transform_3(%arg0: i32, %arg1: i32) -> (i32, i32) {
    %c0_i32 = arith.constant 0 : i32
    return %arg0, %arg1 : i32, i32
  }
}

module attributes {stable_mosaic.version = 11 : i64} {
  func.func @_gemm_kernel(%arg0: i32, %arg1: i32, %arg2: memref<256x384xbf16, #tpu.memory_space<vmem>>, %arg3: memref<384x128xbf16, #tpu.memory_space<vmem>>, %arg4: memref<256x128xbf16, #tpu.memory_space<vmem>>, %arg5: memref<8x128xf32, #tpu.memory_space<vmem>>) attributes {dimension_semantics = [#tpu.dimension_semantics<parallel>, #tpu.dimension_semantics<parallel>], iteration_bounds = array<i64: 2, 1>, scalar_prefetch = 0 : i64, scratch_operands = 0 : i64, tpu.core_type = #tpu.core_type<tc>, window_params = [{transform_indices = @transform_0, window_bounds = array<i64: 256, 384>}, {transform_indices = @transform_1, window_bounds = array<i64: 384, 128>}, {transform_indices = @transform_2, window_bounds = array<i64: 256, 128>}, {transform_indices = @transform_3, window_bounds = array<i64: 8, 128>}]} {
    %c0 = arith.constant 0 : index
    %c0_0 = arith.constant 0 : index
    %0 = vector.load %arg2[%c0, %c0_0] : memref<256x384xbf16, #tpu.memory_space<vmem>>, vector<256x384xbf16>
    %c0_1 = arith.constant 0 : index
    %c0_2 = arith.constant 0 : index
    %1 = vector.load %arg3[%c0_1, %c0_2] : memref<384x128xbf16, #tpu.memory_space<vmem>>, vector<384x128xbf16>
    %cst = arith.constant dense<0.000000e+00> : vector<256x128xf32>
    %2 = tpu.matmul %0, %1, %cst {dimension_numbers = #tpu.dot_dimension_numbers<[1], [0], [0], [1], [0, 0, 1, 1], [], []>} : vector<256x384xbf16>, vector<384x128xbf16>, vector<256x128xf32> -> vector<256x128xf32>
    %cst_3 = arith.constant dense<0.000000e+00> : vector<128xf32>
    %3 = vector.multi_reduction <add>, %2, %cst_3 [0] : vector<256x128xf32> to vector<128xf32>
    %4 = vector.shape_cast %3 : vector<128xf32> to vector<1x128xf32>
    %c0_4 = arith.constant 0 : index
    %c0_5 = arith.constant 0 : index
    %5 = vector.load %arg5[%c0_4, %c0_5] : memref<8x128xf32, #tpu.memory_space<vmem>>, vector<1x128xf32>
    tpu.vector_store %arg5[%c0_4, %c0_5], %4 {strides = array<i32>} : memref<8x128xf32, #tpu.memory_space<vmem>>, vector<1x128xf32>,
    %6 = arith.mulf %2, %2 : vector<256x128xf32>
    %cst_6 = arith.constant dense<0.000000e+00> : vector<128xf32>
    %7 = vector.multi_reduction <add>, %6, %cst_6 [0] : vector<256x128xf32> to vector<128xf32>
    %8 = vector.shape_cast %7 : vector<128xf32> to vector<1x128xf32>
    %c1 = arith.constant 1 : index
    %c0_7 = arith.constant 0 : index
    %9 = vector.load %arg5[%c1, %c0_7] : memref<8x128xf32, #tpu.memory_space<vmem>>, vector<1x128xf32>
    tpu.vector_store %arg5[%c1, %c0_7], %8 {strides = array<i32>} : memref<8x128xf32, #tpu.memory_space<vmem>>, vector<1x128xf32>,
    %10 = arith.truncf %2 : vector<256x128xf32> to vector<256x128xbf16>
    %c0_8 = arith.constant 0 : index
    %c0_9 = arith.constant 0 : index
    %11 = vector.load %arg4[%c0_8, %c0_9] : memref<256x128xbf16, #tpu.memory_space<vmem>>, vector<256x128xbf16>
    tpu.vector_store %arg4[%c0_8, %c0_9], %10 {strides = array<i32>} : memref<256x128xbf16, #tpu.memory_space<vmem>>, vector<256x128xbf16>,
    return
  }
  func.func @transform_0(%arg0: i32, %arg1: i32) -> (i32, i32) {
    %c0_i32 = arith.constant 0 : i32
    %c0_i32_0 = arith.constant 0 : i32
    return %arg0, %c0_i32 : i32, i32
  }
  func.func @transform_1(%arg0: i32, %arg1: i32) -> (i32, i32) {
    %c0_i32 = arith.constant 0 : i32
    %c0_i32_0 = arith.constant 0 : i32
    return %c0_i32, %arg1 : i32, i32
  }
  func.func @transform_2(%arg0: i32, %arg1: i32) -> (i32, i32) {
    %c0_i32 = arith.constant 0 : i32
    return %arg0, %arg1 : i32, i32
  }
  func.func @transform_3(%arg0: i32, %arg1: i32) -> (i32, i32) {
    %c0_i32 = arith.constant 0 : i32
    return %arg0, %arg1 : i32, i32
  }
}

module attributes {stable_mosaic.version = 11 : i64} {
  func.func @_gemm_kernel(%arg0: i32, %arg1: i32, %arg2: memref<512x256xbf16, #tpu.memory_space<vmem>>, %arg3: memref<256x128xbf16, #tpu.memory_space<vmem>>, %arg4: memref<512x128xf32, #tpu.memory_space<vmem>>) attributes {dimension_semantics = [#tpu.dimension_semantics<parallel>, #tpu.dimension_semantics<parallel>], iteration_bounds = array<i64: 4, 1>, scalar_prefetch = 0 : i64, scratch_operands = 0 : i64, tpu.core_type = #tpu.core_type<tc>, window_params = [{transform_indices = @transform_0, window_bounds = array<i64: 512, 256>}, {transform_indices = @transform_1, window_bounds = array<i64: 256, 128>}, {transform_indices = @transform_2, window_bounds = array<i64: 512, 128>}]} {
    %c0 = arith.constant 0 : index
    %c0_0 = arith.constant 0 : index
    %0 = vector.load %arg2[%c0, %c0_0] : memref<512x256xbf16, #tpu.memory_space<vmem>>, vector<512x256xbf16>
    %c0_1 = arith.constant 0 : index
    %c0_2 = arith.constant 0 : index
    %1 = vector.load %arg3[%c0_1, %c0_2] : memref<256x128xbf16, #tpu.memory_space<vmem>>, vector<256x128xbf16>
    %cst = arith.constant dense<0.000000e+00> : vector<512x128xf32>
    %2 = tpu.matmul %0, %1, %cst {dimension_numbers = #tpu.dot_dimension_numbers<[1], [0], [0], [1], [0, 0, 1, 1], [], []>} : vector<512x256xbf16>, vector<256x128xbf16>, vector<512x128xf32> -> vector<512x128xf32>
    %3 = math.tanh %2 : vector<512x128xf32>
    %c0_3 = arith.constant 0 : index
    %c0_4 = arith.constant 0 : index
    %4 = vector.load %arg4[%c0_3, %c0_4] : memref<512x128xf32, #tpu.memory_space<vmem>>, vector<512x128xf32>
    tpu.vector_store %arg4[%c0_3, %c0_4], %3 {strides = array<i32>} : memref<512x128xf32, #tpu.memory_space<vmem>>, vector<512x128xf32>,
    return
  }
  func.func @transform_0(%arg0: i32, %arg1: i32) -> (i32, i32) {
    %c0_i32 = arith.constant 0 : i32
    %c0_i32_0 = arith.constant 0 : i32
    return %arg0, %c0_i32 : i32, i32
  }
  func.func @transform_1(%arg0: i32, %arg1: i32) -> (i32, i32) {
    %c0_i32 = arith.constant 0 : i32
    %c0_i32_0 = arith.constant 0 : i32
    return %c0_i32, %arg1 : i32, i32
  }
  func.func @transform_2(%arg0: i32, %arg1: i32) -> (i32, i32) {
    %c0_i32 = arith.constant 0 : i32
    return %arg0, %arg1 : i32, i32
  }
}

</mosaic_0001>

<llo_original>
// kernel: generator_forward.4
$region0: #{generator_forward.4}
  #allocation0 [shape = 'u32[]', space=smem, size = 0x4, offset = 0x4, fixed_abs, tag = 'smem constant byte address 0x4 - core index']
  #allocation1 [shape = 'u32[144,128]{1,0:T(1,128)}', space=vmem, size = 0x12000, scoped, tag = 'internal scratch']
  %s0 = inlined_call_operand.hbm [shape: bf16[64,1152], index: 0, kind: input, shape index: {}]
  %s1 = inlined_call_operand.hbm [shape: bf16[1152,256], index: 1, kind: input, shape index: {}]
  %s2 = inlined_call_operand.hbm [shape: bf16[64,256], index: 2, kind: output, shape index: {0}]
  %s3 = inlined_call_operand.hbm [shape: f32[8,256], index: 3, kind: output, shape index: {1}]
  %4 = xla_tuple %s2, %s3
  %s5 = sld [smem:[#allocation0]]
  $region34: #{generator_forward.4} parent=0
    _
  %s7 = ssub.s32 1, %s5
  %s8 = scalar_select 0, %s7, %s5
  $region1: #{generator_forward.4} parent=0
    #allocation2 [shape = 'u8[147456]{0}', space=vmem, size = 0x24000, scoped, tag = 'input window, operand 0, single buffered']
    #allocation3 [shape = 's32[1]{0}', space=sflag, size = 0x4, scoped, tag = 'scoped memory for generator_forward.4']
    #allocation4 [shape = 's32[1]{0}', space=sflag, size = 0x4, scoped, tag = 'scoped memory for generator_forward.4']
    #allocation5 [shape = 'u8[589824]{0}', space=vmem, size = 0x90000, scoped, tag = 'input window, operand 1, single buffered']
    #allocation6 [shape = 's32[1]{0}', space=sflag, size = 0x4, scoped, tag = 'scoped memory for generator_forward.4']
    #allocation7 [shape = 'u8[32768]{0}', space=vmem, size = 0x8000, scoped, tag = 'output window, operand 0, single buffered']
    #allocation8 [shape = 'u8[8192]{0}', space=vmem, size = 0x2000, scoped, tag = 'output window, operand 1, single buffered']
    #allocation9 [shape = 's32[1]{0}', space=sflag, size = 0x4, scoped, tag = 'scoped memory for generator_forward.4']
    %9 = vsyncpa [#allocation3], 0
    %10 = vsyncpa [#allocation6], 0
    %11 = vsyncpa [#allocation4], 0
    %12 = vsyncpa [#allocation9], 0
    // Predicated region
    $region2: #{generator_forward.4} parent=1 // pred_check
      _
    $region3: #{generator_forward.4} parent=1 // pred_check_branch
      %14 = sbr.rel (0) target = $region5
    $region4: #{generator_forward.4} parent=1 // pred_region
      %s16 = ssub.s32 4608, 4608
      %17 = vsyncadd [#allocation3], %s16
      %s18 = sshll.u32 [#allocation2], 4
      %s19 = int_to_ptr.vmem [resolvable:$true] %s18
      %24 = dma.hbm_to_vmem [thread:$0]  %s0, 4608, %s19, [#allocation3], 576, 576, 36
    $region5: #{generator_forward.4} parent=1 // pred_fallthru
      _
    // Predicated region
    $region6: #{generator_forward.4} parent=1 // pred_check
      _
    $region7: #{generator_forward.4} parent=1 // pred_check_branch
      %26 = sbr.rel (0) target = $region9
    $region8: #{generator_forward.4} parent=1 // pred_region
      %s28 = ssub.s32 18432, 18432
      %29 = vsyncadd [#allocation6], %s28
      %s30 = sshll.u32 [#allocation5], 4
      %s31 = int_to_ptr.vmem [resolvable:$true] %s30
      %36 = dma.hbm_to_vmem [thread:$0]  %s1, 18432, %s31, [#allocation6], 128, 128, 8
    $region9: #{generator_forward.4} parent=1 // pred_fallthru
      _
    // Predicated region
    $region10: #{generator_forward.4} parent=1 // pred_check
      _
    $region11: #{generator_forward.4} parent=1 // pred_check_branch
      %38 = sbr.rel (0) target = $region13
    $region12: #{generator_forward.4} parent=1 // pred_region
      %39 = dma.done [#allocation3], 4608
    $region13: #{generator_forward.4} parent=1 // pred_fallthru
      _
    // Predicated region
    $region14: #{generator_forward.4} parent=1 // pred_check
      _
    $region15: #{generator_forward.4} parent=1 // pred_check_branch
      %41 = sbr.rel (0) target = $region17
    $region16: #{generator_forward.4} parent=1 // pred_region
      %42 = dma.done [#allocation6], 18432
    $region17: #{generator_forward.4} parent=1 // pred_fallthru
      _
    %v44 = vld [vmem:[#allocation2] sm:$0xff]
    %v45 = vld [vmem:[#allocation2 + $0x8] sm:$0xff]
    %v46 = vld [vmem:[#allocation2 + $0x10] sm:$0xff]
    %v47 = vld [vmem:[#allocation2 + $0x18] sm:$0xff]
    %v48 = vld [vmem:[#allocation2 + $0x20] sm:$0xf]
    %v49 = vld [vmem:[#allocation2 + $0x24] sm:$0xff]
    %v50 = vld [vmem:[#allocation2 + $0x2c] sm:$0xff]
    %v51 = vld [vmem:[#allocation2 + $0x34] sm:$0xff]
    %v52 = vld [vmem:[#allocation2 + $0x3c] sm:$0xff]
    %v53 = vld [vmem:[#allocation2 + $0x44] sm:$0xf]
    %v54 = vld [vmem:[#allocation2 + $0x48] sm:$0xff]
    %v55 = vld [vmem:[#allocation2 + $0x50] sm:$0xff]
    %v56 = vld [vmem:[#allocation2 + $0x58] sm:$0xff]
    %v57 = vld [vmem:[#allocation2 + $0x60] sm:$0xff]
    %v58 = vld [vmem:[#allocation2 + $0x68] sm:$0xf]
    %v59 = vld [vmem:[#allocation2 + $0x6c] sm:$0xff]
    %v60 = vld [vmem:[#allocation2 + $0x74] sm:$0xff]
    %v61 = vld [vmem:[#allocation2 + $0x7c] sm:$0xff]
    %v62 = vld [vmem:[#allocation2 + $0x84] sm:$0xff]
    %v63 = vld [vmem:[#allocation2 + $0x8c] sm:$0xf]
    %v64 = vld [vmem:[#allocation2 + $0x90] sm:$0xff]
    %v65 = vld [vmem:[#allocation2 + $0x98] sm:$0xff]
    %v66 = vld [vmem:[#allocation2 + $0xa0] sm:$0xff]
    %v67 = vld [vmem:[#allocation2 + $0xa8] sm:$0xff]
    %v68 = vld [vmem:[#allocation2 + $0xb0] sm:$0xf]
    %v69 = vld [vmem:[#allocation2 + $0xb4] sm:$0xff]
    %v70 = vld [vmem:[#allocation2 + $0xbc] sm:$0xff]
    %v71 = vld [vmem:[#allocation2 + $0xc4] sm:$0xff]
    %v72 = vld [vmem:[#allocation2 + $0xcc] sm:$0xff]
    %v73 = vld [vmem:[#allocation2 + $0xd4] sm:$0xf]
    %v74 = vld [vmem:[#allocation2 + $0xd8] sm:$0xff]
    %v75 = vld [vmem:[#allocation2 + $0xe0] sm:$0xff]
    %v76 = vld [vmem:[#allocation2 + $0xe8] sm:$0xff]
    %v77 = vld [vmem:[#allocation2 + $0xf0] sm:$0xff]
    %v78 = vld [vmem:[#allocation2 + $0xf8] sm:$0xf]
    %v79 = vld [vmem:[#allocation2 + $0xfc] sm:$0xff]
    %v80 = vld [vmem:[#allocation2 + $0x104] sm:$0xff]
    %v81 = vld [vmem:[#allocation2 + $0x10c] sm:$0xff]
    %v82 = vld [vmem:[#allocation2 + $0x114] sm:$0xff]
    %v83 = vld [vmem:[#allocation2 + $0x11c] sm:$0xf]
    %v84 = vld [vmem:[#allocation5] sm:$0xff]
    %v85 = vld [vmem:[#allocation5 + $0x8] sm:$0xff]
    %v86 = vld [vmem:[#allocation5 + $0x10] sm:$0xff]
    %v87 = vld [vmem:[#allocation5 + $0x18] sm:$0xff]
    %v88 = vld [vmem:[#allocation5 + $0x20] sm:$0xff]
    %v89 = vld [vmem:[#allocation5 + $0x28] sm:$0xff]
    %v90 = vld [vmem:[#allocation5 + $0x30] sm:$0xff]
    %v91 = vld [vmem:[#allocation5 + $0x38] sm:$0xff]
    %v92 = vld [vmem:[#allocation5 + $0x40] sm:$0xff]
    %v93 = vld [vmem:[#allocation5 + $0x48] sm:$0xff]
    %v94 = vld [vmem:[#allocation5 + $0x50] sm:$0xff]
    %v95 = vld [vmem:[#allocation5 + $0x58] sm:$0xff]
    %v96 = vld [vmem:[#allocation5 + $0x60] sm:$0xff]
    %v97 = vld [vmem:[#allocation5 + $0x68] sm:$0xff]
    %v98 = vld [vmem:[#allocation5 + $0x70] sm:$0xff]
    %v99 = vld [vmem:[#allocation5 + $0x78] sm:$0xff]
    %v100 = vld [vmem:[#allocation5 + $0x80] sm:$0xff]
    %v101 = vld [vmem:[#allocation5 + $0x88] sm:$0xff]
    %v102 = vld [vmem:[#allocation5 + $0x90] sm:$0xff]
    %v103 = vld [vmem:[#allocation5 + $0x98] sm:$0xff]
    %v104 = vld [vmem:[#allocation5 + $0xa0] sm:$0xff]
    %v105 = vld [vmem:[#allocation5 + $0xa8] sm:$0xff]
    %v106 = vld [vmem:[#allocation5 + $0xb0] sm:$0xff]
    %v107 = vld [vmem:[#allocation5 + $0xb8] sm:$0xff]
    %v108 = vld [vmem:[#allocation5 + $0xc0] sm:$0xff]
    %v109 = vld [vmem:[#allocation5 + $0xc8] sm:$0xff]
    %v110 = vld [vmem:[#allocation5 + $0xd0] sm:$0xff]
    %v111 = vld [vmem:[#allocation5 + $0xd8] sm:$0xff]
    %v112 = vld [vmem:[#allocation5 + $0xe0] sm:$0xff]
    %v113 = vld [vmem:[#allocation5 + $0xe8] sm:$0xff]
    %v114 = vld [vmem:[#allocation5 + $0xf0] sm:$0xff]
    %v115 = vld [vmem:[#allocation5 + $0xf8] sm:$0xff]
    %v116 = vld [vmem:[#allocation5 + $0x100] sm:$0xff]
    %v117 = vld [vmem:[#allocation5 + $0x108] sm:$0xff]
    %v118 = vld [vmem:[#allocation5 + $0x110] sm:$0xff]
    %v119 = vld [vmem:[#allocation5 + $0x118] sm:$0xff]
    %v120 = vld [vmem:[#allocation5 + $0x120] sm:$0xff]
    %v121 = vld [vmem:[#allocation5 + $0x128] sm:$0xff]
    %v122 = vld [vmem:[#allocation5 + $0x130] sm:$0xff]
    %v123 = vld [vmem:[#allocation5 + $0x138] sm:$0xff]
    %v124 = vld [vmem:[#allocation5 + $0x140] sm:$0xff]
    %v125 = vld [vmem:[#allocation5 + $0x148] sm:$0xff]
    %v126 = vld [vmem:[#allocation5 + $0x150] sm:$0xff]
    %v127 = vld [vmem:[#allocation5 + $0x158] sm:$0xff]
    %v128 = vld [vmem:[#allocation5 + $0x160] sm:$0xff]
    %v129 = vld [vmem:[#allocation5 + $0x168] sm:$0xff]
    %v130 = vld [vmem:[#allocation5 + $0x170] sm:$0xff]
    %v131 = vld [vmem:[#allocation5 + $0x178] sm:$0xff]
    %v132 = vld [vmem:[#allocation5 + $0x180] sm:$0xff]
    %v133 = vld [vmem:[#allocation5 + $0x188] sm:$0xff]
    %v134 = vld [vmem:[#allocation5 + $0x190] sm:$0xff]
    %v135 = vld [vmem:[#allocation5 + $0x198] sm:$0xff]
    %v136 = vld [vmem:[#allocation5 + $0x1a0] sm:$0xff]
    %v137 = vld [vmem:[#allocation5 + $0x1a8] sm:$0xff]
    %v138 = vld [vmem:[#allocation5 + $0x1b0] sm:$0xff]
    %v139 = vld [vmem:[#allocation5 + $0x1b8] sm:$0xff]
    %v140 = vld [vmem:[#allocation5 + $0x1c0] sm:$0xff]
    %v141 = vld [vmem:[#allocation5 + $0x1c8] sm:$0xff]
    %v142 = vld [vmem:[#allocation5 + $0x1d0] sm:$0xff]
    %v143 = vld [vmem:[#allocation5 + $0x1d8] sm:$0xff]
    %v144 = vld [vmem:[#allocation5 + $0x1e0] sm:$0xff]
    %v145 = vld [vmem:[#allocation5 + $0x1e8] sm:$0xff]
    %v146 = vld [vmem:[#allocation5 + $0x1f0] sm:$0xff]
    %v147 = vld [vmem:[#allocation5 + $0x1f8] sm:$0xff]
    %v148 = vld [vmem:[#allocation5 + $0x200] sm:$0xff]
    %v149 = vld [vmem:[#allocation5 + $0x208] sm:$0xff]
    %v150 = vld [vmem:[#allocation5 + $0x210] sm:$0xff]
    %v151 = vld [vmem:[#allocation5 + $0x218] sm:$0xff]
    %v152 = vld [vmem:[#allocation5 + $0x220] sm:$0xff]
    %v153 = vld [vmem:[#allocation5 + $0x228] sm:$0xff]
    %v154 = vld [vmem:[#allocation5 + $0x230] sm:$0xff]
    %v155 = vld [vmem:[#allocation5 + $0x238] sm:$0xff]
    %v156 = vld [vmem:[#allocation5 + $0x240] sm:$0xff]
    %v157 = vld [vmem:[#allocation5 + $0x248] sm:$0xff]
    %v158 = vld [vmem:[#allocation5 + $0x250] sm:$0xff]
    %v159 = vld [vmem:[#allocation5 + $0x258] sm:$0xff]
    %v160 = vld [vmem:[#allocation5 + $0x260] sm:$0xff]
    %v161 = vld [vmem:[#allocation5 + $0x268] sm:$0xff]
    %v162 = vld [vmem:[#allocation5 + $0x270] sm:$0xff]
    %v163 = vld [vmem:[#allocation5 + $0x278] sm:$0xff]
    %v164 = vld [vmem:[#allocation5 + $0x280] sm:$0xff]
    %v165 = vld [vmem:[#allocation5 + $0x288] sm:$0xff]
    %v166 = vld [vmem:[#allocation5 + $0x290] sm:$0xff]
    %v167 = vld [vmem:[#allocation5 + $0x298] sm:$0xff]
    %v168 = vld [vmem:[#allocation5 + $0x2a0] sm:$0xff]
    %v169 = vld [vmem:[#allocation5 + $0x2a8] sm:$0xff]
    %v170 = vld [vmem:[#allocation5 + $0x2b0] sm:$0xff]
    %v171 = vld [vmem:[#allocation5 + $0x2b8] sm:$0xff]
    %v172 = vld [vmem:[#allocation5 + $0x2c0] sm:$0xff]
    %v173 = vld [vmem:[#allocation5 + $0x2c8] sm:$0xff]
    %v174 = vld [vmem:[#allocation5 + $0x2d0] sm:$0xff]
    %v175 = vld [vmem:[#allocation5 + $0x2d8] sm:$0xff]
    %v176 = vld [vmem:[#allocation5 + $0x2e0] sm:$0xff]
    %v177 = vld [vmem:[#allocation5 + $0x2e8] sm:$0xff]
    %v178 = vld [vmem:[#allocation5 + $0x2f0] sm:$0xff]
    %v179 = vld [vmem:[#allocation5 + $0x2f8] sm:$0xff]
    %v180 = vld [vmem:[#allocation5 + $0x300] sm:$0xff]
    %v181 = vld [vmem:[#allocation5 + $0x308] sm:$0xff]
    %v182 = vld [vmem:[#allocation5 + $0x310] sm:$0xff]
    %v183 = vld [vmem:[#allocation5 + $0x318] sm:$0xff]
    %v184 = vld [vmem:[#allocation5 + $0x320] sm:$0xff]
    %v185 = vld [vmem:[#allocation5 + $0x328] sm:$0xff]
    %v186 = vld [vmem:[#allocation5 + $0x330] sm:$0xff]
    %v187 = vld [vmem:[#allocation5 + $0x338] sm:$0xff]
    %v188 = vld [vmem:[#allocation5 + $0x340] sm:$0xff]
    %v189 = vld [vmem:[#allocation5 + $0x348] sm:$0xff]
    %v190 = vld [vmem:[#allocation5 + $0x350] sm:$0xff]
    %v191 = vld [vmem:[#allocation5 + $0x358] sm:$0xff]
    %v192 = vld [vmem:[#allocation5 + $0x360] sm:$0xff]
    %v193 = vld [vmem:[#allocation5 + $0x368] sm:$0xff]
    %v194 = vld [vmem:[#allocation5 + $0x370] sm:$0xff]
    %v195 = vld [vmem:[#allocation5 + $0x378] sm:$0xff]
    %v196 = vld [vmem:[#allocation5 + $0x380] sm:$0xff]
    %v197 = vld [vmem:[#allocation5 + $0x388] sm:$0xff]
    %v198 = vld [vmem:[#allocation5 + $0x390] sm:$0xff]
    %v199 = vld [vmem:[#allocation5 + $0x398] sm:$0xff]
    %v200 = vld [vmem:[#allocation5 + $0x3a0] sm:$0xff]
    %v201 = vld [vmem:[#allocation5 + $0x3a8] sm:$0xff]
    %v202 = vld [vmem:[#allocation5 + $0x3b0] sm:$0xff]
    %v203 = vld [vmem:[#allocation5 + $0x3b8] sm:$0xff]
    %v204 = vld [vmem:[#allocation5 + $0x3c0] sm:$0xff]
    %v205 = vld [vmem:[#allocation5 + $0x3c8] sm:$0xff]
    %v206 = vld [vmem:[#allocation5 + $0x3d0] sm:$0xff]
    %v207 = vld [vmem:[#allocation5 + $0x3d8] sm:$0xff]
    %v208 = vld [vmem:[#allocation5 + $0x3e0] sm:$0xff]
    %v209 = vld [vmem:[#allocation5 + $0x3e8] sm:$0xff]
    %v210 = vld [vmem:[#allocation5 + $0x3f0] sm:$0xff]
    %v211 = vld [vmem:[#allocation5 + $0x3f8] sm:$0xff]
    %v212 = vld [vmem:[#allocation5 + $0x400] sm:$0xff]
    %v213 = vld [vmem:[#allocation5 + $0x408] sm:$0xff]
    %v214 = vld [vmem:[#allocation5 + $0x410] sm:$0xff]
    %v215 = vld [vmem:[#allocation5 + $0x418] sm:$0xff]
    %v216 = vld [vmem:[#allocation5 + $0x420] sm:$0xff]
    %v217 = vld [vmem:[#allocation5 + $0x428] sm:$0xff]
    %v218 = vld [vmem:[#allocation5 + $0x430] sm:$0xff]
    %v219 = vld [vmem:[#allocation5 + $0x438] sm:$0xff]
    %v220 = vld [vmem:[#allocation5 + $0x440] sm:$0xff]
    %v221 = vld [vmem:[#allocation5 + $0x448] sm:$0xff]
    %v222 = vld [vmem:[#allocation5 + $0x450] sm:$0xff]
    %v223 = vld [vmem:[#allocation5 + $0x458] sm:$0xff]
    %v224 = vld [vmem:[#allocation5 + $0x460] sm:$0xff]
    %v225 = vld [vmem:[#allocation5 + $0x468] sm:$0xff]
    %v226 = vld [vmem:[#allocation5 + $0x470] sm:$0xff]
    %v227 = vld [vmem:[#allocation5 + $0x478] sm:$0xff]
    %v268 = vunpack.c.l.b16 %v44
    %v269 = vunpack.c.h.b16 %v44
    %v270 = vunpack.c.l.b16 %v45
    %v271 = vunpack.c.h.b16 %v45
    %v272 = vunpack.c.l.b16 %v46
    %v273 = vunpack.c.h.b16 %v46
    %v274 = vunpack.c.l.b16 %v47
    %v275 = vunpack.c.h.b16 %v47
    %v276 = vunpack.c.l.b16 %v48
    %v277 = vunpack.c.l.b16 %v49
    %v278 = vunpack.c.h.b16 %v49
    %v279 = vunpack.c.l.b16 %v50
    %v280 = vunpack.c.h.b16 %v50
    %v281 = vunpack.c.l.b16 %v51
    %v282 = vunpack.c.h.b16 %v51
    %v283 = vunpack.c.l.b16 %v52
    %v284 = vunpack.c.h.b16 %v52
    %v285 = vunpack.c.l.b16 %v53
    %v286 = vunpack.c.l.b16 %v54
    %v287 = vunpack.c.h.b16 %v54
    %v288 = vunpack.c.l.b16 %v55
    %v289 = vunpack.c.h.b16 %v55
    %v290 = vunpack.c.l.b16 %v56
    %v291 = vunpack.c.h.b16 %v56
    %v292 = vunpack.c.l.b16 %v57
    %v293 = vunpack.c.h.b16 %v57
    %v294 = vunpack.c.l.b16 %v58
    %v295 = vunpack.c.l.b16 %v59
    %v296 = vunpack.c.h.b16 %v59
    %v297 = vunpack.c.l.b16 %v60
    %v298 = vunpack.c.h.b16 %v60
    %v299 = vunpack.c.l.b16 %v61
    %v300 = vunpack.c.h.b16 %v61
    %v301 = vunpack.c.l.b16 %v62
    %v302 = vunpack.c.h.b16 %v62
    %v303 = vunpack.c.l.b16 %v63
    %v304 = vunpack.c.l.b16 %v64
    %v305 = vunpack.c.h.b16 %v64
    %v306 = vunpack.c.l.b16 %v65
    %v307 = vunpack.c.h.b16 %v65
    %v308 = vunpack.c.l.b16 %v66
    %v309 = vunpack.c.h.b16 %v66
    %v310 = vunpack.c.l.b16 %v67
    %v311 = vunpack.c.h.b16 %v67
    %v312 = vunpack.c.l.b16 %v68
    %v313 = vunpack.c.l.b16 %v69
    %v314 = vunpack.c.h.b16 %v69
    %v315 = vunpack.c.l.b16 %v70
    %v316 = vunpack.c.h.b16 %v70
    %v317 = vunpack.c.l.b16 %v71
    %v318 = vunpack.c.h.b16 %v71
    %v319 = vunpack.c.l.b16 %v72
    %v320 = vunpack.c.h.b16 %v72
    %v321 = vunpack.c.l.b16 %v73
    %v322 = vunpack.c.l.b16 %v74
    %v323 = vunpack.c.h.b16 %v74
    %v324 = vunpack.c.l.b16 %v75
    %v325 = vunpack.c.h.b16 %v75
    %v326 = vunpack.c.l.b16 %v76
    %v327 = vunpack.c.h.b16 %v76
    %v328 = vunpack.c.l.b16 %v77
    %v329 = vunpack.c.h.b16 %v77
    %v330 = vunpack.c.l.b16 %v78
    %v331 = vunpack.c.l.b16 %v79
    %v332 = vunpack.c.h.b16 %v79
    %v333 = vunpack.c.l.b16 %v80
    %v334 = vunpack.c.h.b16 %v80
    %v335 = vunpack.c.l.b16 %v81
    %v336 = vunpack.c.h.b16 %v81
    %v337 = vunpack.c.l.b16 %v82
    %v338 = vunpack.c.h.b16 %v82
    %v339 = vunpack.c.l.b16 %v83
    %v340 = vpack.c.b16 %v277, %v268
    %v341 = vpack.c.b16 %v278, %v269
    %v342 = vpack.c.b16 %v279, %v270
    %v343 = vpack.c.b16 %v280, %v271
    %v344 = vpack.c.b16 %v281, %v272
    %v345 = vpack.c.b16 %v282, %v273
    %v346 = vpack.c.b16 %v283, %v274
    %v347 = vpack.c.b16 %v284, %v275
    %v348 = vpack.c.b16 %v285, %v276
    %v349 = vpack.c.b16 %v295, %v286
    %v350 = vpack.c.b16 %v296, %v287
    %v351 = vpack.c.b16 %v297, %v288
    %v352 = vpack.c.b16 %v298, %v289
    %v353 = vpack.c.b16 %v299, %v290
    %v354 = vpack.c.b16 %v300, %v291
    %v355 = vpack.c.b16 %v301, %v292
    %v356 = vpack.c.b16 %v302, %v293
    %v357 = vpack.c.b16 %v303, %v294
    %v358 = vpack.c.b16 %v313, %v304
    %v359 = vpack.c.b16 %v314, %v305
    %v360 = vpack.c.b16 %v315, %v306
    %v361 = vpack.c.b16 %v316, %v307
    %v362 = vpack.c.b16 %v317, %v308
    %v363 = vpack.c.b16 %v318, %v309
    %v364 = vpack.c.b16 %v319, %v310
    %v365 = vpack.c.b16 %v320, %v311
    %v366 = vpack.c.b16 %v321, %v312
    %v367 = vpack.c.b16 %v331, %v322
    %v368 = vpack.c.b16 %v332, %v323
    %v369 = vpack.c.b16 %v333, %v324
    %v370 = vpack.c.b16 %v334, %v325
    %v371 = vpack.c.b16 %v335, %v326
    %v372 = vpack.c.b16 %v336, %v327
    %v373 = vpack.c.b16 %v337, %v328
    %v374 = vpack.c.b16 %v338, %v329
    %v375 = vpack.c.b16 %v339, %v330
    %v556 = vunpack.c.l.b16 %v84
    %v557 = vunpack.c.h.b16 %v84
    %v558 = vunpack.c.l.b16 %v85
    %v559 = vunpack.c.h.b16 %v85
    %v560 = vunpack.c.l.b16 %v86
    %v561 = vunpack.c.h.b16 %v86
    %v562 = vunpack.c.l.b16 %v87
    %v563 = vunpack.c.h.b16 %v87
    %v564 = vunpack.c.l.b16 %v88
    %v565 = vunpack.c.h.b16 %v88
    %v566 = vunpack.c.l.b16 %v89
    %v567 = vunpack.c.h.b16 %v89
    %v568 = vunpack.c.l.b16 %v90
    %v569 = vunpack.c.h.b16 %v90
    %v570 = vunpack.c.l.b16 %v91
    %v571 = vunpack.c.h.b16 %v91
    %v572 = vunpack.c.l.b16 %v92
    %v573 = vunpack.c.h.b16 %v92
    %v574 = vunpack.c.l.b16 %v93
    %v575 = vunpack.c.h.b16 %v93
    %v576 = vunpack.c.l.b16 %v94
    %v577 = vunpack.c.h.b16 %v94
    %v578 = vunpack.c.l.b16 %v95
    %v579 = vunpack.c.h.b16 %v95
    %v580 = vunpack.c.l.b16 %v96
    %v581 = vunpack.c.h.b16 %v96
    %v582 = vunpack.c.l.b16 %v97
    %v583 = vunpack.c.h.b16 %v97
    %v584 = vunpack.c.l.b16 %v98
    %v585 = vunpack.c.h.b16 %v98
    %v586 = vunpack.c.l.b16 %v99
    %v587 = vunpack.c.h.b16 %v99
    %v588 = vunpack.c.l.b16 %v100
    %v589 = vunpack.c.h.b16 %v100
    %v590 = vunpack.c.l.b16 %v101
    %v591 = vunpack.c.h.b16 %v101
    %v592 = vunpack.c.l.b16 %v102
    %v593 = vunpack.c.h.b16 %v102
    %v594 = vunpack.c.l.b16 %v103
    %v595 = vunpack.c.h.b16 %v103
    %v596 = vunpack.c.l.b16 %v104
    %v597 = vunpack.c.h.b16 %v104
    %v598 = vunpack.c.l.b16 %v105
    %v599 = vunpack.c.h.b16 %v105
    %v600 = vunpack.c.l.b16 %v106
    %v601 = vunpack.c.h.b16 %v106
    %v602 = vunpack.c.l.b16 %v107
    %v603 = vunpack.c.h.b16 %v107
    %v604 = vunpack.c.l.b16 %v108
    %v605 = vunpack.c.h.b16 %v108
    %v606 = vunpack.c.l.b16 %v109
    %v607 = vunpack.c.h.b16 %v109
    %v608 = vunpack.c.l.b16 %v110
    %v609 = vunpack.c.h.b16 %v110
    %v610 = vunpack.c.l.b16 %v111
    %v611 = vunpack.c.h.b16 %v111
    %v612 = vunpack.c.l.b16 %v112
    %v613 = vunpack.c.h.b16 %v112
    %v614 = vunpack.c.l.b16 %v113
    %v615 = vunpack.c.h.b16 %v113
    %v616 = vunpack.c.l.b16 %v114
    %v617 = vunpack.c.h.b16 %v114
    %v618 = vunpack.c.l.b16 %v115
    %v619 = vunpack.c.h.b16 %v115
    %v620 = vunpack.c.l.b16 %v116
    %v621 = vunpack.c.h.b16 %v116
    %v622 = vunpack.c.l.b16 %v117
    %v623 = vunpack.c.h.b16 %v117
    %v624 = vunpack.c.l.b16 %v118
    %v625 = vunpack.c.h.b16 %v118
    %v626 = vunpack.c.l.b16 %v119
    %v627 = vunpack.c.h.b16 %v119
    %v628 = vunpack.c.l.b16 %v120
    %v629 = vunpack.c.h.b16 %v120
    %v630 = vunpack.c.l.b16 %v121
    %v631 = vunpack.c.h.b16 %v121
    %v632 = vunpack.c.l.b16 %v122
    %v633 = vunpack.c.h.b16 %v122
    %v634 = vunpack.c.l.b16 %v123
    %v635 = vunpack.c.h.b16 %v123
    %v636 = vunpack.c.l.b16 %v124
    %v637 = vunpack.c.h.b16 %v124
    %v638 = vunpack.c.l.b16 %v125
    %v639 = vunpack.c.h.b16 %v125
    %v640 = vunpack.c.l.b16 %v126
    %v641 = vunpack.c.h.b16 %v126
    %v642 = vunpack.c.l.b16 %v127
    %v643 = vunpack.c.h.b16 %v127
    %v644 = vunpack.c.l.b16 %v128
    %v645 = vunpack.c.h.b16 %v128
    %v646 = vunpack.c.l.b16 %v129
    %v647 = vunpack.c.h.b16 %v129
    %v648 = vunpack.c.l.b16 %v130
    %v649 = vunpack.c.h.b16 %v130
    %v650 = vunpack.c.l.b16 %v131
    %v651 = vunpack.c.h.b16 %v131
    %v652 = vunpack.c.l.b16 %v132
    %v653 = vunpack.c.h.b16 %v132
    %v654 = vunpack.c.l.b16 %v133
    %v655 = vunpack.c.h.b16 %v133
    %v656 = vunpack.c.l.b16 %v134
    %v657 = vunpack.c.h.b16 %v134
    %v658 = vunpack.c.l.b16 %v135
    %v659 = vunpack.c.h.b16 %v135
    %v660 = vunpack.c.l.b16 %v136
    %v661 = vunpack.c.h.b16 %v136
    %v662 = vunpack.c.l.b16 %v137
    %v663 = vunpack.c.h.b16 %v137
    %v664 = vunpack.c.l.b16 %v138
    %v665 = vunpack.c.h.b16 %v138
    %v666 = vunpack.c.l.b16 %v139
    %v667 = vunpack.c.h.b16 %v139
    %v668 = vunpack.c.l.b16 %v140
    %v669 = vunpack.c.h.b16 %v140
    %v670 = vunpack.c.l.b16 %v141
    %v671 = vunpack.c.h.b16 %v141
    %v672 = vunpack.c.l.b16 %v142
    %v673 = vunpack.c.h.b16 %v142
    %v674 = vunpack.c.l.b16 %v143
    %v675 = vunpack.c.h.b16 %v143
    %v676 = vunpack.c.l.b16 %v144
    %v677 = vunpack.c.h.b16 %v144
    %v678 = vunpack.c.l.b16 %v145
    %v679 = vunpack.c.h.b16 %v145
    %v680 = vunpack.c.l.b16 %v146
    %v681 = vunpack.c.h.b16 %v146
    %v682 = vunpack.c.l.b16 %v147
    %v683 = vunpack.c.h.b16 %v147
    %v684 = vunpack.c.l.b16 %v148
    %v685 = vunpack.c.h.b16 %v148
    %v686 = vunpack.c.l.b16 %v149
    %v687 = vunpack.c.h.b16 %v149
    %v688 = vunpack.c.l.b16 %v150
    %v689 = vunpack.c.h.b16 %v150
    %v690 = vunpack.c.l.b16 %v151
    %v691 = vunpack.c.h.b16 %v151
    %v692 = vunpack.c.l.b16 %v152
    %v693 = vunpack.c.h.b16 %v152
    %v694 = vunpack.c.l.b16 %v153
    %v695 = vunpack.c.h.b16 %v153
    %v696 = vunpack.c.l.b16 %v154
    %v697 = vunpack.c.h.b16 %v154
    %v698 = vunpack.c.l.b16 %v155
    %v699 = vunpack.c.h.b16 %v155
    %v700 = vunpack.c.l.b16 %v156
    %v701 = vunpack.c.h.b16 %v156
    %v702 = vunpack.c.l.b16 %v157
    %v703 = vunpack.c.h.b16 %v157
    %v704 = vunpack.c.l.b16 %v158
    %v705 = vunpack.c.h.b16 %v158
    %v706 = vunpack.c.l.b16 %v159
    %v707 = vunpack.c.h.b16 %v159
    %v708 = vunpack.c.l.b16 %v160
    %v709 = vunpack.c.h.b16 %v160
    %v710 = vunpack.c.l.b16 %v161
    %v711 = vunpack.c.h.b16 %v161
    %v712 = vunpack.c.l.b16 %v162
    %v713 = vunpack.c.h.b16 %v162
    %v714 = vunpack.c.l.b16 %v163
    %v715 = vunpack.c.h.b16 %v163
    %v716 = vunpack.c.l.b16 %v164
    %v717 = vunpack.c.h.b16 %v164
    %v718 = vunpack.c.l.b16 %v165
    %v719 = vunpack.c.h.b16 %v165
    %v720 = vunpack.c.l.b16 %v166
    %v721 = vunpack.c.h.b16 %v166
    %v722 = vunpack.c.l.b16 %v167
    %v723 = vunpack.c.h.b16 %v167
    %v724 = vunpack.c.l.b16 %v168
    %v725 = vunpack.c.h.b16 %v168
    %v726 = vunpack.c.l.b16 %v169
    %v727 = vunpack.c.h.b16 %v169
    %v728 = vunpack.c.l.b16 %v170
    %v729 = vunpack.c.h.b16 %v170
    %v730 = vunpack.c.l.b16 %v171
    %v731 = vunpack.c.h.b16 %v171
    %v732 = vunpack.c.l.b16 %v172
    %v733 = vunpack.c.h.b16 %v172
    %v734 = vunpack.c.l.b16 %v173
    %v735 = vunpack.c.h.b16 %v173
    %v736 = vunpack.c.l.b16 %v174
    %v737 = vunpack.c.h.b16 %v174
    %v738 = vunpack.c.l.b16 %v175
    %v739 = vunpack.c.h.b16 %v175
    %v740 = vunpack.c.l.b16 %v176
    %v741 = vunpack.c.h.b16 %v176
    %v742 = vunpack.c.l.b16 %v177
    %v743 = vunpack.c.h.b16 %v177
    %v744 = vunpack.c.l.b16 %v178
    %v745 = vunpack.c.h.b16 %v178
    %v746 = vunpack.c.l.b16 %v179
    %v747 = vunpack.c.h.b16 %v179
    %v748 = vunpack.c.l.b16 %v180
    %v749 = vunpack.c.h.b16 %v180
    %v750 = vunpack.c.l.b16 %v181
    %v751 = vunpack.c.h.b16 %v181
    %v752 = vunpack.c.l.b16 %v182
    %v753 = vunpack.c.h.b16 %v182
    %v754 = vunpack.c.l.b16 %v183
    %v755 = vunpack.c.h.b16 %v183
    %v756 = vunpack.c.l.b16 %v184
    %v757 = vunpack.c.h.b16 %v184
    %v758 = vunpack.c.l.b16 %v185
    %v759 = vunpack.c.h.b16 %v185
    %v760 = vunpack.c.l.b16 %v186
    %v761 = vunpack.c.h.b16 %v186
    %v762 = vunpack.c.l.b16 %v187
    %v763 = vunpack.c.h.b16 %v187
    %v764 = vunpack.c.l.b16 %v188
    %v765 = vunpack.c.h.b16 %v188
    %v766 = vunpack.c.l.b16 %v189
    %v767 = vunpack.c.h.b16 %v189
    %v768 = vunpack.c.l.b16 %v190
    %v769 = vunpack.c.h.b16 %v190
    %v770 = vunpack.c.l.b16 %v191
    %v771 = vunpack.c.h.b16 %v191
    %v772 = vunpack.c.l.b16 %v192
    %v773 = vunpack.c.h.b16 %v192
    %v774 = vunpack.c.l.b16 %v193
    %v775 = vunpack.c.h.b16 %v193
    %v776 = vunpack.c.l.b16 %v194
    %v777 = vunpack.c.h.b16 %v194
    %v778 = vunpack.c.l.b16 %v195
    %v779 = vunpack.c.h.b16 %v195
    %v780 = vunpack.c.l.b16 %v196
    %v781 = vunpack.c.h.b16 %v196
    %v782 = vunpack.c.l.b16 %v197
    %v783 = vunpack.c.h.b16 %v197
    %v784 = vunpack.c.l.b16 %v198
    %v785 = vunpack.c.h.b16 %v198
    %v786 = vunpack.c.l.b16 %v199
    %v787 = vunpack.c.h.b16 %v199
    %v788 = vunpack.c.l.b16 %v200
    %v789 = vunpack.c.h.b16 %v200
    %v790 = vunpack.c.l.b16 %v201
    %v791 = vunpack.c.h.b16 %v201
    %v792 = vunpack.c.l.b16 %v202
    %v793 = vunpack.c.h.b16 %v202
    %v794 = vunpack.c.l.b16 %v203
    %v795 = vunpack.c.h.b16 %v203
    %v796 = vunpack.c.l.b16 %v204
    %v797 = vunpack.c.h.b16 %v204
    %v798 = vunpack.c.l.b16 %v205
    %v799 = vunpack.c.h.b16 %v205
    %v800 = vunpack.c.l.b16 %v206
    %v801 = vunpack.c.h.b16 %v206
    %v802 = vunpack.c.l.b16 %v207
    %v803 = vunpack.c.h.b16 %v207
    %v804 = vunpack.c.l.b16 %v208
    %v805 = vunpack.c.h.b16 %v208
    %v806 = vunpack.c.l.b16 %v209
    %v807 = vunpack.c.h.b16 %v209
    %v808 = vunpack.c.l.b16 %v210
    %v809 = vunpack.c.h.b16 %v210
    %v810 = vunpack.c.l.b16 %v211
    %v811 = vunpack.c.h.b16 %v211
    %v812 = vunpack.c.l.b16 %v212
    %v813 = vunpack.c.h.b16 %v212
    %v814 = vunpack.c.l.b16 %v213
    %v815 = vunpack.c.h.b16 %v213
    %v816 = vunpack.c.l.b16 %v214
    %v817 = vunpack.c.h.b16 %v214
    %v818 = vunpack.c.l.b16 %v215
    %v819 = vunpack.c.h.b16 %v215
    %v820 = vunpack.c.l.b16 %v216
    %v821 = vunpack.c.h.b16 %v216
    %v822 = vunpack.c.l.b16 %v217
    %v823 = vunpack.c.h.b16 %v217
    %v824 = vunpack.c.l.b16 %v218
    %v825 = vunpack.c.h.b16 %v218
    %v826 = vunpack.c.l.b16 %v219
    %v827 = vunpack.c.h.b16 %v219
    %v828 = vunpack.c.l.b16 %v220
    %v829 = vunpack.c.h.b16 %v220
    %v830 = vunpack.c.l.b16 %v221
    %v831 = vunpack.c.h.b16 %v221
    %v832 = vunpack.c.l.b16 %v222
    %v833 = vunpack.c.h.b16 %v222
    %v834 = vunpack.c.l.b16 %v223
    %v835 = vunpack.c.h.b16 %v223
    %v836 = vunpack.c.l.b16 %v224
    %v837 = vunpack.c.h.b16 %v224
    %v838 = vunpack.c.l.b16 %v225
    %v839 = vunpack.c.h.b16 %v225
    %v840 = vunpack.c.l.b16 %v226
    %v841 = vunpack.c.h.b16 %v226
    %v842 = vunpack.c.l.b16 %v227
    %v843 = vunpack.c.h.b16 %v227
    %v844 = vpack.c.b16 %v558, %v556
    %v845 = vpack.c.b16 %v559, %v557
    %v846 = vpack.c.b16 %v562, %v560
    %v847 = vpack.c.b16 %v563, %v561
    %v848 = vpack.c.b16 %v566, %v564
    %v849 = vpack.c.b16 %v567, %v565
    %v850 = vpack.c.b16 %v570, %v568
    %v851 = vpack.c.b16 %v571, %v569
    %v852 = vpack.c.b16 %v574, %v572
    %v853 = vpack.c.b16 %v575, %v573
    %v854 = vpack.c.b16 %v578, %v576
    %v855 = vpack.c.b16 %v579, %v577
    %v856 = vpack.c.b16 %v582, %v580
    %v857 = vpack.c.b16 %v583, %v581
    %v858 = vpack.c.b16 %v586, %v584
    %v859 = vpack.c.b16 %v587, %v585
    %v860 = vpack.c.b16 %v590, %v588
    %v861 = vpack.c.b16 %v591, %v589
    %v862 = vpack.c.b16 %v594, %v592
    %v863 = vpack.c.b16 %v595, %v593
    %v864 = vpack.c.b16 %v598, %v596
    %v865 = vpack.c.b16 %v599, %v597
    %v866 = vpack.c.b16 %v602, %v600
    %v867 = vpack.c.b16 %v603, %v601
    %v868 = vpack.c.b16 %v606, %v604
    %v869 = vpack.c.b16 %v607, %v605
    %v870 = vpack.c.b16 %v610, %v608
    %v871 = vpack.c.b16 %v611, %v609
    %v872 = vpack.c.b16 %v614, %v612
    %v873 = vpack.c.b16 %v615, %v613
    %v874 = vpack.c.b16 %v618, %v616
    %v875 = vpack.c.b16 %v619, %v617
    %v876 = vpack.c.b16 %v622, %v620
    %v877 = vpack.c.b16 %v623, %v621
    %v878 = vpack.c.b16 %v626, %v624
    %v879 = vpack.c.b16 %v627, %v625
    %v880 = vpack.c.b16 %v630, %v628
    %v881 = vpack.c.b16 %v631, %v629
    %v882 = vpack.c.b16 %v634, %v632
    %v883 = vpack.c.b16 %v635, %v633
    %v884 = vpack.c.b16 %v638, %v636
    %v885 = vpack.c.b16 %v639, %v637
    %v886 = vpack.c.b16 %v642, %v640
    %v887 = vpack.c.b16 %v643, %v641
    %v888 = vpack.c.b16 %v646, %v644
    %v889 = vpack.c.b16 %v647, %v645
    %v890 = vpack.c.b16 %v650, %v648
    %v891 = vpack.c.b16 %v651, %v649
    %v892 = vpack.c.b16 %v654, %v652
    %v893 = vpack.c.b16 %v655, %v653
    %v894 = vpack.c.b16 %v658, %v656
    %v895 = vpack.c.b16 %v659, %v657
    %v896 = vpack.c.b16 %v662, %v660
    %v897 = vpack.c.b16 %v663, %v661
    %v898 = vpack.c.b16 %v666, %v664
    %v899 = vpack.c.b16 %v667, %v665
    %v900 = vpack.c.b16 %v670, %v668
    %v901 = vpack.c.b16 %v671, %v669
    %v902 = vpack.c.b16 %v674, %v672
    %v903 = vpack.c.b16 %v675, %v673
    %v904 = vpack.c.b16 %v678, %v676
    %v905 = vpack.c.b16 %v679, %v677
    %v906 = vpack.c.b16 %v682, %v680
    %v907 = vpack.c.b16 %v683, %v681
    %v908 = vpack.c.b16 %v686, %v684
    %v909 = vpack.c.b16 %v687, %v685
    %v910 = vpack.c.b16 %v690, %v688
    %v911 = vpack.c.b16 %v691, %v689
    %v912 = vpack.c.b16 %v694, %v692
    %v913 = vpack.c.b16 %v695, %v693
    %v914 = vpack.c.b16 %v698, %v696
    %v915 = vpack.c.b16 %v699, %v697
    %v916 = vpack.c.b16 %v702, %v700
    %v917 = vpack.c.b16 %v703, %v701
    %v918 = vpack.c.b16 %v706, %v704
    %v919 = vpack.c.b16 %v707, %v705
    %v920 = vpack.c.b16 %v710, %v708
    %v921 = vpack.c.b16 %v711, %v709
    %v922 = vpack.c.b16 %v714, %v712
    %v923 = vpack.c.b16 %v715, %v713
    %v924 = vpack.c.b16 %v718, %v716
    %v925 = vpack.c.b16 %v719, %v717
    %v926 = vpack.c.b16 %v722, %v720
    %v927 = vpack.c.b16 %v723, %v721
    %v928 = vpack.c.b16 %v726, %v724
    %v929 = vpack.c.b16 %v727, %v725
    %v930 = vpack.c.b16 %v730, %v728
    %v931 = vpack.c.b16 %v731, %v729
    %v932 = vpack.c.b16 %v734, %v732
    %v933 = vpack.c.b16 %v735, %v733
    %v934 = vpack.c.b16 %v738, %v736
    %v935 = vpack.c.b16 %v739, %v737
    %v936 = vpack.c.b16 %v742, %v740
    %v937 = vpack.c.b16 %v743, %v741
    %v938 = vpack.c.b16 %v746, %v744
    %v939 = vpack.c.b16 %v747, %v745
    %v940 = vpack.c.b16 %v750, %v748
    %v941 = vpack.c.b16 %v751, %v749
    %v942 = vpack.c.b16 %v754, %v752
    %v943 = vpack.c.b16 %v755, %v753
    %v944 = vpack.c.b16 %v758, %v756
    %v945 = vpack.c.b16 %v759, %v757
    %v946 = vpack.c.b16 %v762, %v760
    %v947 = vpack.c.b16 %v763, %v761
    %v948 = vpack.c.b16 %v766, %v764
    %v949 = vpack.c.b16 %v767, %v765
    %v950 = vpack.c.b16 %v770, %v768
    %v951 = vpack.c.b16 %v771, %v769
    %v952 = vpack.c.b16 %v774, %v772
    %v953 = vpack.c.b16 %v775, %v773
    %v954 = vpack.c.b16 %v778, %v776
    %v955 = vpack.c.b16 %v779, %v777
    %v956 = vpack.c.b16 %v782, %v780
    %v957 = vpack.c.b16 %v783, %v781
    %v958 = vpack.c.b16 %v786, %v784
    %v959 = vpack.c.b16 %v787, %v785
    %v960 = vpack.c.b16 %v790, %v788
    %v961 = vpack.c.b16 %v791, %v789
    %v962 = vpack.c.b16 %v794, %v792
    %v963 = vpack.c.b16 %v795, %v793
    %v964 = vpack.c.b16 %v798, %v796
    %v965 = vpack.c.b16 %v799, %v797
    %v966 = vpack.c.b16 %v802, %v800
    %v967 = vpack.c.b16 %v803, %v801
    %v968 = vpack.c.b16 %v806, %v804
    %v969 = vpack.c.b16 %v807, %v805
    %v970 = vpack.c.b16 %v810, %v808
    %v971 = vpack.c.b16 %v811, %v809
    %v972 = vpack.c.b16 %v814, %v812
    %v973 = vpack.c.b16 %v815, %v813
    %v974 = vpack.c.b16 %v818, %v816
    %v975 = vpack.c.b16 %v819, %v817
    %v976 = vpack.c.b16 %v822, %v820
    %v977 = vpack.c.b16 %v823, %v821
    %v978 = vpack.c.b16 %v826, %v824
    %v979 = vpack.c.b16 %v827, %v825
    %v980 = vpack.c.b16 %v830, %v828
    %v981 = vpack.c.b16 %v831, %v829
    %v982 = vpack.c.b16 %v834, %v832
    %v983 = vpack.c.b16 %v835, %v833
    %v984 = vpack.c.b16 %v838, %v836
    %v985 = vpack.c.b16 %v839, %v837
    %v986 = vpack.c.b16 %v842, %v840
    %v987 = vpack.c.b16 %v843, %v841
    %1132 = vmatprep.subr.bf16.mxu0 %v845
    %1133 = vmatpush1.bf16.msra.mxu0 %v844
    %1134 = vmatprep.subr.bf16.mxu0 %v847
    %1135 = vmatpush1.bf16.msra.mxu0 %v846
    %1136 = vmatprep.subr.bf16.mxu0 %v849
    %1137 = vmatpush1.bf16.msra.mxu0 %v848
    %1138 = vmatprep.subr.bf16.mxu0 %v851
    %1139 = vmatpush1.bf16.msra.mxu0 %v850
    %1140 = vmatprep.subr.bf16.mxu0 %v853
    %1141 = vmatpush1.bf16.msra.mxu0 %v852
    %1142 = vmatprep.subr.bf16.mxu0 %v855
    %1143 = vmatpush1.bf16.msra.mxu0 %v854
    %1144 = vmatprep.subr.bf16.mxu0 %v857
    %1145 = vmatpush1.bf16.msra.mxu0 %v856
    %1146 = vmatprep.subr.bf16.mxu0 %v859
    %1147 = vmatpush1.bf16.msra.mxu0 %v858
    %1148 = vmatprep.subr.bf16.mxu0 %v861
    %1149 = vmatpush1.bf16.msra.mxu0 %v860
    %1150 = vmatprep.subr.bf16.mxu0 %v863
    %1151 = vmatpush1.bf16.msra.mxu0 %v862
    %1152 = vmatprep.subr.bf16.mxu0 %v865
    %1153 = vmatpush1.bf16.msra.mxu0 %v864
    %1154 = vmatprep.subr.bf16.mxu0 %v867
    %1155 = vmatpush1.bf16.msra.mxu0 %v866
    %1156 = vmatprep.subr.bf16.mxu0 %v869
    %1157 = vmatpush1.bf16.msra.mxu0 %v868
    %1158 = vmatprep.subr.bf16.mxu0 %v871
    %1159 = vmatpush1.bf16.msra.mxu0 %v870
    %1160 = vmatprep.subr.bf16.mxu0 %v873
    %1161 = vmatpush1.bf16.msra.mxu0 %v872
    %1162 = vmatprep.subr.bf16.mxu0 %v875
    %1163 = vmatpush1.bf16.msra.mxu0 %v874
    %1164 = vmatprep.mubr.bf16.mxu0 %v341
    %1165 = vmatmul.mubr.bf16.gmra.mrb[0].mxu0 %v340
    %v1166 = vpop.f32.mrb[0].mxu0
    %v1167 = vadd.f32 0.0, %v1166
    %v1168 = vpop.f32.mrb[0].mxu0
    %v1169 = vadd.f32 0.0, %v1168
    %v1170 = vpop.f32.mrb[0].mxu0
    %v1171 = vadd.f32 0.0, %v1170
    %v1172 = vpop.f32.mrb[0].mxu0
    %v1173 = vadd.f32 0.0, %v1172
    %1174 = vmatprep.mubr.bf16.mxu0 %v350
    %1175 = vmatmul.mubr.bf16.gmra.mrb[0].mxu0 %v349
    %v1176 = vpop.f32.mrb[0].mxu0
    %v1177 = vadd.f32 0.0, %v1176
    %v1178 = vpop.f32.mrb[0].mxu0
    %v1179 = vadd.f32 0.0, %v1178
    %v1180 = vpop.f32.mrb[0].mxu0
    %v1181 = vadd.f32 0.0, %v1180
    %v1182 = vpop.f32.mrb[0].mxu0
    %v1183 = vadd.f32 0.0, %v1182
    %1184 = vmatprep.mubr.bf16.mxu0 %v359
    %1185 = vmatmul.mubr.bf16.gmra.mrb[0].mxu0 %v358
    %v1186 = vpop.f32.mrb[0].mxu0
    %v1187 = vadd.f32 0.0, %v1186
    %v1188 = vpop.f32.mrb[0].mxu0
    %v1189 = vadd.f32 0.0, %v1188
    %v1190 = vpop.f32.mrb[0].mxu0
    %v1191 = vadd.f32 0.0, %v1190
    %v1192 = vpop.f32.mrb[0].mxu0
    %v1193 = vadd.f32 0.0, %v1192
    %1194 = vmatprep.mubr.bf16.mxu0 %v368
    %1195 = vmatmul.mubr.bf16.gmra.mrb[0].mxu0 %v367
    %v1196 = vpop.f32.mrb[0].mxu0
    %v1197 = vadd.f32 0.0, %v1196
    %v1198 = vpop.f32.mrb[0].mxu0
    %v1199 = vadd.f32 0.0, %v1198
    %v1200 = vpop.f32.mrb[0].mxu0
    %v1201 = vadd.f32 0.0, %v1200
    %v1202 = vpop.f32.mrb[0].mxu0
    %v1203 = vadd.f32 0.0, %v1202
    %1204 = vdwg.mxu0
    %1205 = vmatprep.subr.bf16.mxu0 %v877
    %1206 = vmatpush1.bf16.msra.mxu0 %v876
    %1207 = vmatprep.subr.bf16.mxu0 %v879
    %1208 = vmatpush1.bf16.msra.mxu0 %v878
    %1209 = vmatprep.subr.bf16.mxu0 %v881
    %1210 = vmatpush1.bf16.msra.mxu0 %v880
    %1211 = vmatprep.subr.bf16.mxu0 %v883
    %1212 = vmatpush1.bf16.msra.mxu0 %v882
    %1213 = vmatprep.subr.bf16.mxu0 %v885
    %1214 = vmatpush1.bf16.msra.mxu0 %v884
    %1215 = vmatprep.subr.bf16.mxu0 %v887
    %1216 = vmatpush1.bf16.msra.mxu0 %v886
    %1217 = vmatprep.subr.bf16.mxu0 %v889
    %1218 = vmatpush1.bf16.msra.mxu0 %v888
    %1219 = vmatprep.subr.bf16.mxu0 %v891
    %1220 = vmatpush1.bf16.msra.mxu0 %v890
    %1221 = vmatprep.subr.bf16.mxu0 %v893
    %1222 = vmatpush1.bf16.msra.mxu0 %v892
    %1223 = vmatprep.subr.bf16.mxu0 %v895
    %1224 = vmatpush1.bf16.msra.mxu0 %v894
    %1225 = vmatprep.subr.bf16.mxu0 %v897
    %1226 = vmatpush1.bf16.msra.mxu0 %v896
    %1227 = vmatprep.subr.bf16.mxu0 %v899
    %1228 = vmatpush1.bf16.msra.mxu0 %v898
    %1229 = vmatprep.subr.bf16.mxu0 %v901
    %1230 = vmatpush1.bf16.msra.mxu0 %v900
    %1231 = vmatprep.subr.bf16.mxu0 %v903
    %1232 = vmatpush1.bf16.msra.mxu0 %v902
    %1233 = vmatprep.subr.bf16.mxu0 %v905
    %1234 = vmatpush1.bf16.msra.mxu0 %v904
    %1235 = vmatprep.subr.bf16.mxu0 %v907
    %1236 = vmatpush1.bf16.msra.mxu0 %v906
    %1237 = vmatprep.mubr.bf16.mxu0 %v343
    %1238 = vmatmul.mubr.bf16.gmra.mrb[0].mxu0 %v342
    %v1239 = vpop.f32.mrb[0].mxu0
    %v1240 = vadd.f32 %v1167, %v1239
    %v1241 = vpop.f32.mrb[0].mxu0
    %v1242 = vadd.f32 %v1169, %v1241
    %v1243 = vpop.f32.mrb[0].mxu0
    %v1244 = vadd.f32 %v1171, %v1243
    %v1245 = vpop.f32.mrb[0].mxu0
    %v1246 = vadd.f32 %v1173, %v1245
    %1247 = vmatprep.mubr.bf16.mxu0 %v352
    %1248 = vmatmul.mubr.bf16.gmra.mrb[0].mxu0 %v351
    %v1249 = vpop.f32.mrb[0].mxu0
    %v1250 = vadd.f32 %v1177, %v1249
    %v1251 = vpop.f32.mrb[0].mxu0
    %v1252 = vadd.f32 %v1179, %v1251
    %v1253 = vpop.f32.mrb[0].mxu0
    %v1254 = vadd.f32 %v1181, %v1253
    %v1255 = vpop.f32.mrb[0].mxu0
    %v1256 = vadd.f32 %v1183, %v1255
    %1257 = vmatprep.mubr.bf16.mxu0 %v361
    %1258 = vmatmul.mubr.bf16.gmra.mrb[0].mxu0 %v360
    %v1259 = vpop.f32.mrb[0].mxu0
    %v1260 = vadd.f32 %v1187, %v1259
    %v1261 = vpop.f32.mrb[0].mxu0
    %v1262 = vadd.f32 %v1189, %v1261
    %v1263 = vpop.f32.mrb[0].mxu0
    %v1264 = vadd.f32 %v1191, %v1263
    %v1265 = vpop.f32.mrb[0].mxu0
    %v1266 = vadd.f32 %v1193, %v1265
    %1267 = vmatprep.mubr.bf16.mxu0 %v370
    %1268 = vmatmul.mubr.bf16.gmra.mrb[0].mxu0 %v369
    %v1269 = vpop.f32.mrb[0].mxu0
    %v1270 = vadd.f32 %v1197, %v1269
    %v1271 = vpop.f32.mrb[0].mxu0
    %v1272 = vadd.f32 %v1199, %v1271
    %v1273 = vpop.f32.mrb[0].mxu0
    %v1274 = vadd.f32 %v1201, %v1273
    %v1275 = vpop.f32.mrb[0].mxu0
    %v1276 = vadd.f32 %v1203, %v1275
    %1277 = vdwg.mxu0
    %1278 = vmatprep.subr.bf16.mxu0 %v909
    %1279 = vmatpush1.bf16.msra.mxu0 %v908
    %1280 = vmatprep.subr.bf16.mxu0 %v911
    %1281 = vmatpush1.bf16.msra.mxu0 %v910
    %1282 = vmatprep.subr.bf16.mxu0 %v913
    %1283 = vmatpush1.bf16.msra.mxu0 %v912
    %1284 = vmatprep.subr.bf16.mxu0 %v915
    %1285 = vmatpush1.bf16.msra.mxu0 %v914
    %1286 = vmatprep.subr.bf16.mxu0 %v917
    %1287 = vmatpush1.bf16.msra.mxu0 %v916
    %1288 = vmatprep.subr.bf16.mxu0 %v919
    %1289 = vmatpush1.bf16.msra.mxu0 %v918
    %1290 = vmatprep.subr.bf16.mxu0 %v921
    %1291 = vmatpush1.bf16.msra.mxu0 %v920
    %1292 = vmatprep.subr.bf16.mxu0 %v923
    %1293 = vmatpush1.bf16.msra.mxu0 %v922
    %1294 = vmatprep.subr.bf16.mxu0 %v925
    %1295 = vmatpush1.bf16.msra.mxu0 %v924
    %1296 = vmatprep.subr.bf16.mxu0 %v927
    %1297 = vmatpush1.bf16.msra.mxu0 %v926
    %1298 = vmatprep.subr.bf16.mxu0 %v929
    %1299 = vmatpush1.bf16.msra.mxu0 %v928
    %1300 = vmatprep.subr.bf16.mxu0 %v931
    %1301 = vmatpush1.bf16.msra.mxu0 %v930
    %1302 = vmatprep.subr.bf16.mxu0 %v933
    %1303 = vmatpush1.bf16.msra.mxu0 %v932
    %1304 = vmatprep.subr.bf16.mxu0 %v935
    %1305 = vmatpush1.bf16.msra.mxu0 %v934
    %1306 = vmatprep.subr.bf16.mxu0 %v937
    %1307 = vmatpush1.bf16.msra.mxu0 %v936
    %1308 = vmatprep.subr.bf16.mxu0 %v939
    %1309 = vmatpush1.bf16.msra.mxu0 %v938
    %1310 = vmatprep.mubr.bf16.mxu0 %v345
    %1311 = vmatmul.mubr.bf16.gmra.mrb[0].mxu0 %v344
    %v1312 = vpop.f32.mrb[0].mxu0
    %v1313 = vadd.f32 %v1240, %v1312
    %v1314 = vpop.f32.mrb[0].mxu0
    %v1315 = vadd.f32 %v1242, %v1314
    %v1316 = vpop.f32.mrb[0].mxu0
    %v1317 = vadd.f32 %v1244, %v1316
    %v1318 = vpop.f32.mrb[0].mxu0
    %v1319 = vadd.f32 %v1246, %v1318
    %1320 = vmatprep.mubr.bf16.mxu0 %v354
    %1321 = vmatmul.mubr.bf16.gmra.mrb[0].mxu0 %v353
    %v1322 = vpop.f32.mrb[0].mxu0
    %v1323 = vadd.f32 %v1250, %v1322
    %v1324 = vpop.f32.mrb[0].mxu0
    %v1325 = vadd.f32 %v1252, %v1324
    %v1326 = vpop.f32.mrb[0].mxu0
    %v1327 = vadd.f32 %v1254, %v1326
    %v1328 = vpop.f32.mrb[0].mxu0
    %v1329 = vadd.f32 %v1256, %v1328
    %1330 = vmatprep.mubr.bf16.mxu0 %v363
    %1331 = vmatmul.mubr.bf16.gmra.mrb[0].mxu0 %v362
    %v1332 = vpop.f32.mrb[0].mxu0
    %v1333 = vadd.f32 %v1260, %v1332
    %v1334 = vpop.f32.mrb[0].mxu0
    %v1335 = vadd.f32 %v1262, %v1334
    %v1336 = vpop.f32.mrb[0].mxu0
    %v1337 = vadd.f32 %v1264, %v1336
    %v1338 = vpop.f32.mrb[0].mxu0
    %v1339 = vadd.f32 %v1266, %v1338
    %1340 = vmatprep.mubr.bf16.mxu0 %v372
    %1341 = vmatmul.mubr.bf16.gmra.mrb[0].mxu0 %v371
    %v1342 = vpop.f32.mrb[0].mxu0
    %v1343 = vadd.f32 %v1270, %v1342
    %v1344 = vpop.f32.mrb[0].mxu0
    %v1345 = vadd.f32 %v1272, %v1344
    %v1346 = vpop.f32.mrb[0].mxu0
    %v1347 = vadd.f32 %v1274, %v1346
    %v1348 = vpop.f32.mrb[0].mxu0
    %v1349 = vadd.f32 %v1276, %v1348
    %1350 = vdwg.mxu0
    %1351 = vmatprep.subr.bf16.mxu0 %v941
    %1352 = vmatpush1.bf16.msra.mxu0 %v940
    %1353 = vmatprep.subr.bf16.mxu0 %v943
    %1354 = vmatpush1.bf16.msra.mxu0 %v942
    %1355 = vmatprep.subr.bf16.mxu0 %v945
    %1356 = vmatpush1.bf16.msra.mxu0 %v944
    %1357 = vmatprep.subr.bf16.mxu0 %v947
    %1358 = vmatpush1.bf16.msra.mxu0 %v946
    %1359 = vmatprep.subr.bf16.mxu0 %v949
    %1360 = vmatpush1.bf16.msra.mxu0 %v948
    %1361 = vmatprep.subr.bf16.mxu0 %v951
    %1362 = vmatpush1.bf16.msra.mxu0 %v950
    %1363 = vmatprep.subr.bf16.mxu0 %v953
    %1364 = vmatpush1.bf16.msra.mxu0 %v952
    %1365 = vmatprep.subr.bf16.mxu0 %v955
    %1366 = vmatpush1.bf16.msra.mxu0 %v954
    %1367 = vmatprep.subr.bf16.mxu0 %v957
    %1368 = vmatpush1.bf16.msra.mxu0 %v956
    %1369 = vmatprep.subr.bf16.mxu0 %v959
    %1370 = vmatpush1.bf16.msra.mxu0 %v958
    %1371 = vmatprep.subr.bf16.mxu0 %v961
    %1372 = vmatpush1.bf16.msra.mxu0 %v960
    %1373 = vmatprep.subr.bf16.mxu0 %v963
    %1374 = vmatpush1.bf16.msra.mxu0 %v962
    %1375 = vmatprep.subr.bf16.mxu0 %v965
    %1376 = vmatpush1.bf16.msra.mxu0 %v964
    %1377 = vmatprep.subr.bf16.mxu0 %v967
    %1378 = vmatpush1.bf16.msra.mxu0 %v966
    %1379 = vmatprep.subr.bf16.mxu0 %v969
    %1380 = vmatpush1.bf16.msra.mxu0 %v968
    %1381 = vmatprep.subr.bf16.mxu0 %v971
    %1382 = vmatpush1.bf16.msra.mxu0 %v970
    %1383 = vmatprep.mubr.bf16.mxu0 %v347
    %1384 = vmatmul.mubr.bf16.gmra.mrb[0].mxu0 %v346
    %v1385 = vpop.f32.mrb[0].mxu0
    %v1386 = vadd.f32 %v1313, %v1385
    %v1387 = vpop.f32.mrb[0].mxu0
    %v1388 = vadd.f32 %v1315, %v1387
    %v1389 = vpop.f32.mrb[0].mxu0
    %v1390 = vadd.f32 %v1317, %v1389
    %v1391 = vpop.f32.mrb[0].mxu0
    %v1392 = vadd.f32 %v1319, %v1391
    %1393 = vmatprep.mubr.bf16.mxu0 %v356
    %1394 = vmatmul.mubr.bf16.gmra.mrb[0].mxu0 %v355
    %v1395 = vpop.f32.mrb[0].mxu0
    %v1396 = vadd.f32 %v1323, %v1395
    %v1397 = vpop.f32.mrb[0].mxu0
    %v1398 = vadd.f32 %v1325, %v1397
    %v1399 = vpop.f32.mrb[0].mxu0
    %v1400 = vadd.f32 %v1327, %v1399
    %v1401 = vpop.f32.mrb[0].mxu0
    %v1402 = vadd.f32 %v1329, %v1401
    %1403 = vmatprep.mubr.bf16.mxu0 %v365
    %1404 = vmatmul.mubr.bf16.gmra.mrb[0].mxu0 %v364
    %v1405 = vpop.f32.mrb[0].mxu0
    %v1406 = vadd.f32 %v1333, %v1405
    %v1407 = vpop.f32.mrb[0].mxu0
    %v1408 = vadd.f32 %v1335, %v1407
    %v1409 = vpop.f32.mrb[0].mxu0
    %v1410 = vadd.f32 %v1337, %v1409
    %v1411 = vpop.f32.mrb[0].mxu0
    %v1412 = vadd.f32 %v1339, %v1411
    %1413 = vmatprep.mubr.bf16.mxu0 %v374
    %1414 = vmatmul.mubr.bf16.gmra.mrb[0].mxu0 %v373
    %v1415 = vpop.f32.mrb[0].mxu0
    %v1416 = vadd.f32 %v1343, %v1415
    %v1417 = vpop.f32.mrb[0].mxu0
    %v1418 = vadd.f32 %v1345, %v1417
    %v1419 = vpop.f32.mrb[0].mxu0
    %v1420 = vadd.f32 %v1347, %v1419
    %v1421 = vpop.f32.mrb[0].mxu0
    %v1422 = vadd.f32 %v1349, %v1421
    %1423 = vdwg.mxu0
    %1424 = vmatprep.subr.bf16.mxu0 %v973
    %1425 = vmatpush1.bf16.msra.mxu0 %v972
    %1426 = vmatprep.subr.bf16.mxu0 %v975
    %1427 = vmatpush1.bf16.msra.mxu0 %v974
    %1428 = vmatprep.subr.bf16.mxu0 %v977
    %1429 = vmatpush1.bf16.msra.mxu0 %v976
    %1430 = vmatprep.subr.bf16.mxu0 %v979
    %1431 = vmatpush1.bf16.msra.mxu0 %v978
    %1432 = vmatprep.subr.bf16.mxu0 %v981
    %1433 = vmatpush1.bf16.msra.mxu0 %v980
    %1434 = vmatprep.subr.bf16.mxu0 %v983
    %1435 = vmatpush1.bf16.msra.mxu0 %v982
    %1436 = vmatprep.subr.bf16.mxu0 %v985
    %1437 = vmatpush1.bf16.msra.mxu0 %v984
    %1438 = vmatprep.subr.bf16.mxu0 %v987
    %1439 = vmatpush1.bf16.msra.mxu0 %v986
    %1440 = vmatprep.subr.bf16.mxu0 0
    %1441 = vmatpush1.bf16.msra.mxu0 0
    %1442 = vmatprep.subr.bf16.mxu0 0
    %1443 = vmatpush1.bf16.msra.mxu0 0
    %1444 = vmatprep.subr.bf16.mxu0 0
    %1445 = vmatpush1.bf16.msra.mxu0 0
    %1446 = vmatprep.subr.bf16.mxu0 0
    %1447 = vmatpush1.bf16.msra.mxu0 0
    %1448 = vmatprep.subr.bf16.mxu0 0
    %1449 = vmatpush1.bf16.msra.mxu0 0
    %1450 = vmatprep.subr.bf16.mxu0 0
    %1451 = vmatpush1.bf16.msra.mxu0 0
    %1452 = vmatprep.subr.bf16.mxu0 0
    %1453 = vmatpush1.bf16.msra.mxu0 0
    %1454 = vmatprep.subr.bf16.mxu0 0
    %1455 = vmatpush1.bf16.msra.mxu0 0
    %1456 = vmatprep.mubr.bf16.mxu0 0
    %1457 = vmatmul.mubr.bf16.gmra.mrb[0].mxu0 %v348
    %v1458 = vpop.f32.mrb[0].mxu0
    %v1459 = vadd.f32 %v1386, %v1458
    %v1460 = vpop.f32.mrb[0].mxu0
    %v1461 = vadd.f32 %v1388, %v1460
    %v1462 = vpop.f32.mrb[0].mxu0
    %v1463 = vadd.f32 %v1390, %v1462
    %v1464 = vpop.f32.mrb[0].mxu0
    %v1465 = vadd.f32 %v1392, %v1464
    %1466 = vmatprep.mubr.bf16.mxu0 0
    %1467 = vmatmul.mubr.bf16.gmra.mrb[0].mxu0 %v357
    %v1468 = vpop.f32.mrb[0].mxu0
    %v1469 = vadd.f32 %v1396, %v1468
    %v1470 = vpop.f32.mrb[0].mxu0
    %v1471 = vadd.f32 %v1398, %v1470
    %v1472 = vpop.f32.mrb[0].mxu0
    %v1473 = vadd.f32 %v1400, %v1472
    %v1474 = vpop.f32.mrb[0].mxu0
    %v1475 = vadd.f32 %v1402, %v1474
    %1476 = vmatprep.mubr.bf16.mxu0 0
    %1477 = vmatmul.mubr.bf16.gmra.mrb[0].mxu0 %v366
    %v1478 = vpop.f32.mrb[0].mxu0
    %v1479 = vadd.f32 %v1406, %v1478
    %v1480 = vpop.f32.mrb[0].mxu0
    %v1481 = vadd.f32 %v1408, %v1480
    %v1482 = vpop.f32.mrb[0].mxu0
    %v1483 = vadd.f32 %v1410, %v1482
    %v1484 = vpop.f32.mrb[0].mxu0
    %v1485 = vadd.f32 %v1412, %v1484
    %1486 = vmatprep.mubr.bf16.mxu0 0
    %1487 = vmatmul.mubr.bf16.gmra.mrb[0].mxu0 %v375
    %v1488 = vpop.f32.mrb[0].mxu0
    %v1489 = vadd.f32 %v1416, %v1488
    %v1490 = vpop.f32.mrb[0].mxu0
    %v1491 = vadd.f32 %v1418, %v1490
    %v1492 = vpop.f32.mrb[0].mxu0
    %v1493 = vadd.f32 %v1420, %v1492
    %v1494 = vpop.f32.mrb[0].mxu0
    %v1495 = vadd.f32 %v1422, %v1494
    %1496 = vdwg.mxu0
    %v1497 = vadd.f32 %v1459, %v1463
    %v1498 = vadd.f32 %v1497, %v1469
    %v1499 = vadd.f32 %v1498, %v1473
    %v1500 = vadd.f32 %v1499, %v1479
    %v1501 = vadd.f32 %v1500, %v1483
    %v1502 = vadd.f32 %v1501, %v1489
    %v1503 = vadd.f32 %v1502, %v1493
    %v1504 = vrot.slane %v1503, 4
    %v1505 = vadd.f32 %v1503, %v1504
    %v1506 = vrot.slane %v1505, 2
    %v1507 = vadd.f32 %v1505, %v1506
    %v1508 = vrot.slane %v1507, 1
    %v1509 = vadd.f32 %v1507, %v1508
    %v1510 = vadd.f32 %v1461, %v1465
    %v1511 = vadd.f32 %v1510, %v1471
    %v1512 = vadd.f32 %v1511, %v1475
    %v1513 = vadd.f32 %v1512, %v1481
    %v1514 = vadd.f32 %v1513, %v1485
    %v1515 = vadd.f32 %v1514, %v1491
    %v1516 = vadd.f32 %v1515, %v1495
    %v1517 = vrot.slane %v1516, 4
    %v1518 = vadd.f32 %v1516, %v1517
    %v1519 = vrot.slane %v1518, 2
    %v1520 = vadd.f32 %v1518, %v1519
    %v1521 = vrot.slane %v1520, 1
    %v1522 = vadd.f32 %v1520, %v1521
    %v1525 = vcombine.low %v1509, %v1522
    %v1527 = vunpack.c.l.s4 1966171168
    %v1528 = vunpack.c.0.s8 %v1527
    %v1529 = vlaneseq
    %v1530 = vshrl.u32 %v1529, 7
    %v1531 = vsub.s32 %v1528, %v1530
    %v1532 = vrot.slane %v1525, %v1531
    %v1534 = vunpack.c.l.s4 1966171168
    %v1535 = vunpack.c.0.s8 %v1534
    %v1536 = vlaneseq
    %v1537 = vshrl.u32 %v1536, 7
    %v1538 = vsub.s32 %v1535, %v1537
    %v1539 = vrot.slane %v1532, %v1538
    %v1541 = vlaneseq
    %vm1542 = vcmp.ge.s32.totalorder %v1541, 0
    %vm1543 = vcmp.lt.s32.totalorder %v1541, 256
    %vm1544 = vmand %vm1542, %vm1543
    %1545 = vst.msk [vmem:[#allocation8] ss:$8 sm:$0x3] %vm1544, %v1539
    %1546 = vst.msk [vmem:[#allocation8] ss:$8 sm:$0x0] %vm1544, %v1539
    %v1547 = vmul.f32 %v1459, %v1459
    %v1548 = vmul.f32 %v1461, %v1461
    %v1549 = vmul.f32 %v1463, %v1463
    %v1550 = vmul.f32 %v1465, %v1465
    %v1551 = vmul.f32 %v1469, %v1469
    %v1552 = vmul.f32 %v1471, %v1471
    %v1553 = vmul.f32 %v1473, %v1473
    %v1554 = vmul.f32 %v1475, %v1475
    %v1555 = vmul.f32 %v1479, %v1479
    %v1556 = vmul.f32 %v1481, %v1481
    %v1557 = vmul.f32 %v1483, %v1483
    %v1558 = vmul.f32 %v1485, %v1485
    %v1559 = vmul.f32 %v1489, %v1489
    %v1560 = vmul.f32 %v1491, %v1491
    %v1561 = vmul.f32 %v1493, %v1493
    %v1562 = vmul.f32 %v1495, %v1495
    %v1563 = vadd.f32 %v1547, %v1549
    %v1564 = vadd.f32 %v1563, %v1551
    %v1565 = vadd.f32 %v1564, %v1553
    %v1566 = vadd.f32 %v1565, %v1555
    %v1567 = vadd.f32 %v1566, %v1557
    %v1568 = vadd.f32 %v1567, %v1559
    %v1569 = vadd.f32 %v1568, %v1561
    %v1570 = vrot.slane %v1569, 4
    %v1571 = vadd.f32 %v1569, %v1570
    %v1572 = vrot.slane %v1571, 2
    %v1573 = vadd.f32 %v1571, %v1572
    %v1574 = vrot.slane %v1573, 1
    %v1575 = vadd.f32 %v1573, %v1574
    %v1576 = vadd.f32 %v1548, %v1550
    %v1577 = vadd.f32 %v1576, %v1552
    %v1578 = vadd.f32 %v1577, %v1554
    %v1579 = vadd.f32 %v1578, %v1556
    %v1580 = vadd.f32 %v1579, %v1558
    %v1581 = vadd.f32 %v1580, %v1560
    %v1582 = vadd.f32 %v1581, %v1562
    %v1583 = vrot.slane %v1582, 4
    %v1584 = vadd.f32 %v1582, %v1583
    %v1585 = vrot.slane %v1584, 2
    %v1586 = vadd.f32 %v1584, %v1585
    %v1587 = vrot.slane %v1586, 1
    %v1588 = vadd.f32 %v1586, %v1587
    %v1591 = vcombine.low %v1575, %v1588
    %v1593 = vunpack.c.l.s4 1966171168
    %v1594 = vunpack.c.0.s8 %v1593
    %v1595 = vlaneseq
    %v1596 = vshrl.u32 %v1595, 7
    %v1597 = vsub.s32 %v1594, %v1596
    %v1598 = vrot.slane %v1591, %v1597
    %v1600 = vunpack.c.l.s4 1966171168
    %v1601 = vunpack.c.0.s8 %v1600
    %v1602 = vlaneseq
    %v1603 = vshrl.u32 %v1602, 7
    %v1604 = vsub.s32 %v1601, %v1603
    %v1605 = vrot.slane %v1598, %v1604
    %s1607 = scalar_lea.vmem [#allocation8], 1
    %1608 = vst.msk [vmem:[%s1607] ss:$8 sm:$0x3] %vm1544, %v1605
    %1609 = vst.msk [vmem:[%s1607] ss:$8 sm:$0x0] %vm1544, %v1605
    %v1610 = vpack.c.bf16 %v1463, %v1459
    %v1611 = vpack.c.bf16 %v1465, %v1461
    %v1612 = vpack.c.bf16 %v1473, %v1469
    %v1613 = vpack.c.bf16 %v1475, %v1471
    %v1614 = vpack.c.bf16 %v1483, %v1479
    %v1615 = vpack.c.bf16 %v1485, %v1481
    %v1616 = vpack.c.bf16 %v1493, %v1489
    %v1617 = vpack.c.bf16 %v1495, %v1491
    %v1626 = vunpack.c.l.b16 %v1610
    %v1627 = vunpack.c.l.b16 %v1611
    %v1628 = vunpack.c.h.b16 %v1610
    %v1629 = vunpack.c.h.b16 %v1611
    %v1630 = vunpack.c.l.b16 %v1612
    %v1631 = vunpack.c.l.b16 %v1613
    %v1632 = vunpack.c.h.b16 %v1612
    %v1633 = vunpack.c.h.b16 %v1613
    %v1634 = vunpack.c.l.b16 %v1614
    %v1635 = vunpack.c.l.b16 %v1615
    %v1636 = vunpack.c.h.b16 %v1614
    %v1637 = vunpack.c.h.b16 %v1615
    %v1638 = vunpack.c.l.b16 %v1616
    %v1639 = vunpack.c.l.b16 %v1617
    %v1640 = vunpack.c.h.b16 %v1616
    %v1641 = vunpack.c.h.b16 %v1617
    %v1642 = vpack.c.b16 %v1627, %v1626
    %v1643 = vpack.c.b16 %v1629, %v1628
    %v1644 = vpack.c.b16 %v1631, %v1630
    %v1645 = vpack.c.b16 %v1633, %v1632
    %v1646 = vpack.c.b16 %v1635, %v1634
    %v1647 = vpack.c.b16 %v1637, %v1636
    %v1648 = vpack.c.b16 %v1639, %v1638
    %v1649 = vpack.c.b16 %v1641, %v1640
    %1658 = vst [vmem:[#allocation7] sm:$0xff] %v1642
    %1659 = vst [vmem:[#allocation7 + $0x8] sm:$0xff] %v1643
    %1660 = vst [vmem:[#allocation7 + $0x10] sm:$0xff] %v1644
    %1661 = vst [vmem:[#allocation7 + $0x18] sm:$0xff] %v1645
    %1662 = vst [vmem:[#allocation7 + $0x20] sm:$0xff] %v1646
    %1663 = vst [vmem:[#allocation7 + $0x28] sm:$0xff] %v1647
    %1664 = vst [vmem:[#allocation7 + $0x30] sm:$0xff] %v1648
    %1665 = vst [vmem:[#allocation7 + $0x38] sm:$0xff] %v1649
    // Predicated region
    $region18: #{generator_forward.4} parent=1 // pred_check
      _
    $region19: #{generator_forward.4} parent=1 // pred_check_branch
      %1667 = sbr.rel (0) target = $region21
    $region20: #{generator_forward.4} parent=1 // pred_region
      %s1669 = ssub.s32 1024, 1024
      %1670 = vsyncadd [#allocation4], %s1669
      %s1671 = sshll.u32 [#allocation7], 4
      %s1672 = int_to_ptr.vmem [resolvable:$true] %s1671
      %1677 = dma.vmem_to_hbm [thread:$0]  %s1672, 1024, %s2, [#allocation4], 128, 128, 8
    $region21: #{generator_forward.4} parent=1 // pred_fallthru
      _
    // Predicated region
    $region22: #{generator_forward.4} parent=1 // pred_check
      _
    $region23: #{generator_forward.4} parent=1 // pred_check_branch
      %1679 = sbr.rel (0) target = $region25
    $region24: #{generator_forward.4} parent=1 // pred_region
      %s1681 = ssub.s32 256, 256
      %1682 = vsyncadd [#allocation9], %s1681
      %s1684 = sshll.u32 [#allocation8], 4
      %s1685 = int_to_ptr.vmem [resolvable:$true] %s1684
      %1687 = dma.vmem_to_hbm [thread:$0]  %s1685, 256, %s3, [#allocation9]
    $region25: #{generator_forward.4} parent=1 // pred_fallthru
      _
    // Predicated region
    $region26: #{generator_forward.4} parent=1 // pred_check
      _
    $region27: #{generator_forward.4} parent=1 // pred_check_branch
      %1689 = sbr.rel (0) target = $region29
    $region28: #{generator_forward.4} parent=1 // pred_region
      %1690 = dma.done [#allocation4], 1024
    $region29: #{generator_forward.4} parent=1 // pred_fallthru
      _
    // Predicated region
    $region30: #{generator_forward.4} parent=1 // pred_check
      _
    $region31: #{generator_forward.4} parent=1 // pred_check_branch
      %1692 = sbr.rel (0) target = $region33
    $region32: #{generator_forward.4} parent=1 // pred_region
      %1693 = dma.done [#allocation9], 256
    $region33: #{generator_forward.4} parent=1 // pred_fallthru
      _
    %1694 = vsyncpa [#allocation3], 1
    %1695 = vsyncpa [#allocation6], 1
    %1696 = vsyncpa [#allocation4], 1
    %1697 = vsyncpa [#allocation9], 1

// kernel: generator_forward.5
$region0: #{generator_forward.5}
  #allocation0 [shape = 'u32[]', space=smem, size = 0x4, offset = 0x4, fixed_abs, tag = 'smem constant byte address 0x4 - core index']
  #allocation1 [shape = 'u32[144,128]{1,0:T(1,128)}', space=vmem, size = 0x12000, scoped, tag = 'internal scratch']
  %s0 = inlined_call_operand.hbm [shape: bf16[128,640], index: 0, kind: input, shape index: {}]
  %s1 = inlined_call_operand.hbm [shape: bf16[640,128], index: 1, kind: input, shape index: {}]
  %s2 = inlined_call_operand.hbm [shape: bf16[128,128], index: 2, kind: output, shape index: {0}]
  %s3 = inlined_call_operand.hbm [shape: f32[8,128], index: 3, kind: output, shape index: {1}]
  %4 = xla_tuple %s2, %s3
  %s5 = sld [smem:[#allocation0]]
  $region34: #{generator_forward.5} parent=0
    _
  %s7 = ssub.s32 1, %s5
  %s8 = scalar_select 0, %s7, %s5
  $region1: #{generator_forward.5} parent=0
    #allocation2 [shape = 'u8[163840]{0}', space=vmem, size = 0x28000, scoped, tag = 'input window, operand 0, single buffered']
    #allocation3 [shape = 's32[1]{0}', space=sflag, size = 0x4, scoped, tag = 'scoped memory for generator_forward.5']
    #allocation4 [shape = 's32[1]{0}', space=sflag, size = 0x4, scoped, tag = 'scoped memory for generator_forward.5']
    #allocation5 [shape = 'u8[163840]{0}', space=vmem, size = 0x28000, scoped, tag = 'input window, operand 1, single buffered']
    #allocation6 [shape = 's32[1]{0}', space=sflag, size = 0x4, scoped, tag = 'scoped memory for generator_forward.5']
    #allocation7 [shape = 'u8[32768]{0}', space=vmem, size = 0x8000, scoped, tag = 'output window, operand 0, single buffered']
    #allocation8 [shape = 'u8[4096]{0}', space=vmem, size = 0x1000, scoped, tag = 'output window, operand 1, single buffered']
    #allocation9 [shape = 's32[1]{0}', space=sflag, size = 0x4, scoped, tag = 'scoped memory for generator_forward.5']
    %9 = vsyncpa [#allocation3], 0
    %10 = vsyncpa [#allocation6], 0
    %11 = vsyncpa [#allocation4], 0
    %12 = vsyncpa [#allocation9], 0
    // Predicated region
    $region2: #{generator_forward.5} parent=1 // pred_check
      _
    $region3: #{generator_forward.5} parent=1 // pred_check_branch
      %14 = sbr.rel (0) target = $region5
    $region4: #{generator_forward.5} parent=1 // pred_region
      %s16 = ssub.s32 5120, 5120
      %17 = vsyncadd [#allocation3], %s16
      %s18 = sshll.u32 [#allocation2], 4
      %s19 = int_to_ptr.vmem [resolvable:$true] %s18
      %24 = dma.hbm_to_vmem [thread:$0]  %s0, 5120, %s19, [#allocation3], 320, 320, 20
    $region5: #{generator_forward.5} parent=1 // pred_fallthru
      _
    // Predicated region
    $region6: #{generator_forward.5} parent=1 // pred_check
      _
    $region7: #{generator_forward.5} parent=1 // pred_check_branch
      %26 = sbr.rel (0) target = $region9
    $region8: #{generator_forward.5} parent=1 // pred_region
      %s28 = ssub.s32 5120, 5120
      %29 = vsyncadd [#allocation6], %s28
      %s30 = sshll.u32 [#allocation5], 4
      %s31 = int_to_ptr.vmem [resolvable:$true] %s30
      %36 = dma.hbm_to_vmem [thread:$0]  %s1, 5120, %s31, [#allocation6], 64, 64, 4
    $region9: #{generator_forward.5} parent=1 // pred_fallthru
      _
    // Predicated region
    $region10: #{generator_forward.5} parent=1 // pred_check
      _
    $region11: #{generator_forward.5} parent=1 // pred_check_branch
      %38 = sbr.rel (0) target = $region13
    $region12: #{generator_forward.5} parent=1 // pred_region
      %39 = dma.done [#allocation3], 5120
    $region13: #{generator_forward.5} parent=1 // pred_fallthru
      _
    // Predicated region
    $region14: #{generator_forward.5} parent=1 // pred_check
      _
    $region15: #{generator_forward.5} parent=1 // pred_check_branch
      %41 = sbr.rel (0) target = $region17
    $region16: #{generator_forward.5} parent=1 // pred_region
      %42 = dma.done [#allocation6], 5120
    $region17: #{generator_forward.5} parent=1 // pred_fallthru
      _
    %v44 = vld [vmem:[#allocation2] sm:$0xff]
    %v45 = vld [vmem:[#allocation2 + $0x8] sm:$0xff]
    %v46 = vld [vmem:[#allocation2 + $0x10] sm:$0xf]
    %v47 = vld [vmem:[#allocation2 + $0x14] sm:$0xff]
    %v48 = vld [vmem:[#allocation2 + $0x1c] sm:$0xff]
    %v49 = vld [vmem:[#allocation2 + $0x24] sm:$0xf]
    %v50 = vld [vmem:[#allocation2 + $0x28] sm:$0xff]
    %v51 = vld [vmem:[#allocation2 + $0x30] sm:$0xff]
    %v52 = vld [vmem:[#allocation2 + $0x38] sm:$0xf]
    %v53 = vld [vmem:[#allocation2 + $0x3c] sm:$0xff]
    %v54 = vld [vmem:[#allocation2 + $0x44] sm:$0xff]
    %v55 = vld [vmem:[#allocation2 + $0x4c] sm:$0xf]
    %v56 = vld [vmem:[#allocation2 + $0x50] sm:$0xff]
    %v57 = vld [vmem:[#allocation2 + $0x58] sm:$0xff]
    %v58 = vld [vmem:[#allocation2 + $0x60] sm:$0xf]
    %v59 = vld [vmem:[#allocation2 + $0x64] sm:$0xff]
    %v60 = vld [vmem:[#allocation2 + $0x6c] sm:$0xff]
    %v61 = vld [vmem:[#allocation2 + $0x74] sm:$0xf]
    %v62 = vld [vmem:[#allocation2 + $0x78] sm:$0xff]
    %v63 = vld [vmem:[#allocation2 + $0x80] sm:$0xff]
    %v64 = vld [vmem:[#allocation2 + $0x88] sm:$0xf]
    %v65 = vld [vmem:[#allocation2 + $0x8c] sm:$0xff]
    %v66 = vld [vmem:[#allocation2 + $0x94] sm:$0xff]
    %v67 = vld [vmem:[#allocation2 + $0x9c] sm:$0xf]
    %v68 = vld [vmem:[#allocation2 + $0xa0] sm:$0xff]
    %v69 = vld [vmem:[#allocation2 + $0xa8] sm:$0xff]
    %v70 = vld [vmem:[#allocation2 + $0xb0] sm:$0xf]
    %v71 = vld [vmem:[#allocation2 + $0xb4] sm:$0xff]
    %v72 = vld [vmem:[#allocation2 + $0xbc] sm:$0xff]
    %v73 = vld [vmem:[#allocation2 + $0xc4] sm:$0xf]
    %v74 = vld [vmem:[#allocation2 + $0xc8] sm:$0xff]
    %v75 = vld [vmem:[#allocation2 + $0xd0] sm:$0xff]
    %v76 = vld [vmem:[#allocation2 + $0xd8] sm:$0xf]
    %v77 = vld [vmem:[#allocation2 + $0xdc] sm:$0xff]
    %v78 = vld [vmem:[#allocation2 + $0xe4] sm:$0xff]
    %v79 = vld [vmem:[#allocation2 + $0xec] sm:$0xf]
    %v80 = vld [vmem:[#allocation2 + $0xf0] sm:$0xff]
    %v81 = vld [vmem:[#allocation2 + $0xf8] sm:$0xff]
    %v82 = vld [vmem:[#allocation2 + $0x100] sm:$0xf]
    %v83 = vld [vmem:[#allocation2 + $0x104] sm:$0xff]
    %v84 = vld [vmem:[#allocation2 + $0x10c] sm:$0xff]
    %v85 = vld [vmem:[#allocation2 + $0x114] sm:$0xf]
    %v86 = vld [vmem:[#allocation2 + $0x118] sm:$0xff]
    %v87 = vld [vmem:[#allocation2 + $0x120] sm:$0xff]
    %v88 = vld [vmem:[#allocation2 + $0x128] sm:$0xf]
    %v89 = vld [vmem:[#allocation2 + $0x12c] sm:$0xff]
    %v90 = vld [vmem:[#allocation2 + $0x134] sm:$0xff]
    %v91 = vld [vmem:[#allocation2 + $0x13c] sm:$0xf]
    %v92 = vld [vmem:[#allocation5] sm:$0xf]
    %v93 = vld [vmem:[#allocation5 + $0x4] sm:$0xf]
    %v94 = vld [vmem:[#allocation5 + $0x8] sm:$0xf]
    %v95 = vld [vmem:[#allocation5 + $0xc] sm:$0xf]
    %v96 = vld [vmem:[#allocation5 + $0x10] sm:$0xf]
    %v97 = vld [vmem:[#allocation5 + $0x14] sm:$0xf]
    %v98 = vld [vmem:[#allocation5 + $0x18] sm:$0xf]
    %v99 = vld [vmem:[#allocation5 + $0x1c] sm:$0xf]
    %v100 = vld [vmem:[#allocation5 + $0x20] sm:$0xf]
    %v101 = vld [vmem:[#allocation5 + $0x24] sm:$0xf]
    %v102 = vld [vmem:[#allocation5 + $0x28] sm:$0xf]
    %v103 = vld [vmem:[#allocation5 + $0x2c] sm:$0xf]
    %v104 = vld [vmem:[#allocation5 + $0x30] sm:$0xf]
    %v105 = vld [vmem:[#allocation5 + $0x34] sm:$0xf]
    %v106 = vld [vmem:[#allocation5 + $0x38] sm:$0xf]
    %v107 = vld [vmem:[#allocation5 + $0x3c] sm:$0xf]
    %v108 = vld [vmem:[#allocation5 + $0x40] sm:$0xf]
    %v109 = vld [vmem:[#allocation5 + $0x44] sm:$0xf]
    %v110 = vld [vmem:[#allocation5 + $0x48] sm:$0xf]
    %v111 = vld [vmem:[#allocation5 + $0x4c] sm:$0xf]
    %v112 = vld [vmem:[#allocation5 + $0x50] sm:$0xf]
    %v113 = vld [vmem:[#allocation5 + $0x54] sm:$0xf]
    %v114 = vld [vmem:[#allocation5 + $0x58] sm:$0xf]
    %v115 = vld [vmem:[#allocation5 + $0x5c] sm:$0xf]
    %v116 = vld [vmem:[#allocation5 + $0x60] sm:$0xf]
    %v117 = vld [vmem:[#allocation5 + $0x64] sm:$0xf]
    %v118 = vld [vmem:[#allocation5 + $0x68] sm:$0xf]
    %v119 = vld [vmem:[#allocation5 + $0x6c] sm:$0xf]
    %v120 = vld [vmem:[#allocation5 + $0x70] sm:$0xf]
    %v121 = vld [vmem:[#allocation5 + $0x74] sm:$0xf]
    %v122 = vld [vmem:[#allocation5 + $0x78] sm:$0xf]
    %v123 = vld [vmem:[#allocation5 + $0x7c] sm:$0xf]
    %v124 = vld [vmem:[#allocation5 + $0x80] sm:$0xf]
    %v125 = vld [vmem:[#allocation5 + $0x84] sm:$0xf]
    %v126 = vld [vmem:[#allocation5 + $0x88] sm:$0xf]
    %v127 = vld [vmem:[#allocation5 + $0x8c] sm:$0xf]
    %v128 = vld [vmem:[#allocation5 + $0x90] sm:$0xf]
    %v129 = vld [vmem:[#allocation5 + $0x94] sm:$0xf]
    %v130 = vld [vmem:[#allocation5 + $0x98] sm:$0xf]
    %v131 = vld [vmem:[#allocation5 + $0x9c] sm:$0xf]
    %v132 = vld [vmem:[#allocation5 + $0xa0] sm:$0xf]
    %v133 = vld [vmem:[#allocation5 + $0xa4] sm:$0xf]
    %v134 = vld [vmem:[#allocation5 + $0xa8] sm:$0xf]
    %v135 = vld [vmem:[#allocation5 + $0xac] sm:$0xf]
    %v136 = vld [vmem:[#allocation5 + $0xb0] sm:$0xf]
    %v137 = vld [vmem:[#allocation5 + $0xb4] sm:$0xf]
    %v138 = vld [vmem:[#allocation5 + $0xb8] sm:$0xf]
    %v139 = vld [vmem:[#allocation5 + $0xbc] sm:$0xf]
    %v140 = vld [vmem:[#allocation5 + $0xc0] sm:$0xf]
    %v141 = vld [vmem:[#allocation5 + $0xc4] sm:$0xf]
    %v142 = vld [vmem:[#allocation5 + $0xc8] sm:$0xf]
    %v143 = vld [vmem:[#allocation5 + $0xcc] sm:$0xf]
    %v144 = vld [vmem:[#allocation5 + $0xd0] sm:$0xf]
    %v145 = vld [vmem:[#allocation5 + $0xd4] sm:$0xf]
    %v146 = vld [vmem:[#allocation5 + $0xd8] sm:$0xf]
    %v147 = vld [vmem:[#allocation5 + $0xdc] sm:$0xf]
    %v148 = vld [vmem:[#allocation5 + $0xe0] sm:$0xf]
    %v149 = vld [vmem:[#allocation5 + $0xe4] sm:$0xf]
    %v150 = vld [vmem:[#allocation5 + $0xe8] sm:$0xf]
    %v151 = vld [vmem:[#allocation5 + $0xec] sm:$0xf]
    %v152 = vld [vmem:[#allocation5 + $0xf0] sm:$0xf]
    %v153 = vld [vmem:[#allocation5 + $0xf4] sm:$0xf]
    %v154 = vld [vmem:[#allocation5 + $0xf8] sm:$0xf]
    %v155 = vld [vmem:[#allocation5 + $0xfc] sm:$0xf]
    %v156 = vld [vmem:[#allocation5 + $0x100] sm:$0xf]
    %v157 = vld [vmem:[#allocation5 + $0x104] sm:$0xf]
    %v158 = vld [vmem:[#allocation5 + $0x108] sm:$0xf]
    %v159 = vld [vmem:[#allocation5 + $0x10c] sm:$0xf]
    %v160 = vld [vmem:[#allocation5 + $0x110] sm:$0xf]
    %v161 = vld [vmem:[#allocation5 + $0x114] sm:$0xf]
    %v162 = vld [vmem:[#allocation5 + $0x118] sm:$0xf]
    %v163 = vld [vmem:[#allocation5 + $0x11c] sm:$0xf]
    %v164 = vld [vmem:[#allocation5 + $0x120] sm:$0xf]
    %v165 = vld [vmem:[#allocation5 + $0x124] sm:$0xf]
    %v166 = vld [vmem:[#allocation5 + $0x128] sm:$0xf]
    %v167 = vld [vmem:[#allocation5 + $0x12c] sm:$0xf]
    %v168 = vld [vmem:[#allocation5 + $0x130] sm:$0xf]
    %v169 = vld [vmem:[#allocation5 + $0x134] sm:$0xf]
    %v170 = vld [vmem:[#allocation5 + $0x138] sm:$0xf]
    %v171 = vld [vmem:[#allocation5 + $0x13c] sm:$0xf]
    %v220 = vunpack.c.l.b16 %v44
    %v221 = vunpack.c.h.b16 %v44
    %v222 = vunpack.c.l.b16 %v45
    %v223 = vunpack.c.h.b16 %v45
    %v224 = vunpack.c.l.b16 %v46
    %v225 = vunpack.c.l.b16 %v47
    %v226 = vunpack.c.h.b16 %v47
    %v227 = vunpack.c.l.b16 %v48
    %v228 = vunpack.c.h.b16 %v48
    %v229 = vunpack.c.l.b16 %v49
    %v230 = vunpack.c.l.b16 %v50
    %v231 = vunpack.c.h.b16 %v50
    %v232 = vunpack.c.l.b16 %v51
    %v233 = vunpack.c.h.b16 %v51
    %v234 = vunpack.c.l.b16 %v52
    %v235 = vunpack.c.l.b16 %v53
    %v236 = vunpack.c.h.b16 %v53
    %v237 = vunpack.c.l.b16 %v54
    %v238 = vunpack.c.h.b16 %v54
    %v239 = vunpack.c.l.b16 %v55
    %v240 = vunpack.c.l.b16 %v56
    %v241 = vunpack.c.h.b16 %v56
    %v242 = vunpack.c.l.b16 %v57
    %v243 = vunpack.c.h.b16 %v57
    %v244 = vunpack.c.l.b16 %v58
    %v245 = vunpack.c.l.b16 %v59
    %v246 = vunpack.c.h.b16 %v59
    %v247 = vunpack.c.l.b16 %v60
    %v248 = vunpack.c.h.b16 %v60
    %v249 = vunpack.c.l.b16 %v61
    %v250 = vunpack.c.l.b16 %v62
    %v251 = vunpack.c.h.b16 %v62
    %v252 = vunpack.c.l.b16 %v63
    %v253 = vunpack.c.h.b16 %v63
    %v254 = vunpack.c.l.b16 %v64
    %v255 = vunpack.c.l.b16 %v65
    %v256 = vunpack.c.h.b16 %v65
    %v257 = vunpack.c.l.b16 %v66
    %v258 = vunpack.c.h.b16 %v66
    %v259 = vunpack.c.l.b16 %v67
    %v260 = vunpack.c.l.b16 %v68
    %v261 = vunpack.c.h.b16 %v68
    %v262 = vunpack.c.l.b16 %v69
    %v263 = vunpack.c.h.b16 %v69
    %v264 = vunpack.c.l.b16 %v70
    %v265 = vunpack.c.l.b16 %v71
    %v266 = vunpack.c.h.b16 %v71
    %v267 = vunpack.c.l.b16 %v72
    %v268 = vunpack.c.h.b16 %v72
    %v269 = vunpack.c.l.b16 %v73
    %v270 = vunpack.c.l.b16 %v74
    %v271 = vunpack.c.h.b16 %v74
    %v272 = vunpack.c.l.b16 %v75
    %v273 = vunpack.c.h.b16 %v75
    %v274 = vunpack.c.l.b16 %v76
    %v275 = vunpack.c.l.b16 %v77
    %v276 = vunpack.c.h.b16 %v77
    %v277 = vunpack.c.l.b16 %v78
    %v278 = vunpack.c.h.b16 %v78
    %v279 = vunpack.c.l.b16 %v79
    %v280 = vunpack.c.l.b16 %v80
    %v281 = vunpack.c.h.b16 %v80
    %v282 = vunpack.c.l.b16 %v81
    %v283 = vunpack.c.h.b16 %v81
    %v284 = vunpack.c.l.b16 %v82
    %v285 = vunpack.c.l.b16 %v83
    %v286 = vunpack.c.h.b16 %v83
    %v287 = vunpack.c.l.b16 %v84
    %v288 = vunpack.c.h.b16 %v84
    %v289 = vunpack.c.l.b16 %v85
    %v290 = vunpack.c.l.b16 %v86
    %v291 = vunpack.c.h.b16 %v86
    %v292 = vunpack.c.l.b16 %v87
    %v293 = vunpack.c.h.b16 %v87
    %v294 = vunpack.c.l.b16 %v88
    %v295 = vunpack.c.l.b16 %v89
    %v296 = vunpack.c.h.b16 %v89
    %v297 = vunpack.c.l.b16 %v90
    %v298 = vunpack.c.h.b16 %v90
    %v299 = vunpack.c.l.b16 %v91
    %v300 = vpack.c.b16 %v225, %v220
    %v301 = vpack.c.b16 %v226, %v221
    %v302 = vpack.c.b16 %v227, %v222
    %v303 = vpack.c.b16 %v228, %v223
    %v304 = vpack.c.b16 %v229, %v224
    %v305 = vpack.c.b16 %v235, %v230
    %v306 = vpack.c.b16 %v236, %v231
    %v307 = vpack.c.b16 %v237, %v232
    %v308 = vpack.c.b16 %v238, %v233
    %v309 = vpack.c.b16 %v239, %v234
    %v310 = vpack.c.b16 %v245, %v240
    %v311 = vpack.c.b16 %v246, %v241
    %v312 = vpack.c.b16 %v247, %v242
    %v313 = vpack.c.b16 %v248, %v243
    %v314 = vpack.c.b16 %v249, %v244
    %v315 = vpack.c.b16 %v255, %v250
    %v316 = vpack.c.b16 %v256, %v251
    %v317 = vpack.c.b16 %v257, %v252
    %v318 = vpack.c.b16 %v258, %v253
    %v319 = vpack.c.b16 %v259, %v254
    %v320 = vpack.c.b16 %v265, %v260
    %v321 = vpack.c.b16 %v266, %v261
    %v322 = vpack.c.b16 %v267, %v262
    %v323 = vpack.c.b16 %v268, %v263
    %v324 = vpack.c.b16 %v269, %v264
    %v325 = vpack.c.b16 %v275, %v270
    %v326 = vpack.c.b16 %v276, %v271
    %v327 = vpack.c.b16 %v277, %v272
    %v328 = vpack.c.b16 %v278, %v273
    %v329 = vpack.c.b16 %v279, %v274
    %v330 = vpack.c.b16 %v285, %v280
    %v331 = vpack.c.b16 %v286, %v281
    %v332 = vpack.c.b16 %v287, %v282
    %v333 = vpack.c.b16 %v288, %v283
    %v334 = vpack.c.b16 %v289, %v284
    %v335 = vpack.c.b16 %v295, %v290
    %v336 = vpack.c.b16 %v296, %v291
    %v337 = vpack.c.b16 %v297, %v292
    %v338 = vpack.c.b16 %v298, %v293
    %v339 = vpack.c.b16 %v299, %v294
    %v460 = vunpack.c.l.b16 %v92
    %v461 = vunpack.c.l.b16 %v93
    %v462 = vunpack.c.l.b16 %v94
    %v463 = vunpack.c.l.b16 %v95
    %v464 = vunpack.c.l.b16 %v96
    %v465 = vunpack.c.l.b16 %v97
    %v466 = vunpack.c.l.b16 %v98
    %v467 = vunpack.c.l.b16 %v99
    %v468 = vunpack.c.l.b16 %v100
    %v469 = vunpack.c.l.b16 %v101
    %v470 = vunpack.c.l.b16 %v102
    %v471 = vunpack.c.l.b16 %v103
    %v472 = vunpack.c.l.b16 %v104
    %v473 = vunpack.c.l.b16 %v105
    %v474 = vunpack.c.l.b16 %v106
    %v475 = vunpack.c.l.b16 %v107
    %v476 = vunpack.c.l.b16 %v108
    %v477 = vunpack.c.l.b16 %v109
    %v478 = vunpack.c.l.b16 %v110
    %v479 = vunpack.c.l.b16 %v111
    %v480 = vunpack.c.l.b16 %v112
    %v481 = vunpack.c.l.b16 %v113
    %v482 = vunpack.c.l.b16 %v114
    %v483 = vunpack.c.l.b16 %v115
    %v484 = vunpack.c.l.b16 %v116
    %v485 = vunpack.c.l.b16 %v117
    %v486 = vunpack.c.l.b16 %v118
    %v487 = vunpack.c.l.b16 %v119
    %v488 = vunpack.c.l.b16 %v120
    %v489 = vunpack.c.l.b16 %v121
    %v490 = vunpack.c.l.b16 %v122
    %v491 = vunpack.c.l.b16 %v123
    %v492 = vunpack.c.l.b16 %v124
    %v493 = vunpack.c.l.b16 %v125
    %v494 = vunpack.c.l.b16 %v126
    %v495 = vunpack.c.l.b16 %v127
    %v496 = vunpack.c.l.b16 %v128
    %v497 = vunpack.c.l.b16 %v129
    %v498 = vunpack.c.l.b16 %v130
    %v499 = vunpack.c.l.b16 %v131
    %v500 = vunpack.c.l.b16 %v132
    %v501 = vunpack.c.l.b16 %v133
    %v502 = vunpack.c.l.b16 %v134
    %v503 = vunpack.c.l.b16 %v135
    %v504 = vunpack.c.l.b16 %v136
    %v505 = vunpack.c.l.b16 %v137
    %v506 = vunpack.c.l.b16 %v138
    %v507 = vunpack.c.l.b16 %v139
    %v508 = vunpack.c.l.b16 %v140
    %v509 = vunpack.c.l.b16 %v141
    %v510 = vunpack.c.l.b16 %v142
    %v511 = vunpack.c.l.b16 %v143
    %v512 = vunpack.c.l.b16 %v144
    %v513 = vunpack.c.l.b16 %v145
    %v514 = vunpack.c.l.b16 %v146
    %v515 = vunpack.c.l.b16 %v147
    %v516 = vunpack.c.l.b16 %v148
    %v517 = vunpack.c.l.b16 %v149
    %v518 = vunpack.c.l.b16 %v150
    %v519 = vunpack.c.l.b16 %v151
    %v520 = vunpack.c.l.b16 %v152
    %v521 = vunpack.c.l.b16 %v153
    %v522 = vunpack.c.l.b16 %v154
    %v523 = vunpack.c.l.b16 %v155
    %v524 = vunpack.c.l.b16 %v156
    %v525 = vunpack.c.l.b16 %v157
    %v526 = vunpack.c.l.b16 %v158
    %v527 = vunpack.c.l.b16 %v159
    %v528 = vunpack.c.l.b16 %v160
    %v529 = vunpack.c.l.b16 %v161
    %v530 = vunpack.c.l.b16 %v162
    %v531 = vunpack.c.l.b16 %v163
    %v532 = vunpack.c.l.b16 %v164
    %v533 = vunpack.c.l.b16 %v165
    %v534 = vunpack.c.l.b16 %v166
    %v535 = vunpack.c.l.b16 %v167
    %v536 = vunpack.c.l.b16 %v168
    %v537 = vunpack.c.l.b16 %v169
    %v538 = vunpack.c.l.b16 %v170
    %v539 = vunpack.c.l.b16 %v171
    %v540 = vpack.c.b16 %v461, %v460
    %v541 = vpack.c.b16 %v463, %v462
    %v542 = vpack.c.b16 %v465, %v464
    %v543 = vpack.c.b16 %v467, %v466
    %v544 = vpack.c.b16 %v469, %v468
    %v545 = vpack.c.b16 %v471, %v470
    %v546 = vpack.c.b16 %v473, %v472
    %v547 = vpack.c.b16 %v475, %v474
    %v548 = vpack.c.b16 %v477, %v476
    %v549 = vpack.c.b16 %v479, %v478
    %v550 = vpack.c.b16 %v481, %v480
    %v551 = vpack.c.b16 %v483, %v482
    %v552 = vpack.c.b16 %v485, %v484
    %v553 = vpack.c.b16 %v487, %v486
    %v554 = vpack.c.b16 %v489, %v488
    %v555 = vpack.c.b16 %v491, %v490
    %v556 = vpack.c.b16 %v493, %v492
    %v557 = vpack.c.b16 %v495, %v494
    %v558 = vpack.c.b16 %v497, %v496
    %v559 = vpack.c.b16 %v499, %v498
    %v560 = vpack.c.b16 %v501, %v500
    %v561 = vpack.c.b16 %v503, %v502
    %v562 = vpack.c.b16 %v505, %v504
    %v563 = vpack.c.b16 %v507, %v506
    %v564 = vpack.c.b16 %v509, %v508
    %v565 = vpack.c.b16 %v511, %v510
    %v566 = vpack.c.b16 %v513, %v512
    %v567 = vpack.c.b16 %v515, %v514
    %v568 = vpack.c.b16 %v517, %v516
    %v569 = vpack.c.b16 %v519, %v518
    %v570 = vpack.c.b16 %v521, %v520
    %v571 = vpack.c.b16 %v523, %v522
    %v572 = vpack.c.b16 %v525, %v524
    %v573 = vpack.c.b16 %v527, %v526
    %v574 = vpack.c.b16 %v529, %v528
    %v575 = vpack.c.b16 %v531, %v530
    %v576 = vpack.c.b16 %v533, %v532
    %v577 = vpack.c.b16 %v535, %v534
    %v578 = vpack.c.b16 %v537, %v536
    %v579 = vpack.c.b16 %v539, %v538
    %620 = vmatprep.subr.bf16.mxu0 0
    %621 = vmatpush1.bf16.msra.mxu0 %v540
    %622 = vmatprep.subr.bf16.mxu0 0
    %623 = vmatpush1.bf16.msra.mxu0 %v541
    %624 = vmatprep.subr.bf16.mxu0 0
    %625 = vmatpush1.bf16.msra.mxu0 %v542
    %626 = vmatprep.subr.bf16.mxu0 0
    %627 = vmatpush1.bf16.msra.mxu0 %v543
    %628 = vmatprep.subr.bf16.mxu0 0
    %629 = vmatpush1.bf16.msra.mxu0 %v544
    %630 = vmatprep.subr.bf16.mxu0 0
    %631 = vmatpush1.bf16.msra.mxu0 %v545
    %632 = vmatprep.subr.bf16.mxu0 0
    %633 = vmatpush1.bf16.msra.mxu0 %v546
    %634 = vmatprep.subr.bf16.mxu0 0
    %635 = vmatpush1.bf16.msra.mxu0 %v547
    %636 = vmatprep.subr.bf16.mxu0 0
    %637 = vmatpush1.bf16.msra.mxu0 %v548
    %638 = vmatprep.subr.bf16.mxu0 0
    %639 = vmatpush1.bf16.msra.mxu0 %v549
    %640 = vmatprep.subr.bf16.mxu0 0
    %641 = vmatpush1.bf16.msra.mxu0 %v550
    %642 = vmatprep.subr.bf16.mxu0 0
    %643 = vmatpush1.bf16.msra.mxu0 %v551
    %644 = vmatprep.subr.bf16.mxu0 0
    %645 = vmatpush1.bf16.msra.mxu0 %v552
    %646 = vmatprep.subr.bf16.mxu0 0
    %647 = vmatpush1.bf16.msra.mxu0 %v553
    %648 = vmatprep.subr.bf16.mxu0 0
    %649 = vmatpush1.bf16.msra.mxu0 %v554
    %650 = vmatprep.subr.bf16.mxu0 0
    %651 = vmatpush1.bf16.msra.mxu0 %v555
    %652 = vmatprep.mubr.bf16.mxu0 %v301
    %653 = vmatmul.mubr.bf16.gmra.mrb[0].mxu0 %v300
    %v654 = vpop.f32.mrb[0].mxu0
    %v655 = vadd.f32 0.0, %v654
    %v656 = vpop.f32.mrb[0].mxu0
    %v657 = vpop.f32.mrb[0].mxu0
    %v658 = vadd.f32 0.0, %v657
    %v659 = vpop.f32.mrb[0].mxu0
    %660 = vmatprep.mubr.bf16.mxu0 %v306
    %661 = vmatmul.mubr.bf16.gmra.mrb[0].mxu0 %v305
    %v662 = vpop.f32.mrb[0].mxu0
    %v663 = vadd.f32 0.0, %v662
    %v664 = vpop.f32.mrb[0].mxu0
    %v665 = vpop.f32.mrb[0].mxu0
    %v666 = vadd.f32 0.0, %v665
    %v667 = vpop.f32.mrb[0].mxu0
    %668 = vmatprep.mubr.bf16.mxu0 %v311
    %669 = vmatmul.mubr.bf16.gmra.mrb[0].mxu0 %v310
    %v670 = vpop.f32.mrb[0].mxu0
    %v671 = vadd.f32 0.0, %v670
    %v672 = vpop.f32.mrb[0].mxu0
    %v673 = vpop.f32.mrb[0].mxu0
    %v674 = vadd.f32 0.0, %v673
    %v675 = vpop.f32.mrb[0].mxu0
    %676 = vmatprep.mubr.bf16.mxu0 %v316
    %677 = vmatmul.mubr.bf16.gmra.mrb[0].mxu0 %v315
    %v678 = vpop.f32.mrb[0].mxu0
    %v679 = vadd.f32 0.0, %v678
    %v680 = vpop.f32.mrb[0].mxu0
    %v681 = vpop.f32.mrb[0].mxu0
    %v682 = vadd.f32 0.0, %v681
    %v683 = vpop.f32.mrb[0].mxu0
    %684 = vmatprep.mubr.bf16.mxu0 %v321
    %685 = vmatmul.mubr.bf16.gmra.mrb[0].mxu0 %v320
    %v686 = vpop.f32.mrb[0].mxu0
    %v687 = vadd.f32 0.0, %v686
    %v688 = vpop.f32.mrb[0].mxu0
    %v689 = vpop.f32.mrb[0].mxu0
    %v690 = vadd.f32 0.0, %v689
    %v691 = vpop.f32.mrb[0].mxu0
    %692 = vmatprep.mubr.bf16.mxu0 %v326
    %693 = vmatmul.mubr.bf16.gmra.mrb[0].mxu0 %v325
    %v694 = vpop.f32.mrb[0].mxu0
    %v695 = vadd.f32 0.0, %v694
    %v696 = vpop.f32.mrb[0].mxu0
    %v697 = vpop.f32.mrb[0].mxu0
    %v698 = vadd.f32 0.0, %v697
    %v699 = vpop.f32.mrb[0].mxu0
    %700 = vmatprep.mubr.bf16.mxu0 %v331
    %701 = vmatmul.mubr.bf16.gmra.mrb[0].mxu0 %v330
    %v702 = vpop.f32.mrb[0].mxu0
    %v703 = vadd.f32 0.0, %v702
    %v704 = vpop.f32.mrb[0].mxu0
    %v705 = vpop.f32.mrb[0].mxu0
    %v706 = vadd.f32 0.0, %v705
    %v707 = vpop.f32.mrb[0].mxu0
    %708 = vmatprep.mubr.bf16.mxu0 %v336
    %709 = vmatmul.mubr.bf16.gmra.mrb[0].mxu0 %v335
    %v710 = vpop.f32.mrb[0].mxu0
    %v711 = vadd.f32 0.0, %v710
    %v712 = vpop.f32.mrb[0].mxu0
    %v713 = vpop.f32.mrb[0].mxu0
    %v714 = vadd.f32 0.0, %v713
    %v715 = vpop.f32.mrb[0].mxu0
    %716 = vdwg.mxu0
    %717 = vmatprep.subr.bf16.mxu0 0
    %718 = vmatpush1.bf16.msra.mxu0 %v556
    %719 = vmatprep.subr.bf16.mxu0 0
    %720 = vmatpush1.bf16.msra.mxu0 %v557
    %721 = vmatprep.subr.bf16.mxu0 0
    %722 = vmatpush1.bf16.msra.mxu0 %v558
    %723 = vmatprep.subr.bf16.mxu0 0
    %724 = vmatpush1.bf16.msra.mxu0 %v559
    %725 = vmatprep.subr.bf16.mxu0 0
    %726 = vmatpush1.bf16.msra.mxu0 %v560
    %727 = vmatprep.subr.bf16.mxu0 0
    %728 = vmatpush1.bf16.msra.mxu0 %v561
    %729 = vmatprep.subr.bf16.mxu0 0
    %730 = vmatpush1.bf16.msra.mxu0 %v562
    %731 = vmatprep.subr.bf16.mxu0 0
    %732 = vmatpush1.bf16.msra.mxu0 %v563
    %733 = vmatprep.subr.bf16.mxu0 0
    %734 = vmatpush1.bf16.msra.mxu0 %v564
    %735 = vmatprep.subr.bf16.mxu0 0
    %736 = vmatpush1.bf16.msra.mxu0 %v565
    %737 = vmatprep.subr.bf16.mxu0 0
    %738 = vmatpush1.bf16.msra.mxu0 %v566
    %739 = vmatprep.subr.bf16.mxu0 0
    %740 = vmatpush1.bf16.msra.mxu0 %v567
    %741 = vmatprep.subr.bf16.mxu0 0
    %742 = vmatpush1.bf16.msra.mxu0 %v568
    %743 = vmatprep.subr.bf16.mxu0 0
    %744 = vmatpush1.bf16.msra.mxu0 %v569
    %745 = vmatprep.subr.bf16.mxu0 0
    %746 = vmatpush1.bf16.msra.mxu0 %v570
    %747 = vmatprep.subr.bf16.mxu0 0
    %748 = vmatpush1.bf16.msra.mxu0 %v571
    %749 = vmatprep.mubr.bf16.mxu0 %v303
    %750 = vmatmul.mubr.bf16.gmra.mrb[0].mxu0 %v302
    %v751 = vpop.f32.mrb[0].mxu0
    %v752 = vadd.f32 %v655, %v751
    %v753 = vpop.f32.mrb[0].mxu0
    %v754 = vpop.f32.mrb[0].mxu0
    %v755 = vadd.f32 %v658, %v754
    %v756 = vpop.f32.mrb[0].mxu0
    %757 = vmatprep.mubr.bf16.mxu0 %v308
    %758 = vmatmul.mubr.bf16.gmra.mrb[0].mxu0 %v307
    %v759 = vpop.f32.mrb[0].mxu0
    %v760 = vadd.f32 %v663, %v759
    %v761 = vpop.f32.mrb[0].mxu0
    %v762 = vpop.f32.mrb[0].mxu0
    %v763 = vadd.f32 %v666, %v762
    %v764 = vpop.f32.mrb[0].mxu0
    %765 = vmatprep.mubr.bf16.mxu0 %v313
    %766 = vmatmul.mubr.bf16.gmra.mrb[0].mxu0 %v312
    %v767 = vpop.f32.mrb[0].mxu0
    %v768 = vadd.f32 %v671, %v767
    %v769 = vpop.f32.mrb[0].mxu0
    %v770 = vpop.f32.mrb[0].mxu0
    %v771 = vadd.f32 %v674, %v770
    %v772 = vpop.f32.mrb[0].mxu0
    %773 = vmatprep.mubr.bf16.mxu0 %v318
    %774 = vmatmul.mubr.bf16.gmra.mrb[0].mxu0 %v317
    %v775 = vpop.f32.mrb[0].mxu0
    %v776 = vadd.f32 %v679, %v775
    %v777 = vpop.f32.mrb[0].mxu0
    %v778 = vpop.f32.mrb[0].mxu0
    %v779 = vadd.f32 %v682, %v778
    %v780 = vpop.f32.mrb[0].mxu0
    %781 = vmatprep.mubr.bf16.mxu0 %v323
    %782 = vmatmul.mubr.bf16.gmra.mrb[0].mxu0 %v322
    %v783 = vpop.f32.mrb[0].mxu0
    %v784 = vadd.f32 %v687, %v783
    %v785 = vpop.f32.mrb[0].mxu0
    %v786 = vpop.f32.mrb[0].mxu0
    %v787 = vadd.f32 %v690, %v786
    %v788 = vpop.f32.mrb[0].mxu0
    %789 = vmatprep.mubr.bf16.mxu0 %v328
    %790 = vmatmul.mubr.bf16.gmra.mrb[0].mxu0 %v327
    %v791 = vpop.f32.mrb[0].mxu0
    %v792 = vadd.f32 %v695, %v791
    %v793 = vpop.f32.mrb[0].mxu0
    %v794 = vpop.f32.mrb[0].mxu0
    %v795 = vadd.f32 %v698, %v794
    %v796 = vpop.f32.mrb[0].mxu0
    %797 = vmatprep.mubr.bf16.mxu0 %v333
    %798 = vmatmul.mubr.bf16.gmra.mrb[0].mxu0 %v332
    %v799 = vpop.f32.mrb[0].mxu0
    %v800 = vadd.f32 %v703, %v799
    %v801 = vpop.f32.mrb[0].mxu0
    %v802 = vpop.f32.mrb[0].mxu0
    %v803 = vadd.f32 %v706, %v802
    %v804 = vpop.f32.mrb[0].mxu0
    %805 = vmatprep.mubr.bf16.mxu0 %v338
    %806 = vmatmul.mubr.bf16.gmra.mrb[0].mxu0 %v337
    %v807 = vpop.f32.mrb[0].mxu0
    %v808 = vadd.f32 %v711, %v807
    %v809 = vpop.f32.mrb[0].mxu0
    %v810 = vpop.f32.mrb[0].mxu0
    %v811 = vadd.f32 %v714, %v810
    %v812 = vpop.f32.mrb[0].mxu0
    %813 = vdwg.mxu0
    %814 = vmatprep.subr.bf16.mxu0 0
    %815 = vmatpush1.bf16.msra.mxu0 %v572
    %816 = vmatprep.subr.bf16.mxu0 0
    %817 = vmatpush1.bf16.msra.mxu0 %v573
    %818 = vmatprep.subr.bf16.mxu0 0
    %819 = vmatpush1.bf16.msra.mxu0 %v574
    %820 = vmatprep.subr.bf16.mxu0 0
    %821 = vmatpush1.bf16.msra.mxu0 %v575
    %822 = vmatprep.subr.bf16.mxu0 0
    %823 = vmatpush1.bf16.msra.mxu0 %v576
    %824 = vmatprep.subr.bf16.mxu0 0
    %825 = vmatpush1.bf16.msra.mxu0 %v577
    %826 = vmatprep.subr.bf16.mxu0 0
    %827 = vmatpush1.bf16.msra.mxu0 %v578
    %828 = vmatprep.subr.bf16.mxu0 0
    %829 = vmatpush1.bf16.msra.mxu0 %v579
    %830 = vmatprep.subr.bf16.mxu0 0
    %831 = vmatpush1.bf16.msra.mxu0 0
    %832 = vmatprep.subr.bf16.mxu0 0
    %833 = vmatpush1.bf16.msra.mxu0 0
    %834 = vmatprep.subr.bf16.mxu0 0
    %835 = vmatpush1.bf16.msra.mxu0 0
    %836 = vmatprep.subr.bf16.mxu0 0
    %837 = vmatpush1.bf16.msra.mxu0 0
    %838 = vmatprep.subr.bf16.mxu0 0
    %839 = vmatpush1.bf16.msra.mxu0 0
    %840 = vmatprep.subr.bf16.mxu0 0
    %841 = vmatpush1.bf16.msra.mxu0 0
    %842 = vmatprep.subr.bf16.mxu0 0
    %843 = vmatpush1.bf16.msra.mxu0 0
    %844 = vmatprep.subr.bf16.mxu0 0
    %845 = vmatpush1.bf16.msra.mxu0 0
    %846 = vmatprep.mubr.bf16.mxu0 0
    %847 = vmatmul.mubr.bf16.gmra.mrb[0].mxu0 %v304
    %v848 = vpop.f32.mrb[0].mxu0
    %v849 = vadd.f32 %v752, %v848
    %v850 = vpop.f32.mrb[0].mxu0
    %v851 = vpop.f32.mrb[0].mxu0
    %v852 = vadd.f32 %v755, %v851
    %v853 = vpop.f32.mrb[0].mxu0
    %854 = vmatprep.mubr.bf16.mxu0 0
    %855 = vmatmul.mubr.bf16.gmra.mrb[0].mxu0 %v309
    %v856 = vpop.f32.mrb[0].mxu0
    %v857 = vadd.f32 %v760, %v856
    %v858 = vpop.f32.mrb[0].mxu0
    %v859 = vpop.f32.mrb[0].mxu0
    %v860 = vadd.f32 %v763, %v859
    %v861 = vpop.f32.mrb[0].mxu0
    %862 = vmatprep.mubr.bf16.mxu0 0
    %863 = vmatmul.mubr.bf16.gmra.mrb[0].mxu0 %v314
    %v864 = vpop.f32.mrb[0].mxu0
    %v865 = vadd.f32 %v768, %v864
    %v866 = vpop.f32.mrb[0].mxu0
    %v867 = vpop.f32.mrb[0].mxu0
    %v868 = vadd.f32 %v771, %v867
    %v869 = vpop.f32.mrb[0].mxu0
    %870 = vmatprep.mubr.bf16.mxu0 0
    %871 = vmatmul.mubr.bf16.gmra.mrb[0].mxu0 %v319
    %v872 = vpop.f32.mrb[0].mxu0
    %v873 = vadd.f32 %v776, %v872
    %v874 = vpop.f32.mrb[0].mxu0
    %v875 = vpop.f32.mrb[0].mxu0
    %v876 = vadd.f32 %v779, %v875
    %v877 = vpop.f32.mrb[0].mxu0
    %878 = vmatprep.mubr.bf16.mxu0 0
    %879 = vmatmul.mubr.bf16.gmra.mrb[0].mxu0 %v324
    %v880 = vpop.f32.mrb[0].mxu0
    %v881 = vadd.f32 %v784, %v880
    %v882 = vpop.f32.mrb[0].mxu0
    %v883 = vpop.f32.mrb[0].mxu0
    %v884 = vadd.f32 %v787, %v883
    %v885 = vpop.f32.mrb[0].mxu0
    %886 = vmatprep.mubr.bf16.mxu0 0
    %887 = vmatmul.mubr.bf16.gmra.mrb[0].mxu0 %v329
    %v888 = vpop.f32.mrb[0].mxu0
    %v889 = vadd.f32 %v792, %v888
    %v890 = vpop.f32.mrb[0].mxu0
    %v891 = vpop.f32.mrb[0].mxu0
    %v892 = vadd.f32 %v795, %v891
    %v893 = vpop.f32.mrb[0].mxu0
    %894 = vmatprep.mubr.bf16.mxu0 0
    %895 = vmatmul.mubr.bf16.gmra.mrb[0].mxu0 %v334
    %v896 = vpop.f32.mrb[0].mxu0
    %v897 = vadd.f32 %v800, %v896
    %v898 = vpop.f32.mrb[0].mxu0
    %v899 = vpop.f32.mrb[0].mxu0
    %v900 = vadd.f32 %v803, %v899
    %v901 = vpop.f32.mrb[0].mxu0
    %902 = vmatprep.mubr.bf16.mxu0 0
    %903 = vmatmul.mubr.bf16.gmra.mrb[0].mxu0 %v339
    %v904 = vpop.f32.mrb[0].mxu0
    %v905 = vadd.f32 %v808, %v904
    %v906 = vpop.f32.mrb[0].mxu0
    %v907 = vpop.f32.mrb[0].mxu0
    %v908 = vadd.f32 %v811, %v907
    %v909 = vpop.f32.mrb[0].mxu0
    %910 = vdwg.mxu0
    %v911 = vadd.f32 %v849, %v852
    %v912 = vadd.f32 %v911, %v857
    %v913 = vadd.f32 %v912, %v860
    %v914 = vadd.f32 %v913, %v865
    %v915 = vadd.f32 %v914, %v868
    %v916 = vadd.f32 %v915, %v873
    %v917 = vadd.f32 %v916, %v876
    %v918 = vadd.f32 %v917, %v881
    %v919 = vadd.f32 %v918, %v884
    %v920 = vadd.f32 %v919, %v889
    %v921 = vadd.f32 %v920, %v892
    %v922 = vadd.f32 %v921, %v897
    %v923 = vadd.f32 %v922, %v900
    %v924 = vadd.f32 %v923, %v905
    %v925 = vadd.f32 %v924, %v908
    %v926 = vrot.slane %v925, 4
    %v927 = vadd.f32 %v925, %v926
    %v928 = vrot.slane %v927, 2
    %v929 = vadd.f32 %v927, %v928
    %v930 = vrot.slane %v929, 1
    %v931 = vadd.f32 %v929, %v930
    %932 = vst [vmem:[#allocation8] sm:$0x1] %v931
    %v933 = vmul.f32 %v849, %v849
    %v934 = vmul.f32 %v852, %v852
    %v935 = vmul.f32 %v857, %v857
    %v936 = vmul.f32 %v860, %v860
    %v937 = vmul.f32 %v865, %v865
    %v938 = vmul.f32 %v868, %v868
    %v939 = vmul.f32 %v873, %v873
    %v940 = vmul.f32 %v876, %v876
    %v941 = vmul.f32 %v881, %v881
    %v942 = vmul.f32 %v884, %v884
    %v943 = vmul.f32 %v889, %v889
    %v944 = vmul.f32 %v892, %v892
    %v945 = vmul.f32 %v897, %v897
    %v946 = vmul.f32 %v900, %v900
    %v947 = vmul.f32 %v905, %v905
    %v948 = vmul.f32 %v908, %v908
    %v949 = vadd.f32 %v933, %v934
    %v950 = vadd.f32 %v949, %v935
    %v951 = vadd.f32 %v950, %v936
    %v952 = vadd.f32 %v951, %v937
    %v953 = vadd.f32 %v952, %v938
    %v954 = vadd.f32 %v953, %v939
    %v955 = vadd.f32 %v954, %v940
    %v956 = vadd.f32 %v955, %v941
    %v957 = vadd.f32 %v956, %v942
    %v958 = vadd.f32 %v957, %v943
    %v959 = vadd.f32 %v958, %v944
    %v960 = vadd.f32 %v959, %v945
    %v961 = vadd.f32 %v960, %v946
    %v962 = vadd.f32 %v961, %v947
    %v963 = vadd.f32 %v962, %v948
    %v964 = vrot.slane %v963, 4
    %v965 = vadd.f32 %v963, %v964
    %v966 = vrot.slane %v965, 2
    %v967 = vadd.f32 %v965, %v966
    %v968 = vrot.slane %v967, 1
    %v969 = vadd.f32 %v967, %v968
    %970 = vst [vmem:[#allocation8 + $0x1] sm:$0x1] %v969
    %v971 = vpack.c.bf16 %v852, %v849
    %v972 = vpack.c.bf16 %v860, %v857
    %v973 = vpack.c.bf16 %v868, %v865
    %v974 = vpack.c.bf16 %v876, %v873
    %v975 = vpack.c.bf16 %v884, %v881
    %v976 = vpack.c.bf16 %v892, %v889
    %v977 = vpack.c.bf16 %v900, %v897
    %v978 = vpack.c.bf16 %v908, %v905
    %v987 = vunpack.c.l.b16 %v971
    %v988 = vunpack.c.h.b16 %v971
    %v989 = vunpack.c.l.b16 %v972
    %v990 = vunpack.c.h.b16 %v972
    %v991 = vunpack.c.l.b16 %v973
    %v992 = vunpack.c.h.b16 %v973
    %v993 = vunpack.c.l.b16 %v974
    %v994 = vunpack.c.h.b16 %v974
    %v995 = vunpack.c.l.b16 %v975
    %v996 = vunpack.c.h.b16 %v975
    %v997 = vunpack.c.l.b16 %v976
    %v998 = vunpack.c.h.b16 %v976
    %v999 = vunpack.c.l.b16 %v977
    %v1000 = vunpack.c.h.b16 %v977
    %v1001 = vunpack.c.l.b16 %v978
    %v1002 = vunpack.c.h.b16 %v978
    %v1003 = vpack.c.b16 %v987, %v987
    %v1004 = vpack.c.b16 %v988, %v988
    %v1005 = vpack.c.b16 %v989, %v989
    %v1006 = vpack.c.b16 %v990, %v990
    %v1007 = vpack.c.b16 %v991, %v991
    %v1008 = vpack.c.b16 %v992, %v992
    %v1009 = vpack.c.b16 %v993, %v993
    %v1010 = vpack.c.b16 %v994, %v994
    %v1011 = vpack.c.b16 %v995, %v995
    %v1012 = vpack.c.b16 %v996, %v996
    %v1013 = vpack.c.b16 %v997, %v997
    %v1014 = vpack.c.b16 %v998, %v998
    %v1015 = vpack.c.b16 %v999, %v999
    %v1016 = vpack.c.b16 %v1000, %v1000
    %v1017 = vpack.c.b16 %v1001, %v1001
    %v1018 = vpack.c.b16 %v1002, %v1002
    %1035 = vst [vmem:[#allocation7] sm:$0xf] %v1003
    %1036 = vst [vmem:[#allocation7 + $0x4] sm:$0xf] %v1004
    %1037 = vst [vmem:[#allocation7 + $0x8] sm:$0xf] %v1005
    %1038 = vst [vmem:[#allocation7 + $0xc] sm:$0xf] %v1006
    %1039 = vst [vmem:[#allocation7 + $0x10] sm:$0xf] %v1007
    %1040 = vst [vmem:[#allocation7 + $0x14] sm:$0xf] %v1008
    %1041 = vst [vmem:[#allocation7 + $0x18] sm:$0xf] %v1009
    %1042 = vst [vmem:[#allocation7 + $0x1c] sm:$0xf] %v1010
    %1043 = vst [vmem:[#allocation7 + $0x20] sm:$0xf] %v1011
    %1044 = vst [vmem:[#allocation7 + $0x24] sm:$0xf] %v1012
    %1045 = vst [vmem:[#allocation7 + $0x28] sm:$0xf] %v1013
    %1046 = vst [vmem:[#allocation7 + $0x2c] sm:$0xf] %v1014
    %1047 = vst [vmem:[#allocation7 + $0x30] sm:$0xf] %v1015
    %1048 = vst [vmem:[#allocation7 + $0x34] sm:$0xf] %v1016
    %1049 = vst [vmem:[#allocation7 + $0x38] sm:$0xf] %v1017
    %1050 = vst [vmem:[#allocation7 + $0x3c] sm:$0xf] %v1018
    // Predicated region
    $region18: #{generator_forward.5} parent=1 // pred_check
      _
    $region19: #{generator_forward.5} parent=1 // pred_check_branch
      %1052 = sbr.rel (0) target = $region21
    $region20: #{generator_forward.5} parent=1 // pred_region
      %s1054 = ssub.s32 1024, 1024
      %1055 = vsyncadd [#allocation4], %s1054
      %s1056 = sshll.u32 [#allocation7], 4
      %s1057 = int_to_ptr.vmem [resolvable:$true] %s1056
      %1062 = dma.vmem_to_hbm [thread:$0]  %s1057, 1024, %s2, [#allocation4], 64, 64, 4
    $region21: #{generator_forward.5} parent=1 // pred_fallthru
      _
    // Predicated region
    $region22: #{generator_forward.5} parent=1 // pred_check
      _
    $region23: #{generator_forward.5} parent=1 // pred_check_branch
      %1064 = sbr.rel (0) target = $region25
    $region24: #{generator_forward.5} parent=1 // pred_region
      %s1066 = ssub.s32 128, 128
      %1067 = vsyncadd [#allocation9], %s1066
      %s1069 = sshll.u32 [#allocation8], 4
      %s1070 = int_to_ptr.vmem [resolvable:$true] %s1069
      %1072 = dma.vmem_to_hbm [thread:$0]  %s1070, 128, %s3, [#allocation9]
    $region25: #{generator_forward.5} parent=1 // pred_fallthru
      _
    // Predicated region
    $region26: #{generator_forward.5} parent=1 // pred_check
      _
    $region27: #{generator_forward.5} parent=1 // pred_check_branch
      %1074 = sbr.rel (0) target = $region29
    $region28: #{generator_forward.5} parent=1 // pred_region
      %1075 = dma.done [#allocation4], 1024
    $region29: #{generator_forward.5} parent=1 // pred_fallthru
      _
    // Predicated region
    $region30: #{generator_forward.5} parent=1 // pred_check
      _
    $region31: #{generator_forward.5} parent=1 // pred_check_branch
      %1077 = sbr.rel (0) target = $region33
    $region32: #{generator_forward.5} parent=1 // pred_region
      %1078 = dma.done [#allocation9], 128
    $region33: #{generator_forward.5} parent=1 // pred_fallthru
      _
    %1079 = vsyncpa [#allocation3], 1
    %1080 = vsyncpa [#allocation6], 1
    %1081 = vsyncpa [#allocation4], 1
    %1082 = vsyncpa [#allocation9], 1

// kernel: generator_forward.6
$region0: #{generator_forward.6}
  #allocation0 [shape = 'u32[]', space=smem, size = 0x4, offset = 0x4, fixed_abs, tag = 'smem constant byte address 0x4 - core index']
  #allocation1 [shape = 'u32[144,128]{1,0:T(1,128)}', space=vmem, size = 0x12000, scoped, tag = 'internal scratch']
  %s0 = inlined_call_operand.hbm [shape: bf16[512,384], index: 0, kind: input, shape index: {}]
  %s1 = inlined_call_operand.hbm [shape: bf16[384,128], index: 1, kind: input, shape index: {}]
  %s2 = inlined_call_operand.hbm [shape: bf16[512,128], index: 2, kind: output, shape index: {0}]
  %s3 = inlined_call_operand.hbm [shape: f32[16,128], index: 3, kind: output, shape index: {1}]
  %4 = xla_tuple %s2, %s3
  %s5 = sld [smem:[#allocation0]]
  $region57: #{generator_forward.6} parent=0
    _
  %s7 = ssub.s32 1, %s5
  %s8 = scalar_select 0, %s7, %s5
  $region1: #{generator_forward.6} parent=0
    #allocation2 [shape = 'u8[393216]{0}', space=vmem, size = 0x60000, scoped, tag = 'input window, operand 0']
    #allocation3 [shape = 's32[2]{0}', space=sflag, size = 0x8, scoped, tag = 'scoped memory for generator_forward.6']
    #allocation4 [shape = 's32[2]{0}', space=sflag, size = 0x8, scoped, tag = 'scoped memory for generator_forward.6']
    #allocation5 [shape = 'u8[98304]{0}', space=vmem, size = 0x18000, scoped, tag = 'input window, operand 1, single buffered']
    #allocation6 [shape = 's32[1]{0}', space=sflag, size = 0x4, scoped, tag = 'scoped memory for generator_forward.6']
    #allocation7 [shape = 'u8[131072]{0}', space=vmem, size = 0x20000, scoped, tag = 'output window, operand 0']
    #allocation8 [shape = 'u8[8192]{0}', space=vmem, size = 0x2000, scoped, tag = 'output window, operand 1']
    #allocation9 [shape = 's32[2]{0}', space=sflag, size = 0x8, scoped, tag = 'scoped memory for generator_forward.6']
    %9 = vsyncpa [#allocation3], 0
    %s10 = scalar_lea.sflag [#allocation3], 1
    %11 = vsyncpa %s10, 0
    %12 = vsyncpa [#allocation6], 0
    %13 = vsyncpa [#allocation4], 0
    %s14 = scalar_lea.sflag [#allocation4], 1
    %15 = vsyncpa %s14, 0
    %16 = vsyncpa [#allocation9], 0
    %s17 = scalar_lea.sflag [#allocation9], 1
    %18 = vsyncpa %s17, 0
    loop: start=0, step=1, limit=4
    $region2: #{generator_forward.6} parent=1 // loop_pre_header
      _
    $region3: #{generator_forward.6} parent=1 // loop_header
      %s20 = sphi 0, %s24
      %p21 = scmp.ge.s32.totalorder %s20, 4
      %s27 = sphi 0, %s39
      %s28 = sphi 0, %s35
      %s29 = sphi 0, %s27
      %s30 = sphi 0, %s28
      %s31 = sphi 0, %s29
      %s32 = sphi 0, %s30
      %s42 = sphi 0, %s44
      %s45 = sphi 0, %s42
      %s46 = sphi 0, %s45
      %s62 = sphi 0, %s46
      %s68 = sphi 0, %s70
      %s71 = sphi 0, %s68
      %s72 = sphi 0, %s71
      %s88 = sphi 0, %s72
      %s96 = sphi 0, %s98
      %s99 = sphi 0, %s96
      %s100 = sphi 0, %s99
      %s116 = sphi 0, %s100
      %s124 = sphi 0, %s126
      %s127 = sphi 0, %s124
      %s128 = sphi 0, %s127
      %s144 = sphi 0, %s128
    $region4: #{generator_forward.6} parent=1 // loop_header_branch
      %23 = sbr.rel (%p21) target = $region8
    $region5: #{generator_forward.6} parent=1 // loop_body
      %s25 = ssub.s32 %s20, 1
      %s26 = ssub.s32 %s20, 2
      %s33 = sadd.s32 1, %s28
      %p34 = scmp.ge.s32.totalorder %s33, 1
      %s35 = scalar_select %p34, 0, %s33
      %s36 = sadd.s32 1, %s27
      %s37 = scalar_select %p34, %s36, %s27
      %p38 = scmp.ge.s32.totalorder %s37, 2
      %s39 = scalar_select %p38, 0, %s37
      %s40 = ssub.s32 %s27, %s39
      %p41 = scmp.eq.s32.totalorder %s40, 0
      %s43 = sadd.s32 %s42, 1
      %s44 = scalar_select %p41, %s42, %s43
      %p47 = pneg %p41
      %p48 = scmp.eq.s32.totalorder %s20, 1
      %p49 = por %p47, %p48
      %p50 = scmp.ne.s32.totalorder %s42, %s45
      %p51 = scmp.eq.s32.totalorder %s20, 0
      %p52 = por %p50, %p51
      %p53 = scmp.ne.s32.totalorder %s42, %s45
      %p54 = scmp.eq.s32.totalorder %s25, 1
      %p55 = por %p53, %p54
      %p56 = scmp.ne.s32.totalorder %s45, %s46
      %p57 = scmp.eq.s32.totalorder %s25, 0
      %p58 = por %p56, %p57
      %p59 = scmp.ne.s32.totalorder %s45, %s46
      %p60 = scmp.eq.s32.totalorder %s26, 1
      %p61 = por %p59, %p60
      %p63 = scmp.ne.s32.totalorder %s46, %s62
      %p64 = scmp.eq.s32.totalorder %s26, 0
      %p65 = por %p63, %p64
      %s66 = ssub.s32 %s28, %s35
      %p67 = scmp.eq.s32.totalorder %s66, 0
      %s69 = sadd.s32 %s68, 1
      %s70 = scalar_select %p67, %s68, %s69
      %p73 = pneg %p67
      %p74 = scmp.eq.s32.totalorder %s20, 1
      %p75 = por %p73, %p74
      %p76 = scmp.ne.s32.totalorder %s68, %s71
      %p77 = scmp.eq.s32.totalorder %s20, 0
      %p78 = por %p76, %p77
      %p79 = scmp.ne.s32.totalorder %s68, %s71
      %p80 = scmp.eq.s32.totalorder %s25, 1
      %p81 = por %p79, %p80
      %p82 = scmp.ne.s32.totalorder %s71, %s72
      %p83 = scmp.eq.s32.totalorder %s25, 0
      %p84 = por %p82, %p83
      %p85 = scmp.ne.s32.totalorder %s71, %s72
      %p86 = scmp.eq.s32.totalorder %s26, 1
      %p87 = por %p85, %p86
      %p89 = scmp.ne.s32.totalorder %s72, %s88
      %p90 = scmp.eq.s32.totalorder %s26, 0
      %p91 = por %p89, %p90
      %s92 = ssub.s32 %s27, %s39
      %s93 = ssub.s32 %s28, %s35
      %s94 = sor.u32 %s92, %s93
      %p95 = scmp.eq.s32.totalorder %s94, 0
      %s97 = sadd.s32 %s96, 1
      %s98 = scalar_select %p95, %s96, %s97
      %p101 = pneg %p95
      %p102 = scmp.eq.s32.totalorder %s20, 1
      %p103 = por %p101, %p102
      %p104 = scmp.ne.s32.totalorder %s96, %s99
      %p105 = scmp.eq.s32.totalorder %s20, 0
      %p106 = por %p104, %p105
      %p107 = scmp.ne.s32.totalorder %s96, %s99
      %p108 = scmp.eq.s32.totalorder %s25, 1
      %p109 = por %p107, %p108
      %p110 = scmp.ne.s32.totalorder %s99, %s100
      %p111 = scmp.eq.s32.totalorder %s25, 0
      %p112 = por %p110, %p111
      %p113 = scmp.ne.s32.totalorder %s99, %s100
      %p114 = scmp.eq.s32.totalorder %s26, 1
      %p115 = por %p113, %p114
      %p117 = scmp.ne.s32.totalorder %s100, %s116
      %p118 = scmp.eq.s32.totalorder %s26, 0
      %p119 = por %p117, %p118
      %s120 = ssub.s32 %s27, %s39
      %s121 = ssub.s32 %s28, %s35
      %s122 = sor.u32 %s120, %s121
      %p123 = scmp.eq.s32.totalorder %s122, 0
      %s125 = sadd.s32 %s124, 1
      %s126 = scalar_select %p123, %s124, %s125
      %p129 = pneg %p123
      %p130 = scmp.eq.s32.totalorder %s20, 1
      %p131 = por %p129, %p130
      %p132 = scmp.ne.s32.totalorder %s124, %s127
      %p133 = scmp.eq.s32.totalorder %s20, 0
      %p134 = por %p132, %p133
      %p135 = scmp.ne.s32.totalorder %s124, %s127
      %p136 = scmp.eq.s32.totalorder %s25, 1
      %p137 = por %p135, %p136
      %p138 = scmp.ne.s32.totalorder %s127, %s128
      %p139 = scmp.eq.s32.totalorder %s25, 0
      %p140 = por %p138, %p139
      %p141 = scmp.ne.s32.totalorder %s127, %s128
      %p142 = scmp.eq.s32.totalorder %s26, 1
      %p143 = por %p141, %p142
      %p145 = scmp.ne.s32.totalorder %s128, %s144
      %p146 = scmp.eq.s32.totalorder %s26, 0
      %p147 = por %p145, %p146
      %p148 = scmp.le.s32.totalorder 1, %s20
      %p149 = scmp.lt.s32.totalorder %s20, 3
      %p150 = pnand %p148, %p149
      %p151 = pneg %p150
      // Predicated region
      $region9: #{generator_forward.6} parent=5 // pred_check
        _
      $region10: #{generator_forward.6} parent=5 // pred_check_branch
        %153 = sbr.rel (%p150) target = $region12
      $region11: #{generator_forward.6} parent=5 // pred_region
        %s154 = ssub.s32 %s20, 1
        // Predicated region
        $region13: #{generator_forward.6} parent=11 // pred_check
          %p155 = pneg %p84
        $region14: #{generator_forward.6} parent=11 // pred_check_branch
          %157 = sbr.rel (%p155) target = $region16
        $region15: #{generator_forward.6} parent=11 // pred_region
          %s159 = ssub.s32 3072, 3072
          %160 = vsyncadd [#allocation6], %s159
          %s161 = smul.addr %s30, 64
          %s162 = scalar_lea.hbm %s1, %s161
          %s163 = sshll.u32 [#allocation5], 4
          %s164 = int_to_ptr.vmem [resolvable:$true] %s163
          %169 = dma.hbm_to_vmem [thread:$0]  %s162, 3072, %s164, [#allocation6], 64, 64, 4
        $region16: #{generator_forward.6} parent=11 // pred_fallthru
          _
      $region12: #{generator_forward.6} parent=5 // pred_fallthru
        _
      %p170 = scmp.lt.s32.totalorder %s20, 2
      // Predicated region
      $region17: #{generator_forward.6} parent=5 // pred_check
        %p171 = pneg %p170
      $region18: #{generator_forward.6} parent=5 // pred_check_branch
        %173 = sbr.rel (%p171) target = $region20
      $region19: #{generator_forward.6} parent=5 // pred_region
        // Predicated region
        $region21: #{generator_forward.6} parent=19 // pred_check
          %p174 = pneg %p52
        $region22: #{generator_forward.6} parent=19 // pred_check_branch
          %176 = sbr.rel (%p174) target = $region24
        $region23: #{generator_forward.6} parent=19 // pred_region
          %s177 = sand.u32 %s42, 1
          %s178 = scalar_lea.sflag [#allocation3], %s177
          %s179 = sand.u32 %s42, 1
          %s180 = smul.addr %s179, 384
          %s181 = scalar_lea.vmem [#allocation2], %s180
          %s182 = smul.u32 32, %s27
          %s184 = ssub.s32 6144, 6144
          %185 = vsyncadd %s178, %s184
          %s186 = smul.addr %s182, 3
          %s187 = smul.addr %s186, 64
          %s188 = scalar_lea.hbm %s0, %s187
          %s189 = sshll.u32 %s181, 4
          %s190 = int_to_ptr.vmem [resolvable:$true] %s189
          %195 = dma.hbm_to_vmem [thread:$0]  %s188, 6144, %s190, %s178, 192, 192, 12
        $region24: #{generator_forward.6} parent=19 // pred_fallthru
          _
      $region20: #{generator_forward.6} parent=5 // pred_fallthru
        _
      %p196 = scmp.le.s32.totalorder 1, %s20
      %p197 = scmp.lt.s32.totalorder %s20, 3
      %p198 = pnand %p196, %p197
      %p199 = pneg %p198
      // Predicated region
      $region25: #{generator_forward.6} parent=5 // pred_check
        _
      $region26: #{generator_forward.6} parent=5 // pred_check_branch
        %201 = sbr.rel (%p198) target = $region28
      $region27: #{generator_forward.6} parent=5 // pred_region
        %s202 = ssub.s32 %s20, 1
        %s203 = sand.u32 %s45, 1
        %s204 = scalar_lea.sflag [#allocation3], %s203
        %s205 = sand.u32 %s45, 1
        %s206 = smul.addr %s205, 384
        %s207 = scalar_lea.vmem [#allocation2], %s206
        // Predicated region
        $region29: #{generator_forward.6} parent=27 // pred_check
          %p208 = pneg %p58
        $region30: #{generator_forward.6} parent=27 // pred_check_branch
          %210 = sbr.rel (%p208) target = $region32
        $region31: #{generator_forward.6} parent=27 // pred_region
          %211 = dma.done %s204, 6144
        $region32: #{generator_forward.6} parent=27 // pred_fallthru
          _
        // Predicated region
        $region33: #{generator_forward.6} parent=27 // pred_check
          %p212 = pneg %p84
        $region34: #{generator_forward.6} parent=27 // pred_check_branch
          %214 = sbr.rel (%p212) target = $region36
        $region35: #{generator_forward.6} parent=27 // pred_region
          %215 = dma.done [#allocation6], 3072
        $region36: #{generator_forward.6} parent=27 // pred_fallthru
          _
        %s216 = sand.u32 %s45, 1
        %s217 = scalar_lea.sflag [#allocation3], %s216
        %s218 = sand.u32 %s45, 1
        %s219 = smul.addr %s218, 384
        %s220 = scalar_lea.vmem [#allocation2], %s219
        %p221 = pneg %p58
        %p222 = pneg %p55
        %p223 = pneg %p84
        %p224 = pneg %p81
        %p225 = pneg %p112
        %p226 = pneg %p109
        %s227 = sand.u32 %s99, 1
        %s228 = scalar_lea.sflag [#allocation4], %s227
        %s229 = sand.u32 %s99, 1
        %s230 = smul.addr %s229, 128
        %s231 = scalar_lea.vmem [#allocation7], %s230
        %p232 = pneg %p140
        %p233 = pneg %p137
        %s234 = sand.u32 %s127, 1
        %s235 = scalar_lea.sflag [#allocation9], %s234
        %s236 = sand.u32 %s127, 1
        %s237 = smul.addr %s236, 8
        %s238 = scalar_lea.vmem [#allocation8], %s237
        %s239 = smul.u32 32, %s29
        %s240 = smul.u32 32, %s29
        %v242 = vld [vmem:[%s207] sm:$0xff]
        %v243 = vld [vmem:[%s207 + $0x8] sm:$0xf]
        %v244 = vld [vmem:[%s207 + $0xc] sm:$0xff]
        %v245 = vld [vmem:[%s207 + $0x14] sm:$0xf]
        %v246 = vld [vmem:[%s207 + $0x18] sm:$0xff]
        %v247 = vld [vmem:[%s207 + $0x20] sm:$0xf]
        %v248 = vld [vmem:[%s207 + $0x24] sm:$0xff]
        %v249 = vld [vmem:[%s207 + $0x2c] sm:$0xf]
        %v250 = vld [vmem:[%s207 + $0x30] sm:$0xff]
        %v251 = vld [vmem:[%s207 + $0x38] sm:$0xf]
        %v252 = vld [vmem:[%s207 + $0x3c] sm:$0xff]
        %v253 = vld [vmem:[%s207 + $0x44] sm:$0xf]
        %v254 = vld [vmem:[%s207 + $0x48] sm:$0xff]
        %v255 = vld [vmem:[%s207 + $0x50] sm:$0xf]
        %v256 = vld [vmem:[%s207 + $0x54] sm:$0xff]
        %v257 = vld [vmem:[%s207 + $0x5c] sm:$0xf]
        %v258 = vld [vmem:[%s207 + $0x60] sm:$0xff]
        %v259 = vld [vmem:[%s207 + $0x68] sm:$0xf]
        %v260 = vld [vmem:[%s207 + $0x6c] sm:$0xff]
        %v261 = vld [vmem:[%s207 + $0x74] sm:$0xf]
        %v262 = vld [vmem:[%s207 + $0x78] sm:$0xff]
        %v263 = vld [vmem:[%s207 + $0x80] sm:$0xf]
        %v264 = vld [vmem:[%s207 + $0x84] sm:$0xff]
        %v265 = vld [vmem:[%s207 + $0x8c] sm:$0xf]
        %v266 = vld [vmem:[%s207 + $0x90] sm:$0xff]
        %v267 = vld [vmem:[%s207 + $0x98] sm:$0xf]
        %v268 = vld [vmem:[%s207 + $0x9c] sm:$0xff]
        %v269 = vld [vmem:[%s207 + $0xa4] sm:$0xf]
        %v270 = vld [vmem:[%s207 + $0xa8] sm:$0xff]
        %v271 = vld [vmem:[%s207 + $0xb0] sm:$0xf]
        %v272 = vld [vmem:[%s207 + $0xb4] sm:$0xff]
        %v273 = vld [vmem:[%s207 + $0xbc] sm:$0xf]
        %v274 = vld [vmem:[%s207 + $0xc0] sm:$0xff]
        %v275 = vld [vmem:[%s207 + $0xc8] sm:$0xf]
        %v276 = vld [vmem:[%s207 + $0xcc] sm:$0xff]
        %v277 = vld [vmem:[%s207 + $0xd4] sm:$0xf]
        %v278 = vld [vmem:[%s207 + $0xd8] sm:$0xff]
        %v279 = vld [vmem:[%s207 + $0xe0] sm:$0xf]
        %v280 = vld [vmem:[%s207 + $0xe4] sm:$0xff]
        %v281 = vld [vmem:[%s207 + $0xec] sm:$0xf]
        %v282 = vld [vmem:[%s207 + $0xf0] sm:$0xff]
        %v283 = vld [vmem:[%s207 + $0xf8] sm:$0xf]
        %v284 = vld [vmem:[%s207 + $0xfc] sm:$0xff]
        %v285 = vld [vmem:[%s207 + $0x104] sm:$0xf]
        %v286 = vld [vmem:[%s207 + $0x108] sm:$0xff]
        %v287 = vld [vmem:[%s207 + $0x110] sm:$0xf]
        %v288 = vld [vmem:[%s207 + $0x114] sm:$0xff]
        %v289 = vld [vmem:[%s207 + $0x11c] sm:$0xf]
        %v290 = vld [vmem:[%s207 + $0x120] sm:$0xff]
        %v291 = vld [vmem:[%s207 + $0x128] sm:$0xf]
        %v292 = vld [vmem:[%s207 + $0x12c] sm:$0xff]
        %v293 = vld [vmem:[%s207 + $0x134] sm:$0xf]
        %v294 = vld [vmem:[%s207 + $0x138] sm:$0xff]
        %v295 = vld [vmem:[%s207 + $0x140] sm:$0xf]
        %v296 = vld [vmem:[%s207 + $0x144] sm:$0xff]
        %v297 = vld [vmem:[%s207 + $0x14c] sm:$0xf]
        %v298 = vld [vmem:[%s207 + $0x150] sm:$0xff]
        %v299 = vld [vmem:[%s207 + $0x158] sm:$0xf]
        %v300 = vld [vmem:[%s207 + $0x15c] sm:$0xff]
        %v301 = vld [vmem:[%s207 + $0x164] sm:$0xf]
        %v302 = vld [vmem:[%s207 + $0x168] sm:$0xff]
        %v303 = vld [vmem:[%s207 + $0x170] sm:$0xf]
        %v304 = vld [vmem:[%s207 + $0x174] sm:$0xff]
        %v305 = vld [vmem:[%s207 + $0x17c] sm:$0xf]
        %v306 = vld [vmem:[#allocation5] sm:$0xf]
        %v307 = vld [vmem:[#allocation5 + $0x4] sm:$0xf]
        %v308 = vld [vmem:[#allocation5 + $0x8] sm:$0xf]
        %v309 = vld [vmem:[#allocation5 + $0xc] sm:$0xf]
        %v310 = vld [vmem:[#allocation5 + $0x10] sm:$0xf]
        %v311 = vld [vmem:[#allocation5 + $0x14] sm:$0xf]
        %v312 = vld [vmem:[#allocation5 + $0x18] sm:$0xf]
        %v313 = vld [vmem:[#allocation5 + $0x1c] sm:$0xf]
        %v314 = vld [vmem:[#allocation5 + $0x20] sm:$0xf]
        %v315 = vld [vmem:[#allocation5 + $0x24] sm:$0xf]
        %v316 = vld [vmem:[#allocation5 + $0x28] sm:$0xf]
        %v317 = vld [vmem:[#allocation5 + $0x2c] sm:$0xf]
        %v318 = vld [vmem:[#allocation5 + $0x30] sm:$0xf]
        %v319 = vld [vmem:[#allocation5 + $0x34] sm:$0xf]
        %v320 = vld [vmem:[#allocation5 + $0x38] sm:$0xf]
        %v321 = vld [vmem:[#allocation5 + $0x3c] sm:$0xf]
        %v322 = vld [vmem:[#allocation5 + $0x40] sm:$0xf]
        %v323 = vld [vmem:[#allocation5 + $0x44] sm:$0xf]
        %v324 = vld [vmem:[#allocation5 + $0x48] sm:$0xf]
        %v325 = vld [vmem:[#allocation5 + $0x4c] sm:$0xf]
        %v326 = vld [vmem:[#allocation5 + $0x50] sm:$0xf]
        %v327 = vld [vmem:[#allocation5 + $0x54] sm:$0xf]
        %v328 = vld [vmem:[#allocation5 + $0x58] sm:$0xf]
        %v329 = vld [vmem:[#allocation5 + $0x5c] sm:$0xf]
        %v330 = vld [vmem:[#allocation5 + $0x60] sm:$0xf]
        %v331 = vld [vmem:[#allocation5 + $0x64] sm:$0xf]
        %v332 = vld [vmem:[#allocation5 + $0x68] sm:$0xf]
        %v333 = vld [vmem:[#allocation5 + $0x6c] sm:$0xf]
        %v334 = vld [vmem:[#allocation5 + $0x70] sm:$0xf]
        %v335 = vld [vmem:[#allocation5 + $0x74] sm:$0xf]
        %v336 = vld [vmem:[#allocation5 + $0x78] sm:$0xf]
        %v337 = vld [vmem:[#allocation5 + $0x7c] sm:$0xf]
        %v338 = vld [vmem:[#allocation5 + $0x80] sm:$0xf]
        %v339 = vld [vmem:[#allocation5 + $0x84] sm:$0xf]
        %v340 = vld [vmem:[#allocation5 + $0x88] sm:$0xf]
        %v341 = vld [vmem:[#allocation5 + $0x8c] sm:$0xf]
        %v342 = vld [vmem:[#allocation5 + $0x90] sm:$0xf]
        %v343 = vld [vmem:[#allocation5 + $0x94] sm:$0xf]
        %v344 = vld [vmem:[#allocation5 + $0x98] sm:$0xf]
        %v345 = vld [vmem:[#allocation5 + $0x9c] sm:$0xf]
        %v346 = vld [vmem:[#allocation5 + $0xa0] sm:$0xf]
        %v347 = vld [vmem:[#allocation5 + $0xa4] sm:$0xf]
        %v348 = vld [vmem:[#allocation5 + $0xa8] sm:$0xf]
        %v349 = vld [vmem:[#allocation5 + $0xac] sm:$0xf]
        %v350 = vld [vmem:[#allocation5 + $0xb0] sm:$0xf]
        %v351 = vld [vmem:[#allocation5 + $0xb4] sm:$0xf]
        %v352 = vld [vmem:[#allocation5 + $0xb8] sm:$0xf]
        %v353 = vld [vmem:[#allocation5 + $0xbc] sm:$0xf]
        %v418 = vunpack.c.l.b16 %v242
        %v419 = vunpack.c.h.b16 %v242
        %v420 = vunpack.c.l.b16 %v243
        %v421 = vunpack.c.l.b16 %v244
        %v422 = vunpack.c.h.b16 %v244
        %v423 = vunpack.c.l.b16 %v245
        %v424 = vunpack.c.l.b16 %v246
        %v425 = vunpack.c.h.b16 %v246
        %v426 = vunpack.c.l.b16 %v247
        %v427 = vunpack.c.l.b16 %v248
        %v428 = vunpack.c.h.b16 %v248
        %v429 = vunpack.c.l.b16 %v249
        %v430 = vunpack.c.l.b16 %v250
        %v431 = vunpack.c.h.b16 %v250
        %v432 = vunpack.c.l.b16 %v251
        %v433 = vunpack.c.l.b16 %v252
        %v434 = vunpack.c.h.b16 %v252
        %v435 = vunpack.c.l.b16 %v253
        %v436 = vunpack.c.l.b16 %v254
        %v437 = vunpack.c.h.b16 %v254
        %v438 = vunpack.c.l.b16 %v255
        %v439 = vunpack.c.l.b16 %v256
        %v440 = vunpack.c.h.b16 %v256
        %v441 = vunpack.c.l.b16 %v257
        %v442 = vunpack.c.l.b16 %v258
        %v443 = vunpack.c.h.b16 %v258
        %v444 = vunpack.c.l.b16 %v259
        %v445 = vunpack.c.l.b16 %v260
        %v446 = vunpack.c.h.b16 %v260
        %v447 = vunpack.c.l.b16 %v261
        %v448 = vunpack.c.l.b16 %v262
        %v449 = vunpack.c.h.b16 %v262
        %v450 = vunpack.c.l.b16 %v263
        %v451 = vunpack.c.l.b16 %v264
        %v452 = vunpack.c.h.b16 %v264
        %v453 = vunpack.c.l.b16 %v265
        %v454 = vunpack.c.l.b16 %v266
        %v455 = vunpack.c.h.b16 %v266
        %v456 = vunpack.c.l.b16 %v267
        %v457 = vunpack.c.l.b16 %v268
        %v458 = vunpack.c.h.b16 %v268
        %v459 = vunpack.c.l.b16 %v269
        %v460 = vunpack.c.l.b16 %v270
        %v461 = vunpack.c.h.b16 %v270
        %v462 = vunpack.c.l.b16 %v271
        %v463 = vunpack.c.l.b16 %v272
        %v464 = vunpack.c.h.b16 %v272
        %v465 = vunpack.c.l.b16 %v273
        %v466 = vunpack.c.l.b16 %v274
        %v467 = vunpack.c.h.b16 %v274
        %v468 = vunpack.c.l.b16 %v275
        %v469 = vunpack.c.l.b16 %v276
        %v470 = vunpack.c.h.b16 %v276
        %v471 = vunpack.c.l.b16 %v277
        %v472 = vunpack.c.l.b16 %v278
        %v473 = vunpack.c.h.b16 %v278
        %v474 = vunpack.c.l.b16 %v279
        %v475 = vunpack.c.l.b16 %v280
        %v476 = vunpack.c.h.b16 %v280
        %v477 = vunpack.c.l.b16 %v281
        %v478 = vunpack.c.l.b16 %v282
        %v479 = vunpack.c.h.b16 %v282
        %v480 = vunpack.c.l.b16 %v283
        %v481 = vunpack.c.l.b16 %v284
        %v482 = vunpack.c.h.b16 %v284
        %v483 = vunpack.c.l.b16 %v285
        %v484 = vunpack.c.l.b16 %v286
        %v485 = vunpack.c.h.b16 %v286
        %v486 = vunpack.c.l.b16 %v287
        %v487 = vunpack.c.l.b16 %v288
        %v488 = vunpack.c.h.b16 %v288
        %v489 = vunpack.c.l.b16 %v289
        %v490 = vunpack.c.l.b16 %v290
        %v491 = vunpack.c.h.b16 %v290
        %v492 = vunpack.c.l.b16 %v291
        %v493 = vunpack.c.l.b16 %v292
        %v494 = vunpack.c.h.b16 %v292
        %v495 = vunpack.c.l.b16 %v293
        %v496 = vunpack.c.l.b16 %v294
        %v497 = vunpack.c.h.b16 %v294
        %v498 = vunpack.c.l.b16 %v295
        %v499 = vunpack.c.l.b16 %v296
        %v500 = vunpack.c.h.b16 %v296
        %v501 = vunpack.c.l.b16 %v297
        %v502 = vunpack.c.l.b16 %v298
        %v503 = vunpack.c.h.b16 %v298
        %v504 = vunpack.c.l.b16 %v299
        %v505 = vunpack.c.l.b16 %v300
        %v506 = vunpack.c.h.b16 %v300
        %v507 = vunpack.c.l.b16 %v301
        %v508 = vunpack.c.l.b16 %v302
        %v509 = vunpack.c.h.b16 %v302
        %v510 = vunpack.c.l.b16 %v303
        %v511 = vunpack.c.l.b16 %v304
        %v512 = vunpack.c.h.b16 %v304
        %v513 = vunpack.c.l.b16 %v305
        %v514 = vpack.c.b16 %v421, %v418
        %v515 = vpack.c.b16 %v422, %v419
        %v516 = vpack.c.b16 %v423, %v420
        %v517 = vpack.c.b16 %v427, %v424
        %v518 = vpack.c.b16 %v428, %v425
        %v519 = vpack.c.b16 %v429, %v426
        %v520 = vpack.c.b16 %v433, %v430
        %v521 = vpack.c.b16 %v434, %v431
        %v522 = vpack.c.b16 %v435, %v432
        %v523 = vpack.c.b16 %v439, %v436
        %v524 = vpack.c.b16 %v440, %v437
        %v525 = vpack.c.b16 %v441, %v438
        %v526 = vpack.c.b16 %v445, %v442
        %v527 = vpack.c.b16 %v446, %v443
        %v528 = vpack.c.b16 %v447, %v444
        %v529 = vpack.c.b16 %v451, %v448
        %v530 = vpack.c.b16 %v452, %v449
        %v531 = vpack.c.b16 %v453, %v450
        %v532 = vpack.c.b16 %v457, %v454
        %v533 = vpack.c.b16 %v458, %v455
        %v534 = vpack.c.b16 %v459, %v456
        %v535 = vpack.c.b16 %v463, %v460
        %v536 = vpack.c.b16 %v464, %v461
        %v537 = vpack.c.b16 %v465, %v462
        %v538 = vpack.c.b16 %v469, %v466
        %v539 = vpack.c.b16 %v470, %v467
        %v540 = vpack.c.b16 %v471, %v468
        %v541 = vpack.c.b16 %v475, %v472
        %v542 = vpack.c.b16 %v476, %v473
        %v543 = vpack.c.b16 %v477, %v474
        %v544 = vpack.c.b16 %v481, %v478
        %v545 = vpack.c.b16 %v482, %v479
        %v546 = vpack.c.b16 %v483, %v480
        %v547 = vpack.c.b16 %v487, %v484
        %v548 = vpack.c.b16 %v488, %v485
        %v549 = vpack.c.b16 %v489, %v486
        %v550 = vpack.c.b16 %v493, %v490
        %v551 = vpack.c.b16 %v494, %v491
        %v552 = vpack.c.b16 %v495, %v492
        %v553 = vpack.c.b16 %v499, %v496
        %v554 = vpack.c.b16 %v500, %v497
        %v555 = vpack.c.b16 %v501, %v498
        %v556 = vpack.c.b16 %v505, %v502
        %v557 = vpack.c.b16 %v506, %v503
        %v558 = vpack.c.b16 %v507, %v504
        %v559 = vpack.c.b16 %v511, %v508
        %v560 = vpack.c.b16 %v512, %v509
        %v561 = vpack.c.b16 %v513, %v510
        %v658 = vunpack.c.l.b16 %v306
        %v659 = vunpack.c.l.b16 %v307
        %v660 = vunpack.c.l.b16 %v308
        %v661 = vunpack.c.l.b16 %v309
        %v662 = vunpack.c.l.b16 %v310
        %v663 = vunpack.c.l.b16 %v311
        %v664 = vunpack.c.l.b16 %v312
        %v665 = vunpack.c.l.b16 %v313
        %v666 = vunpack.c.l.b16 %v314
        %v667 = vunpack.c.l.b16 %v315
        %v668 = vunpack.c.l.b16 %v316
        %v669 = vunpack.c.l.b16 %v317
        %v670 = vunpack.c.l.b16 %v318
        %v671 = vunpack.c.l.b16 %v319
        %v672 = vunpack.c.l.b16 %v320
        %v673 = vunpack.c.l.b16 %v321
        %v674 = vunpack.c.l.b16 %v322
        %v675 = vunpack.c.l.b16 %v323
        %v676 = vunpack.c.l.b16 %v324
        %v677 = vunpack.c.l.b16 %v325
        %v678 = vunpack.c.l.b16 %v326
        %v679 = vunpack.c.l.b16 %v327
        %v680 = vunpack.c.l.b16 %v328
        %v681 = vunpack.c.l.b16 %v329
        %v682 = vunpack.c.l.b16 %v330
        %v683 = vunpack.c.l.b16 %v331
        %v684 = vunpack.c.l.b16 %v332
        %v685 = vunpack.c.l.b16 %v333
        %v686 = vunpack.c.l.b16 %v334
        %v687 = vunpack.c.l.b16 %v335
        %v688 = vunpack.c.l.b16 %v336
        %v689 = vunpack.c.l.b16 %v337
        %v690 = vunpack.c.l.b16 %v338
        %v691 = vunpack.c.l.b16 %v339
        %v692 = vunpack.c.l.b16 %v340
        %v693 = vunpack.c.l.b16 %v341
        %v694 = vunpack.c.l.b16 %v342
        %v695 = vunpack.c.l.b16 %v343
        %v696 = vunpack.c.l.b16 %v344
        %v697 = vunpack.c.l.b16 %v345
        %v698 = vunpack.c.l.b16 %v346
        %v699 = vunpack.c.l.b16 %v347
        %v700 = vunpack.c.l.b16 %v348
        %v701 = vunpack.c.l.b16 %v349
        %v702 = vunpack.c.l.b16 %v350
        %v703 = vunpack.c.l.b16 %v351
        %v704 = vunpack.c.l.b16 %v352
        %v705 = vunpack.c.l.b16 %v353
        %v706 = vpack.c.b16 %v659, %v658
        %v707 = vpack.c.b16 %v661, %v660
        %v708 = vpack.c.b16 %v663, %v662
        %v709 = vpack.c.b16 %v665, %v664
        %v710 = vpack.c.b16 %v667, %v666
        %v711 = vpack.c.b16 %v669, %v668
        %v712 = vpack.c.b16 %v671, %v670
        %v713 = vpack.c.b16 %v673, %v672
        %v714 = vpack.c.b16 %v675, %v674
        %v715 = vpack.c.b16 %v677, %v676
        %v716 = vpack.c.b16 %v679, %v678
        %v717 = vpack.c.b16 %v681, %v680
        %v718 = vpack.c.b16 %v683, %v682
        %v719 = vpack.c.b16 %v685, %v684
        %v720 = vpack.c.b16 %v687, %v686
        %v721 = vpack.c.b16 %v689, %v688
        %v722 = vpack.c.b16 %v691, %v690
        %v723 = vpack.c.b16 %v693, %v692
        %v724 = vpack.c.b16 %v695, %v694
        %v725 = vpack.c.b16 %v697, %v696
        %v726 = vpack.c.b16 %v699, %v698
        %v727 = vpack.c.b16 %v701, %v700
        %v728 = vpack.c.b16 %v703, %v702
        %v729 = vpack.c.b16 %v705, %v704
        %754 = vmatprep.subr.bf16.mxu0 0
        %755 = vmatpush1.bf16.msra.mxu0 %v706
        %756 = vmatprep.subr.bf16.mxu0 0
        %757 = vmatpush1.bf16.msra.mxu0 %v707
        %758 = vmatprep.subr.bf16.mxu0 0
        %759 = vmatpush1.bf16.msra.mxu0 %v708
        %760 = vmatprep.subr.bf16.mxu0 0
        %761 = vmatpush1.bf16.msra.mxu0 %v709
        %762 = vmatprep.subr.bf16.mxu0 0
        %763 = vmatpush1.bf16.msra.mxu0 %v710
        %764 = vmatprep.subr.bf16.mxu0 0
        %765 = vmatpush1.bf16.msra.mxu0 %v711
        %766 = vmatprep.subr.bf16.mxu0 0
        %767 = vmatpush1.bf16.msra.mxu0 %v712
        %768 = vmatprep.subr.bf16.mxu0 0
        %769 = vmatpush1.bf16.msra.mxu0 %v713
        %770 = vmatprep.subr.bf16.mxu0 0
        %771 = vmatpush1.bf16.msra.mxu0 %v714
        %772 = vmatprep.subr.bf16.mxu0 0
        %773 = vmatpush1.bf16.msra.mxu0 %v715
        %774 = vmatprep.subr.bf16.mxu0 0
        %775 = vmatpush1.bf16.msra.mxu0 %v716
        %776 = vmatprep.subr.bf16.mxu0 0
        %777 = vmatpush1.bf16.msra.mxu0 %v717
        %778 = vmatprep.subr.bf16.mxu0 0
        %779 = vmatpush1.bf16.msra.mxu0 %v718
        %780 = vmatprep.subr.bf16.mxu0 0
        %781 = vmatpush1.bf16.msra.mxu0 %v719
        %782 = vmatprep.subr.bf16.mxu0 0
        %783 = vmatpush1.bf16.msra.mxu0 %v720
        %784 = vmatprep.subr.bf16.mxu0 0
        %785 = vmatpush1.bf16.msra.mxu0 %v721
        %786 = vmatprep.mubr.bf16.mxu0 %v515
        %787 = vmatmul.mubr.bf16.gmra.mrb[0].mxu0 %v514
        %v788 = vpop.f32.mrb[0].mxu0
        %v789 = vadd.f32 0.0, %v788
        %v790 = vpop.f32.mrb[0].mxu0
        %v791 = vpop.f32.mrb[0].mxu0
        %v792 = vadd.f32 0.0, %v791
        %v793 = vpop.f32.mrb[0].mxu0
        %794 = vmatprep.mubr.bf16.mxu0 %v518
        %795 = vmatmul.mubr.bf16.gmra.mrb[0].mxu0 %v517
        %v796 = vpop.f32.mrb[0].mxu0
        %v797 = vadd.f32 0.0, %v796
        %v798 = vpop.f32.mrb[0].mxu0
        %v799 = vpop.f32.mrb[0].mxu0
        %v800 = vadd.f32 0.0, %v799
        %v801 = vpop.f32.mrb[0].mxu0
        %802 = vmatprep.mubr.bf16.mxu0 %v521
        %803 = vmatmul.mubr.bf16.gmra.mrb[0].mxu0 %v520
        %v804 = vpop.f32.mrb[0].mxu0
        %v805 = vadd.f32 0.0, %v804
        %v806 = vpop.f32.mrb[0].mxu0
        %v807 = vpop.f32.mrb[0].mxu0
        %v808 = vadd.f32 0.0, %v807
        %v809 = vpop.f32.mrb[0].mxu0
        %810 = vmatprep.mubr.bf16.mxu0 %v524
        %811 = vmatmul.mubr.bf16.gmra.mrb[0].mxu0 %v523
        %v812 = vpop.f32.mrb[0].mxu0
        %v813 = vadd.f32 0.0, %v812
        %v814 = vpop.f32.mrb[0].mxu0
        %v815 = vpop.f32.mrb[0].mxu0
        %v816 = vadd.f32 0.0, %v815
        %v817 = vpop.f32.mrb[0].mxu0
        %818 = vmatprep.mubr.bf16.mxu0 %v527
        %819 = vmatmul.mubr.bf16.gmra.mrb[0].mxu0 %v526
        %v820 = vpop.f32.mrb[0].mxu0
        %v821 = vadd.f32 0.0, %v820
        %v822 = vpop.f32.mrb[0].mxu0
        %v823 = vpop.f32.mrb[0].mxu0
        %v824 = vadd.f32 0.0, %v823
        %v825 = vpop.f32.mrb[0].mxu0
        %826 = vmatprep.mubr.bf16.mxu0 %v530
        %827 = vmatmul.mubr.bf16.gmra.mrb[0].mxu0 %v529
        %v828 = vpop.f32.mrb[0].mxu0
        %v829 = vadd.f32 0.0, %v828
        %v830 = vpop.f32.mrb[0].mxu0
        %v831 = vpop.f32.mrb[0].mxu0
        %v832 = vadd.f32 0.0, %v831
        %v833 = vpop.f32.mrb[0].mxu0
        %834 = vmatprep.mubr.bf16.mxu0 %v533
        %835 = vmatmul.mubr.bf16.gmra.mrb[0].mxu0 %v532
        %v836 = vpop.f32.mrb[0].mxu0
        %v837 = vadd.f32 0.0, %v836
        %v838 = vpop.f32.mrb[0].mxu0
        %v839 = vpop.f32.mrb[0].mxu0
        %v840 = vadd.f32 0.0, %v839
        %v841 = vpop.f32.mrb[0].mxu0
        %842 = vmatprep.mubr.bf16.mxu0 %v536
        %843 = vmatmul.mubr.bf16.gmra.mrb[0].mxu0 %v535
        %v844 = vpop.f32.mrb[0].mxu0
        %v845 = vadd.f32 0.0, %v844
        %v846 = vpop.f32.mrb[0].mxu0
        %v847 = vpop.f32.mrb[0].mxu0
        %v848 = vadd.f32 0.0, %v847
        %v849 = vpop.f32.mrb[0].mxu0
        %850 = vmatprep.mubr.bf16.mxu0 %v539
        %851 = vmatmul.mubr.bf16.gmra.mrb[0].mxu0 %v538
        %v852 = vpop.f32.mrb[0].mxu0
        %v853 = vadd.f32 0.0, %v852
        %v854 = vpop.f32.mrb[0].mxu0
        %v855 = vpop.f32.mrb[0].mxu0
        %v856 = vadd.f32 0.0, %v855
        %v857 = vpop.f32.mrb[0].mxu0
        %858 = vmatprep.mubr.bf16.mxu0 %v542
        %859 = vmatmul.mubr.bf16.gmra.mrb[0].mxu0 %v541
        %v860 = vpop.f32.mrb[0].mxu0
        %v861 = vadd.f32 0.0, %v860
        %v862 = vpop.f32.mrb[0].mxu0
        %v863 = vpop.f32.mrb[0].mxu0
        %v864 = vadd.f32 0.0, %v863
        %v865 = vpop.f32.mrb[0].mxu0
        %866 = vmatprep.mubr.bf16.mxu0 %v545
        %867 = vmatmul.mubr.bf16.gmra.mrb[0].mxu0 %v544
        %v868 = vpop.f32.mrb[0].mxu0
        %v869 = vadd.f32 0.0, %v868
        %v870 = vpop.f32.mrb[0].mxu0
        %v871 = vpop.f32.mrb[0].mxu0
        %v872 = vadd.f32 0.0, %v871
        %v873 = vpop.f32.mrb[0].mxu0
        %874 = vmatprep.mubr.bf16.mxu0 %v548
        %875 = vmatmul.mubr.bf16.gmra.mrb[0].mxu0 %v547
        %v876 = vpop.f32.mrb[0].mxu0
        %v877 = vadd.f32 0.0, %v876
        %v878 = vpop.f32.mrb[0].mxu0
        %v879 = vpop.f32.mrb[0].mxu0
        %v880 = vadd.f32 0.0, %v879
        %v881 = vpop.f32.mrb[0].mxu0
        %882 = vmatprep.mubr.bf16.mxu0 %v551
        %883 = vmatmul.mubr.bf16.gmra.mrb[0].mxu0 %v550
        %v884 = vpop.f32.mrb[0].mxu0
        %v885 = vadd.f32 0.0, %v884
        %v886 = vpop.f32.mrb[0].mxu0
        %v887 = vpop.f32.mrb[0].mxu0
        %v888 = vadd.f32 0.0, %v887
        %v889 = vpop.f32.mrb[0].mxu0
        %890 = vmatprep.mubr.bf16.mxu0 %v554
        %891 = vmatmul.mubr.bf16.gmra.mrb[0].mxu0 %v553
        %v892 = vpop.f32.mrb[0].mxu0
        %v893 = vadd.f32 0.0, %v892
        %v894 = vpop.f32.mrb[0].mxu0
        %v895 = vpop.f32.mrb[0].mxu0
        %v896 = vadd.f32 0.0, %v895
        %v897 = vpop.f32.mrb[0].mxu0
        %898 = vmatprep.mubr.bf16.mxu0 %v557
        %899 = vmatmul.mubr.bf16.gmra.mrb[0].mxu0 %v556
        %v900 = vpop.f32.mrb[0].mxu0
        %v901 = vadd.f32 0.0, %v900
        %v902 = vpop.f32.mrb[0].mxu0
        %v903 = vpop.f32.mrb[0].mxu0
        %v904 = vadd.f32 0.0, %v903
        %v905 = vpop.f32.mrb[0].mxu0
        %906 = vmatprep.mubr.bf16.mxu0 %v560
        %907 = vmatmul.mubr.bf16.gmra.mrb[0].mxu0 %v559
        %v908 = vpop.f32.mrb[0].mxu0
        %v909 = vadd.f32 0.0, %v908
        %v910 = vpop.f32.mrb[0].mxu0
        %v911 = vpop.f32.mrb[0].mxu0
        %v912 = vadd.f32 0.0, %v911
        %v913 = vpop.f32.mrb[0].mxu0
        %914 = vdwg.mxu0
        %915 = vmatprep.subr.bf16.mxu0 0
        %916 = vmatpush1.bf16.msra.mxu0 %v722
        %917 = vmatprep.subr.bf16.mxu0 0
        %918 = vmatpush1.bf16.msra.mxu0 %v723
        %919 = vmatprep.subr.bf16.mxu0 0
        %920 = vmatpush1.bf16.msra.mxu0 %v724
        %921 = vmatprep.subr.bf16.mxu0 0
        %922 = vmatpush1.bf16.msra.mxu0 %v725
        %923 = vmatprep.subr.bf16.mxu0 0
        %924 = vmatpush1.bf16.msra.mxu0 %v726
        %925 = vmatprep.subr.bf16.mxu0 0
        %926 = vmatpush1.bf16.msra.mxu0 %v727
        %927 = vmatprep.subr.bf16.mxu0 0
        %928 = vmatpush1.bf16.msra.mxu0 %v728
        %929 = vmatprep.subr.bf16.mxu0 0
        %930 = vmatpush1.bf16.msra.mxu0 %v729
        %931 = vmatprep.subr.bf16.mxu0 0
        %932 = vmatpush1.bf16.msra.mxu0 0
        %933 = vmatprep.subr.bf16.mxu0 0
        %934 = vmatpush1.bf16.msra.mxu0 0
        %935 = vmatprep.subr.bf16.mxu0 0
        %936 = vmatpush1.bf16.msra.mxu0 0
        %937 = vmatprep.subr.bf16.mxu0 0
        %938 = vmatpush1.bf16.msra.mxu0 0
        %939 = vmatprep.subr.bf16.mxu0 0
        %940 = vmatpush1.bf16.msra.mxu0 0
        %941 = vmatprep.subr.bf16.mxu0 0
        %942 = vmatpush1.bf16.msra.mxu0 0
        %943 = vmatprep.subr.bf16.mxu0 0
        %944 = vmatpush1.bf16.msra.mxu0 0
        %945 = vmatprep.subr.bf16.mxu0 0
        %946 = vmatpush1.bf16.msra.mxu0 0
        %947 = vmatprep.mubr.bf16.mxu0 0
        %948 = vmatmul.mubr.bf16.gmra.mrb[0].mxu0 %v516
        %v949 = vpop.f32.mrb[0].mxu0
        %v950 = vadd.f32 %v789, %v949
        %v951 = vpop.f32.mrb[0].mxu0
        %v952 = vpop.f32.mrb[0].mxu0
        %v953 = vadd.f32 %v792, %v952
        %v954 = vpop.f32.mrb[0].mxu0
        %955 = vmatprep.mubr.bf16.mxu0 0
        %956 = vmatmul.mubr.bf16.gmra.mrb[0].mxu0 %v519
        %v957 = vpop.f32.mrb[0].mxu0
        %v958 = vadd.f32 %v797, %v957
        %v959 = vpop.f32.mrb[0].mxu0
        %v960 = vpop.f32.mrb[0].mxu0
        %v961 = vadd.f32 %v800, %v960
        %v962 = vpop.f32.mrb[0].mxu0
        %963 = vmatprep.mubr.bf16.mxu0 0
        %964 = vmatmul.mubr.bf16.gmra.mrb[0].mxu0 %v522
        %v965 = vpop.f32.mrb[0].mxu0
        %v966 = vadd.f32 %v805, %v965
        %v967 = vpop.f32.mrb[0].mxu0
        %v968 = vpop.f32.mrb[0].mxu0
        %v969 = vadd.f32 %v808, %v968
        %v970 = vpop.f32.mrb[0].mxu0
        %971 = vmatprep.mubr.bf16.mxu0 0
        %972 = vmatmul.mubr.bf16.gmra.mrb[0].mxu0 %v525
        %v973 = vpop.f32.mrb[0].mxu0
        %v974 = vadd.f32 %v813, %v973
        %v975 = vpop.f32.mrb[0].mxu0
        %v976 = vpop.f32.mrb[0].mxu0
        %v977 = vadd.f32 %v816, %v976
        %v978 = vpop.f32.mrb[0].mxu0
        %979 = vmatprep.mubr.bf16.mxu0 0
        %980 = vmatmul.mubr.bf16.gmra.mrb[0].mxu0 %v528
        %v981 = vpop.f32.mrb[0].mxu0
        %v982 = vadd.f32 %v821, %v981
        %v983 = vpop.f32.mrb[0].mxu0
        %v984 = vpop.f32.mrb[0].mxu0
        %v985 = vadd.f32 %v824, %v984
        %v986 = vpop.f32.mrb[0].mxu0
        %987 = vmatprep.mubr.bf16.mxu0 0
        %988 = vmatmul.mubr.bf16.gmra.mrb[0].mxu0 %v531
        %v989 = vpop.f32.mrb[0].mxu0
        %v990 = vadd.f32 %v829, %v989
        %v991 = vpop.f32.mrb[0].mxu0
        %v992 = vpop.f32.mrb[0].mxu0
        %v993 = vadd.f32 %v832, %v992
        %v994 = vpop.f32.mrb[0].mxu0
        %995 = vmatprep.mubr.bf16.mxu0 0
        %996 = vmatmul.mubr.bf16.gmra.mrb[0].mxu0 %v534
        %v997 = vpop.f32.mrb[0].mxu0
        %v998 = vadd.f32 %v837, %v997
        %v999 = vpop.f32.mrb[0].mxu0
        %v1000 = vpop.f32.mrb[0].mxu0
        %v1001 = vadd.f32 %v840, %v1000
        %v1002 = vpop.f32.mrb[0].mxu0
        %1003 = vmatprep.mubr.bf16.mxu0 0
        %1004 = vmatmul.mubr.bf16.gmra.mrb[0].mxu0 %v537
        %v1005 = vpop.f32.mrb[0].mxu0
        %v1006 = vadd.f32 %v845, %v1005
        %v1007 = vpop.f32.mrb[0].mxu0
        %v1008 = vpop.f32.mrb[0].mxu0
        %v1009 = vadd.f32 %v848, %v1008
        %v1010 = vpop.f32.mrb[0].mxu0
        %1011 = vmatprep.mubr.bf16.mxu0 0
        %1012 = vmatmul.mubr.bf16.gmra.mrb[0].mxu0 %v540
        %v1013 = vpop.f32.mrb[0].mxu0
        %v1014 = vadd.f32 %v853, %v1013
        %v1015 = vpop.f32.mrb[0].mxu0
        %v1016 = vpop.f32.mrb[0].mxu0
        %v1017 = vadd.f32 %v856, %v1016
        %v1018 = vpop.f32.mrb[0].mxu0
        %1019 = vmatprep.mubr.bf16.mxu0 0
        %1020 = vmatmul.mubr.bf16.gmra.mrb[0].mxu0 %v543
        %v1021 = vpop.f32.mrb[0].mxu0
        %v1022 = vadd.f32 %v861, %v1021
        %v1023 = vpop.f32.mrb[0].mxu0
        %v1024 = vpop.f32.mrb[0].mxu0
        %v1025 = vadd.f32 %v864, %v1024
        %v1026 = vpop.f32.mrb[0].mxu0
        %1027 = vmatprep.mubr.bf16.mxu0 0
        %1028 = vmatmul.mubr.bf16.gmra.mrb[0].mxu0 %v546
        %v1029 = vpop.f32.mrb[0].mxu0
        %v1030 = vadd.f32 %v869, %v1029
        %v1031 = vpop.f32.mrb[0].mxu0
        %v1032 = vpop.f32.mrb[0].mxu0
        %v1033 = vadd.f32 %v872, %v1032
        %v1034 = vpop.f32.mrb[0].mxu0
        %1035 = vmatprep.mubr.bf16.mxu0 0
        %1036 = vmatmul.mubr.bf16.gmra.mrb[0].mxu0 %v549
        %v1037 = vpop.f32.mrb[0].mxu0
        %v1038 = vadd.f32 %v877, %v1037
        %v1039 = vpop.f32.mrb[0].mxu0
        %v1040 = vpop.f32.mrb[0].mxu0
        %v1041 = vadd.f32 %v880, %v1040
        %v1042 = vpop.f32.mrb[0].mxu0
        %1043 = vmatprep.mubr.bf16.mxu0 0
        %1044 = vmatmul.mubr.bf16.gmra.mrb[0].mxu0 %v552
        %v1045 = vpop.f32.mrb[0].mxu0
        %v1046 = vadd.f32 %v885, %v1045
        %v1047 = vpop.f32.mrb[0].mxu0
        %v1048 = vpop.f32.mrb[0].mxu0
        %v1049 = vadd.f32 %v888, %v1048
        %v1050 = vpop.f32.mrb[0].mxu0
        %1051 = vmatprep.mubr.bf16.mxu0 0
        %1052 = vmatmul.mubr.bf16.gmra.mrb[0].mxu0 %v555
        %v1053 = vpop.f32.mrb[0].mxu0
        %v1054 = vadd.f32 %v893, %v1053
        %v1055 = vpop.f32.mrb[0].mxu0
        %v1056 = vpop.f32.mrb[0].mxu0
        %v1057 = vadd.f32 %v896, %v1056
        %v1058 = vpop.f32.mrb[0].mxu0
        %1059 = vmatprep.mubr.bf16.mxu0 0
        %1060 = vmatmul.mubr.bf16.gmra.mrb[0].mxu0 %v558
        %v1061 = vpop.f32.mrb[0].mxu0
        %v1062 = vadd.f32 %v901, %v1061
        %v1063 = vpop.f32.mrb[0].mxu0
        %v1064 = vpop.f32.mrb[0].mxu0
        %v1065 = vadd.f32 %v904, %v1064
        %v1066 = vpop.f32.mrb[0].mxu0
        %1067 = vmatprep.mubr.bf16.mxu0 0
        %1068 = vmatmul.mubr.bf16.gmra.mrb[0].mxu0 %v561
        %v1069 = vpop.f32.mrb[0].mxu0
        %v1070 = vadd.f32 %v909, %v1069
        %v1071 = vpop.f32.mrb[0].mxu0
        %v1072 = vpop.f32.mrb[0].mxu0
        %v1073 = vadd.f32 %v912, %v1072
        %v1074 = vpop.f32.mrb[0].mxu0
        %1075 = vdwg.mxu0
        %v1076 = vadd.f32 %v950, %v953
        %v1077 = vadd.f32 %v1076, %v958
        %v1078 = vadd.f32 %v1077, %v961
        %v1079 = vadd.f32 %v1078, %v966
        %v1080 = vadd.f32 %v1079, %v969
        %v1081 = vadd.f32 %v1080, %v974
        %v1082 = vadd.f32 %v1081, %v977
        %v1083 = vadd.f32 %v1082, %v982
        %v1084 = vadd.f32 %v1083, %v985
        %v1085 = vadd.f32 %v1084, %v990
        %v1086 = vadd.f32 %v1085, %v993
        %v1087 = vadd.f32 %v1086, %v998
        %v1088 = vadd.f32 %v1087, %v1001
        %v1089 = vadd.f32 %v1088, %v1006
        %v1090 = vadd.f32 %v1089, %v1009
        %v1091 = vadd.f32 %v1090, %v1014
        %v1092 = vadd.f32 %v1091, %v1017
        %v1093 = vadd.f32 %v1092, %v1022
        %v1094 = vadd.f32 %v1093, %v1025
        %v1095 = vadd.f32 %v1094, %v1030
        %v1096 = vadd.f32 %v1095, %v1033
        %v1097 = vadd.f32 %v1096, %v1038
        %v1098 = vadd.f32 %v1097, %v1041
        %v1099 = vadd.f32 %v1098, %v1046
        %v1100 = vadd.f32 %v1099, %v1049
        %v1101 = vadd.f32 %v1100, %v1054
        %v1102 = vadd.f32 %v1101, %v1057
        %v1103 = vadd.f32 %v1102, %v1062
        %v1104 = vadd.f32 %v1103, %v1065
        %v1105 = vadd.f32 %v1104, %v1070
        %v1106 = vadd.f32 %v1105, %v1073
        %v1107 = vrot.slane %v1106, 4
        %v1108 = vadd.f32 %v1106, %v1107
        %v1109 = vrot.slane %v1108, 2
        %v1110 = vadd.f32 %v1108, %v1109
        %v1111 = vrot.slane %v1110, 1
        %v1112 = vadd.f32 %v1110, %v1111
        %1113 = vst [vmem:[%s238] sm:$0x1] %v1112
        %v1114 = vmul.f32 %v950, %v950
        %v1115 = vmul.f32 %v953, %v953
        %v1116 = vmul.f32 %v958, %v958
        %v1117 = vmul.f32 %v961, %v961
        %v1118 = vmul.f32 %v966, %v966
        %v1119 = vmul.f32 %v969, %v969
        %v1120 = vmul.f32 %v974, %v974
        %v1121 = vmul.f32 %v977, %v977
        %v1122 = vmul.f32 %v982, %v982
        %v1123 = vmul.f32 %v985, %v985
        %v1124 = vmul.f32 %v990, %v990
        %v1125 = vmul.f32 %v993, %v993
        %v1126 = vmul.f32 %v998, %v998
        %v1127 = vmul.f32 %v1001, %v1001
        %v1128 = vmul.f32 %v1006, %v1006
        %v1129 = vmul.f32 %v1009, %v1009
        %v1130 = vmul.f32 %v1014, %v1014
        %v1131 = vmul.f32 %v1017, %v1017
        %v1132 = vmul.f32 %v1022, %v1022
        %v1133 = vmul.f32 %v1025, %v1025
        %v1134 = vmul.f32 %v1030, %v1030
        %v1135 = vmul.f32 %v1033, %v1033
        %v1136 = vmul.f32 %v1038, %v1038
        %v1137 = vmul.f32 %v1041, %v1041
        %v1138 = vmul.f32 %v1046, %v1046
        %v1139 = vmul.f32 %v1049, %v1049
        %v1140 = vmul.f32 %v1054, %v1054
        %v1141 = vmul.f32 %v1057, %v1057
        %v1142 = vmul.f32 %v1062, %v1062
        %v1143 = vmul.f32 %v1065, %v1065
        %v1144 = vmul.f32 %v1070, %v1070
        %v1145 = vmul.f32 %v1073, %v1073
        %v1146 = vadd.f32 %v1114, %v1115
        %v1147 = vadd.f32 %v1146, %v1116
        %v1148 = vadd.f32 %v1147, %v1117
        %v1149 = vadd.f32 %v1148, %v1118
        %v1150 = vadd.f32 %v1149, %v1119
        %v1151 = vadd.f32 %v1150, %v1120
        %v1152 = vadd.f32 %v1151, %v1121
        %v1153 = vadd.f32 %v1152, %v1122
        %v1154 = vadd.f32 %v1153, %v1123
        %v1155 = vadd.f32 %v1154, %v1124
        %v1156 = vadd.f32 %v1155, %v1125
        %v1157 = vadd.f32 %v1156, %v1126
        %v1158 = vadd.f32 %v1157, %v1127
        %v1159 = vadd.f32 %v1158, %v1128
        %v1160 = vadd.f32 %v1159, %v1129
        %v1161 = vadd.f32 %v1160, %v1130
        %v1162 = vadd.f32 %v1161, %v1131
        %v1163 = vadd.f32 %v1162, %v1132
        %v1164 = vadd.f32 %v1163, %v1133
        %v1165 = vadd.f32 %v1164, %v1134
        %v1166 = vadd.f32 %v1165, %v1135
        %v1167 = vadd.f32 %v1166, %v1136
        %v1168 = vadd.f32 %v1167, %v1137
        %v1169 = vadd.f32 %v1168, %v1138
        %v1170 = vadd.f32 %v1169, %v1139
        %v1171 = vadd.f32 %v1170, %v1140
        %v1172 = vadd.f32 %v1171, %v1141
        %v1173 = vadd.f32 %v1172, %v1142
        %v1174 = vadd.f32 %v1173, %v1143
        %v1175 = vadd.f32 %v1174, %v1144
        %v1176 = vadd.f32 %v1175, %v1145
        %v1177 = vrot.slane %v1176, 4
        %v1178 = vadd.f32 %v1176, %v1177
        %v1179 = vrot.slane %v1178, 2
        %v1180 = vadd.f32 %v1178, %v1179
        %v1181 = vrot.slane %v1180, 1
        %v1182 = vadd.f32 %v1180, %v1181
        %1183 = vst [vmem:[%s238 + $0x1] sm:$0x1] %v1182
        %v1184 = vpack.c.bf16 %v953, %v950
        %v1185 = vpack.c.bf16 %v961, %v958
        %v1186 = vpack.c.bf16 %v969, %v966
        %v1187 = vpack.c.bf16 %v977, %v974
        %v1188 = vpack.c.bf16 %v985, %v982
        %v1189 = vpack.c.bf16 %v993, %v990
        %v1190 = vpack.c.bf16 %v1001, %v998
        %v1191 = vpack.c.bf16 %v1009, %v1006
        %v1192 = vpack.c.bf16 %v1017, %v1014
        %v1193 = vpack.c.bf16 %v1025, %v1022
        %v1194 = vpack.c.bf16 %v1033, %v1030
        %v1195 = vpack.c.bf16 %v1041, %v1038
        %v1196 = vpack.c.bf16 %v1049, %v1046
        %v1197 = vpack.c.bf16 %v1057, %v1054
        %v1198 = vpack.c.bf16 %v1065, %v1062
        %v1199 = vpack.c.bf16 %v1073, %v1070
        %v1216 = vunpack.c.l.b16 %v1184
        %v1217 = vunpack.c.h.b16 %v1184
        %v1218 = vunpack.c.l.b16 %v1185
        %v1219 = vunpack.c.h.b16 %v1185
        %v1220 = vunpack.c.l.b16 %v1186
        %v1221 = vunpack.c.h.b16 %v1186
        %v1222 = vunpack.c.l.b16 %v1187
        %v1223 = vunpack.c.h.b16 %v1187
        %v1224 = vunpack.c.l.b16 %v1188
        %v1225 = vunpack.c.h.b16 %v1188
        %v1226 = vunpack.c.l.b16 %v1189
        %v1227 = vunpack.c.h.b16 %v1189
        %v1228 = vunpack.c.l.b16 %v1190
        %v1229 = vunpack.c.h.b16 %v1190
        %v1230 = vunpack.c.l.b16 %v1191
        %v1231 = vunpack.c.h.b16 %v1191
        %v1232 = vunpack.c.l.b16 %v1192
        %v1233 = vunpack.c.h.b16 %v1192
        %v1234 = vunpack.c.l.b16 %v1193
        %v1235 = vunpack.c.h.b16 %v1193
        %v1236 = vunpack.c.l.b16 %v1194
        %v1237 = vunpack.c.h.b16 %v1194
        %v1238 = vunpack.c.l.b16 %v1195
        %v1239 = vunpack.c.h.b16 %v1195
        %v1240 = vunpack.c.l.b16 %v1196
        %v1241 = vunpack.c.h.b16 %v1196
        %v1242 = vunpack.c.l.b16 %v1197
        %v1243 = vunpack.c.h.b16 %v1197
        %v1244 = vunpack.c.l.b16 %v1198
        %v1245 = vunpack.c.h.b16 %v1198
        %v1246 = vunpack.c.l.b16 %v1199
        %v1247 = vunpack.c.h.b16 %v1199
        %v1248 = vpack.c.b16 %v1216, %v1216
        %v1249 = vpack.c.b16 %v1217, %v1217
        %v1250 = vpack.c.b16 %v1218, %v1218
        %v1251 = vpack.c.b16 %v1219, %v1219
        %v1252 = vpack.c.b16 %v1220, %v1220
        %v1253 = vpack.c.b16 %v1221, %v1221
        %v1254 = vpack.c.b16 %v1222, %v1222
        %v1255 = vpack.c.b16 %v1223, %v1223
        %v1256 = vpack.c.b16 %v1224, %v1224
        %v1257 = vpack.c.b16 %v1225, %v1225
        %v1258 = vpack.c.b16 %v1226, %v1226
        %v1259 = vpack.c.b16 %v1227, %v1227
        %v1260 = vpack.c.b16 %v1228, %v1228
        %v1261 = vpack.c.b16 %v1229, %v1229
        %v1262 = vpack.c.b16 %v1230, %v1230
        %v1263 = vpack.c.b16 %v1231, %v1231
        %v1264 = vpack.c.b16 %v1232, %v1232
        %v1265 = vpack.c.b16 %v1233, %v1233
        %v1266 = vpack.c.b16 %v1234, %v1234
        %v1267 = vpack.c.b16 %v1235, %v1235
        %v1268 = vpack.c.b16 %v1236, %v1236
        %v1269 = vpack.c.b16 %v1237, %v1237
        %v1270 = vpack.c.b16 %v1238, %v1238
        %v1271 = vpack.c.b16 %v1239, %v1239
        %v1272 = vpack.c.b16 %v1240, %v1240
        %v1273 = vpack.c.b16 %v1241, %v1241
        %v1274 = vpack.c.b16 %v1242, %v1242
        %v1275 = vpack.c.b16 %v1243, %v1243
        %v1276 = vpack.c.b16 %v1244, %v1244
        %v1277 = vpack.c.b16 %v1245, %v1245
        %v1278 = vpack.c.b16 %v1246, %v1246
        %v1279 = vpack.c.b16 %v1247, %v1247
        %1312 = vst [vmem:[%s231] sm:$0xf] %v1248
        %1313 = vst [vmem:[%s231 + $0x4] sm:$0xf] %v1249
        %1314 = vst [vmem:[%s231 + $0x8] sm:$0xf] %v1250
        %1315 = vst [vmem:[%s231 + $0xc] sm:$0xf] %v1251
        %1316 = vst [vmem:[%s231 + $0x10] sm:$0xf] %v1252
        %1317 = vst [vmem:[%s231 + $0x14] sm:$0xf] %v1253
        %1318 = vst [vmem:[%s231 + $0x18] sm:$0xf] %v1254
        %1319 = vst [vmem:[%s231 + $0x1c] sm:$0xf] %v1255
        %1320 = vst [vmem:[%s231 + $0x20] sm:$0xf] %v1256
        %1321 = vst [vmem:[%s231 + $0x24] sm:$0xf] %v1257
        %1322 = vst [vmem:[%s231 + $0x28] sm:$0xf] %v1258
        %1323 = vst [vmem:[%s231 + $0x2c] sm:$0xf] %v1259
        %1324 = vst [vmem:[%s231 + $0x30] sm:$0xf] %v1260
        %1325 = vst [vmem:[%s231 + $0x34] sm:$0xf] %v1261
        %1326 = vst [vmem:[%s231 + $0x38] sm:$0xf] %v1262
        %1327 = vst [vmem:[%s231 + $0x3c] sm:$0xf] %v1263
        %1328 = vst [vmem:[%s231 + $0x40] sm:$0xf] %v1264
        %1329 = vst [vmem:[%s231 + $0x44] sm:$0xf] %v1265
        %1330 = vst [vmem:[%s231 + $0x48] sm:$0xf] %v1266
        %1331 = vst [vmem:[%s231 + $0x4c] sm:$0xf] %v1267
        %1332 = vst [vmem:[%s231 + $0x50] sm:$0xf] %v1268
        %1333 = vst [vmem:[%s231 + $0x54] sm:$0xf] %v1269
        %1334 = vst [vmem:[%s231 + $0x58] sm:$0xf] %v1270
        %1335 = vst [vmem:[%s231 + $0x5c] sm:$0xf] %v1271
        %1336 = vst [vmem:[%s231 + $0x60] sm:$0xf] %v1272
        %1337 = vst [vmem:[%s231 + $0x64] sm:$0xf] %v1273
        %1338 = vst [vmem:[%s231 + $0x68] sm:$0xf] %v1274
        %1339 = vst [vmem:[%s231 + $0x6c] sm:$0xf] %v1275
        %1340 = vst [vmem:[%s231 + $0x70] sm:$0xf] %v1276
        %1341 = vst [vmem:[%s231 + $0x74] sm:$0xf] %v1277
        %1342 = vst [vmem:[%s231 + $0x78] sm:$0xf] %v1278
        %1343 = vst [vmem:[%s231 + $0x7c] sm:$0xf] %v1279
        %s1344 = sand.u32 %s99, 1
        %s1345 = scalar_lea.sflag [#allocation4], %s1344
        %s1346 = sand.u32 %s99, 1
        %s1347 = smul.addr %s1346, 128
        %s1348 = scalar_lea.vmem [#allocation7], %s1347
        %s1349 = sand.u32 %s127, 1
        %s1350 = scalar_lea.sflag [#allocation9], %s1349
        %s1351 = sand.u32 %s127, 1
        %s1352 = smul.addr %s1351, 8
        %s1353 = scalar_lea.vmem [#allocation8], %s1352
        // Predicated region
        $region37: #{generator_forward.6} parent=27 // pred_check
          %p1354 = pneg %p109
        $region38: #{generator_forward.6} parent=27 // pred_check_branch
          %1356 = sbr.rel (%p1354) target = $region40
        $region39: #{generator_forward.6} parent=27 // pred_region
          %s1357 = smul.u32 32, %s29
          %s1359 = ssub.s32 2048, 2048
          %1360 = vsyncadd %s1345, %s1359
          %s1361 = sadd.s32 %s30, %s1357
          %s1362 = smul.addr %s1361, 64
          %s1363 = scalar_lea.hbm %s2, %s1362
          %s1364 = sshll.u32 %s1348, 4
          %s1365 = int_to_ptr.vmem [resolvable:$true] %s1364
          %1370 = dma.vmem_to_hbm [thread:$0]  %s1365, 2048, %s1363, %s1345, 64, 64, 4
        $region40: #{generator_forward.6} parent=27 // pred_fallthru
          _
        // Predicated region
        $region41: #{generator_forward.6} parent=27 // pred_check
          %p1371 = pneg %p137
        $region42: #{generator_forward.6} parent=27 // pred_check_branch
          %1373 = sbr.rel (%p1371) target = $region44
        $region43: #{generator_forward.6} parent=27 // pred_region
          %s1375 = ssub.s32 128, 128
          %1376 = vsyncadd %s1350, %s1375
          %s1377 = sadd.s32 %s30, %s29
          %s1378 = smul.addr %s1377, 128
          %s1379 = scalar_lea.hbm %s3, %s1378
          %s1381 = sshll.u32 %s1353, 4
          %s1382 = int_to_ptr.vmem [resolvable:$true] %s1381
          %1384 = dma.vmem_to_hbm [thread:$0]  %s1382, 128, %s1379, %s1350
        $region44: #{generator_forward.6} parent=27 // pred_fallthru
          _
      $region28: #{generator_forward.6} parent=5 // pred_fallthru
        _
      %p1385 = scmp.le.s32.totalorder 2, %s20
      // Predicated region
      $region45: #{generator_forward.6} parent=5 // pred_check
        %p1386 = pneg %p1385
      $region46: #{generator_forward.6} parent=5 // pred_check_branch
        %1388 = sbr.rel (%p1386) target = $region48
      $region47: #{generator_forward.6} parent=5 // pred_region
        %s1389 = ssub.s32 %s20, 2
        // Predicated region
        $region49: #{generator_forward.6} parent=47 // pred_check
          %p1390 = pneg %p115
        $region50: #{generator_forward.6} parent=47 // pred_check_branch
          %1392 = sbr.rel (%p1390) target = $region52
        $region51: #{generator_forward.6} parent=47 // pred_region
          %s1393 = sand.u32 %s100, 1
          %s1394 = scalar_lea.sflag [#allocation4], %s1393
          %s1395 = sand.u32 %s100, 1
          %s1396 = smul.addr %s1395, 128
          %s1397 = scalar_lea.vmem [#allocation7], %s1396
          %1398 = dma.done %s1394, 2048
        $region52: #{generator_forward.6} parent=47 // pred_fallthru
          _
        // Predicated region
        $region53: #{generator_forward.6} parent=47 // pred_check
          %p1399 = pneg %p143
        $region54: #{generator_forward.6} parent=47 // pred_check_branch
          %1401 = sbr.rel (%p1399) target = $region56
        $region55: #{generator_forward.6} parent=47 // pred_region
          %s1402 = sand.u32 %s128, 1
          %s1403 = scalar_lea.sflag [#allocation9], %s1402
          %s1404 = sand.u32 %s128, 1
          %s1405 = smul.addr %s1404, 8
          %s1406 = scalar_lea.vmem [#allocation8], %s1405
          %1407 = dma.done %s1403, 128
        $region56: #{generator_forward.6} parent=47 // pred_fallthru
          _
      $region48: #{generator_forward.6} parent=5 // pred_fallthru
        _
    $region6: #{generator_forward.6} parent=1 // loop_footer
      %s24 = sadd.s32 1, %s20
    $region7: #{generator_forward.6} parent=1 // loop_footer_branch
      %19 = sbr.rel target = $region3
    $region8: #{generator_forward.6} parent=1 // loop_exit
      _
    %1408 = vsyncpa [#allocation3], 1
    %s1409 = scalar_lea.sflag [#allocation3], 1
    %1410 = vsyncpa %s1409, 1
    %1411 = vsyncpa [#allocation6], 1
    %1412 = vsyncpa [#allocation4], 1
    %s1413 = scalar_lea.sflag [#allocation4], 1
    %1414 = vsyncpa %s1413, 1
    %1415 = vsyncpa [#allocation9], 1
    %s1416 = scalar_lea.sflag [#allocation9], 1
    %1417 = vsyncpa %s1416, 1

// kernel: generator_forward.7
$region0: #{generator_forward.7}
  #allocation0 [shape = 'u32[]', space=smem, size = 0x4, offset = 0x4, fixed_abs, tag = 'smem constant byte address 0x4 - core index']
  #allocation1 [shape = 'u32[144,128]{1,0:T(1,128)}', space=vmem, size = 0x12000, scoped, tag = 'internal scratch']
  %s0 = inlined_call_operand.hbm [shape: bf16[2048,256], index: 0, kind: input, shape index: {}]
  %s1 = inlined_call_operand.hbm [shape: bf16[256,128], index: 1, kind: input, shape index: {}]
  %s2 = inlined_call_operand.hbm [shape: f32[2048,128], index: 2, kind: output, shape index: {}]
  %s3 = sld [smem:[#allocation0]]
  $region49: #{generator_forward.7} parent=0
    _
  %s5 = ssub.s32 1, %s3
  %s6 = scalar_select 0, %s5, %s3
  $region1: #{generator_forward.7} parent=0
    #allocation2 [shape = 'u8[524288]{0}', space=vmem, size = 0x80000, scoped, tag = 'input window, operand 0']
    #allocation3 [shape = 's32[2]{0}', space=sflag, size = 0x8, scoped, tag = 'scoped memory for generator_forward.7']
    #allocation4 [shape = 's32[2]{0}', space=sflag, size = 0x8, scoped, tag = 'scoped memory for generator_forward.7']
    #allocation5 [shape = 'u8[65536]{0}', space=vmem, size = 0x10000, scoped, tag = 'input window, operand 1, single buffered']
    #allocation6 [shape = 's32[1]{0}', space=sflag, size = 0x4, scoped, tag = 'scoped memory for generator_forward.7']
    #allocation7 [shape = 'u8[524288]{0}', space=vmem, size = 0x80000, scoped, tag = 'output window, operand 0']
    %7 = vsyncpa [#allocation3], 0
    %s8 = scalar_lea.sflag [#allocation3], 1
    %9 = vsyncpa %s8, 0
    %10 = vsyncpa [#allocation6], 0
    %11 = vsyncpa [#allocation4], 0
    %s12 = scalar_lea.sflag [#allocation4], 1
    %13 = vsyncpa %s12, 0
    loop: start=0, step=1, limit=6
    $region2: #{generator_forward.7} parent=1 // loop_pre_header
      _
    $region3: #{generator_forward.7} parent=1 // loop_header
      %s15 = sphi 0, %s19
      %p16 = scmp.ge.s32.totalorder %s15, 6
      %s22 = sphi 0, %s34
      %s23 = sphi 0, %s30
      %s24 = sphi 0, %s22
      %s25 = sphi 0, %s23
      %s26 = sphi 0, %s24
      %s27 = sphi 0, %s25
      %s37 = sphi 0, %s39
      %s40 = sphi 0, %s37
      %s41 = sphi 0, %s40
      %s57 = sphi 0, %s41
      %s63 = sphi 0, %s65
      %s66 = sphi 0, %s63
      %s67 = sphi 0, %s66
      %s83 = sphi 0, %s67
      %s91 = sphi 0, %s93
      %s94 = sphi 0, %s91
      %s95 = sphi 0, %s94
      %s111 = sphi 0, %s95
    $region4: #{generator_forward.7} parent=1 // loop_header_branch
      %18 = sbr.rel (%p16) target = $region8
    $region5: #{generator_forward.7} parent=1 // loop_body
      %s20 = ssub.s32 %s15, 1
      %s21 = ssub.s32 %s15, 2
      %s28 = sadd.s32 1, %s23
      %p29 = scmp.ge.s32.totalorder %s28, 1
      %s30 = scalar_select %p29, 0, %s28
      %s31 = sadd.s32 1, %s22
      %s32 = scalar_select %p29, %s31, %s22
      %p33 = scmp.ge.s32.totalorder %s32, 4
      %s34 = scalar_select %p33, 0, %s32
      %s35 = ssub.s32 %s22, %s34
      %p36 = scmp.eq.s32.totalorder %s35, 0
      %s38 = sadd.s32 %s37, 1
      %s39 = scalar_select %p36, %s37, %s38
      %p42 = pneg %p36
      %p43 = scmp.eq.s32.totalorder %s15, 3
      %p44 = por %p42, %p43
      %p45 = scmp.ne.s32.totalorder %s37, %s40
      %p46 = scmp.eq.s32.totalorder %s15, 0
      %p47 = por %p45, %p46
      %p48 = scmp.ne.s32.totalorder %s37, %s40
      %p49 = scmp.eq.s32.totalorder %s20, 3
      %p50 = por %p48, %p49
      %p51 = scmp.ne.s32.totalorder %s40, %s41
      %p52 = scmp.eq.s32.totalorder %s20, 0
      %p53 = por %p51, %p52
      %p54 = scmp.ne.s32.totalorder %s40, %s41
      %p55 = scmp.eq.s32.totalorder %s21, 3
      %p56 = por %p54, %p55
      %p58 = scmp.ne.s32.totalorder %s41, %s57
      %p59 = scmp.eq.s32.totalorder %s21, 0
      %p60 = por %p58, %p59
      %s61 = ssub.s32 %s23, %s30
      %p62 = scmp.eq.s32.totalorder %s61, 0
      %s64 = sadd.s32 %s63, 1
      %s65 = scalar_select %p62, %s63, %s64
      %p68 = pneg %p62
      %p69 = scmp.eq.s32.totalorder %s15, 3
      %p70 = por %p68, %p69
      %p71 = scmp.ne.s32.totalorder %s63, %s66
      %p72 = scmp.eq.s32.totalorder %s15, 0
      %p73 = por %p71, %p72
      %p74 = scmp.ne.s32.totalorder %s63, %s66
      %p75 = scmp.eq.s32.totalorder %s20, 3
      %p76 = por %p74, %p75
      %p77 = scmp.ne.s32.totalorder %s66, %s67
      %p78 = scmp.eq.s32.totalorder %s20, 0
      %p79 = por %p77, %p78
      %p80 = scmp.ne.s32.totalorder %s66, %s67
      %p81 = scmp.eq.s32.totalorder %s21, 3
      %p82 = por %p80, %p81
      %p84 = scmp.ne.s32.totalorder %s67, %s83
      %p85 = scmp.eq.s32.totalorder %s21, 0
      %p86 = por %p84, %p85
      %s87 = ssub.s32 %s22, %s34
      %s88 = ssub.s32 %s23, %s30
      %s89 = sor.u32 %s87, %s88
      %p90 = scmp.eq.s32.totalorder %s89, 0
      %s92 = sadd.s32 %s91, 1
      %s93 = scalar_select %p90, %s91, %s92
      %p96 = pneg %p90
      %p97 = scmp.eq.s32.totalorder %s15, 3
      %p98 = por %p96, %p97
      %p99 = scmp.ne.s32.totalorder %s91, %s94
      %p100 = scmp.eq.s32.totalorder %s15, 0
      %p101 = por %p99, %p100
      %p102 = scmp.ne.s32.totalorder %s91, %s94
      %p103 = scmp.eq.s32.totalorder %s20, 3
      %p104 = por %p102, %p103
      %p105 = scmp.ne.s32.totalorder %s94, %s95
      %p106 = scmp.eq.s32.totalorder %s20, 0
      %p107 = por %p105, %p106
      %p108 = scmp.ne.s32.totalorder %s94, %s95
      %p109 = scmp.eq.s32.totalorder %s21, 3
      %p110 = por %p108, %p109
      %p112 = scmp.ne.s32.totalorder %s95, %s111
      %p113 = scmp.eq.s32.totalorder %s21, 0
      %p114 = por %p112, %p113
      %p115 = scmp.le.s32.totalorder 1, %s15
      %p116 = scmp.lt.s32.totalorder %s15, 5
      %p117 = pnand %p115, %p116
      %p118 = pneg %p117
      // Predicated region
      $region9: #{generator_forward.7} parent=5 // pred_check
        _
      $region10: #{generator_forward.7} parent=5 // pred_check_branch
        %120 = sbr.rel (%p117) target = $region12
      $region11: #{generator_forward.7} parent=5 // pred_region
        %s121 = ssub.s32 %s15, 1
        // Predicated region
        $region13: #{generator_forward.7} parent=11 // pred_check
          %p122 = pneg %p79
        $region14: #{generator_forward.7} parent=11 // pred_check_branch
          %124 = sbr.rel (%p122) target = $region16
        $region15: #{generator_forward.7} parent=11 // pred_region
          %s126 = ssub.s32 2048, 2048
          %127 = vsyncadd [#allocation6], %s126
          %s128 = smul.addr %s25, 64
          %s129 = scalar_lea.hbm %s1, %s128
          %s130 = sshll.u32 [#allocation5], 4
          %s131 = int_to_ptr.vmem [resolvable:$true] %s130
          %136 = dma.hbm_to_vmem [thread:$0]  %s129, 2048, %s131, [#allocation6], 64, 64, 4
        $region16: #{generator_forward.7} parent=11 // pred_fallthru
          _
      $region12: #{generator_forward.7} parent=5 // pred_fallthru
        _
      %p137 = scmp.lt.s32.totalorder %s15, 4
      // Predicated region
      $region17: #{generator_forward.7} parent=5 // pred_check
        %p138 = pneg %p137
      $region18: #{generator_forward.7} parent=5 // pred_check_branch
        %140 = sbr.rel (%p138) target = $region20
      $region19: #{generator_forward.7} parent=5 // pred_region
        // Predicated region
        $region21: #{generator_forward.7} parent=19 // pred_check
          %p141 = pneg %p47
        $region22: #{generator_forward.7} parent=19 // pred_check_branch
          %143 = sbr.rel (%p141) target = $region24
        $region23: #{generator_forward.7} parent=19 // pred_region
          %s144 = sand.u32 %s37, 1
          %s145 = scalar_lea.sflag [#allocation3], %s144
          %s146 = sand.u32 %s37, 1
          %s147 = smul.addr %s146, 512
          %s148 = scalar_lea.vmem [#allocation2], %s147
          %s149 = smul.u32 64, %s22
          %s151 = ssub.s32 8192, 8192
          %152 = vsyncadd %s145, %s151
          %s153 = smul.addr %s149, 2
          %s154 = smul.addr %s153, 64
          %s155 = scalar_lea.hbm %s0, %s154
          %s156 = sshll.u32 %s148, 4
          %s157 = int_to_ptr.vmem [resolvable:$true] %s156
          %162 = dma.hbm_to_vmem [thread:$0]  %s155, 8192, %s157, %s145, 128, 128, 8
        $region24: #{generator_forward.7} parent=19 // pred_fallthru
          _
      $region20: #{generator_forward.7} parent=5 // pred_fallthru
        _
      %p163 = scmp.le.s32.totalorder 1, %s15
      %p164 = scmp.lt.s32.totalorder %s15, 5
      %p165 = pnand %p163, %p164
      %p166 = pneg %p165
      // Predicated region
      $region25: #{generator_forward.7} parent=5 // pred_check
        _
      $region26: #{generator_forward.7} parent=5 // pred_check_branch
        %168 = sbr.rel (%p165) target = $region28
      $region27: #{generator_forward.7} parent=5 // pred_region
        %s169 = ssub.s32 %s15, 1
        %s170 = sand.u32 %s40, 1
        %s171 = scalar_lea.sflag [#allocation3], %s170
        %s172 = sand.u32 %s40, 1
        %s173 = smul.addr %s172, 512
        %s174 = scalar_lea.vmem [#allocation2], %s173
        // Predicated region
        $region29: #{generator_forward.7} parent=27 // pred_check
          %p175 = pneg %p53
        $region30: #{generator_forward.7} parent=27 // pred_check_branch
          %177 = sbr.rel (%p175) target = $region32
        $region31: #{generator_forward.7} parent=27 // pred_region
          %178 = dma.done %s171, 8192
        $region32: #{generator_forward.7} parent=27 // pred_fallthru
          _
        // Predicated region
        $region33: #{generator_forward.7} parent=27 // pred_check
          %p179 = pneg %p79
        $region34: #{generator_forward.7} parent=27 // pred_check_branch
          %181 = sbr.rel (%p179) target = $region36
        $region35: #{generator_forward.7} parent=27 // pred_region
          %182 = dma.done [#allocation6], 2048
        $region36: #{generator_forward.7} parent=27 // pred_fallthru
          _
        %s183 = sand.u32 %s40, 1
        %s184 = scalar_lea.sflag [#allocation3], %s183
        %s185 = sand.u32 %s40, 1
        %s186 = smul.addr %s185, 512
        %s187 = scalar_lea.vmem [#allocation2], %s186
        %p188 = pneg %p53
        %p189 = pneg %p50
        %p190 = pneg %p79
        %p191 = pneg %p76
        %p192 = pneg %p107
        %p193 = pneg %p104
        %s194 = sand.u32 %s94, 1
        %s195 = scalar_lea.sflag [#allocation4], %s194
        %s196 = sand.u32 %s94, 1
        %s197 = smul.addr %s196, 512
        %s198 = scalar_lea.vmem [#allocation7], %s197
        %s199 = smul.u32 64, %s24
        %s200 = smul.u32 64, %s24
        %v202 = vld [vmem:[%s174] sm:$0xff]
        %v203 = vld [vmem:[%s174 + $0x8] sm:$0xff]
        %v204 = vld [vmem:[%s174 + $0x10] sm:$0xff]
        %v205 = vld [vmem:[%s174 + $0x18] sm:$0xff]
        %v206 = vld [vmem:[%s174 + $0x20] sm:$0xff]
        %v207 = vld [vmem:[%s174 + $0x28] sm:$0xff]
        %v208 = vld [vmem:[%s174 + $0x30] sm:$0xff]
        %v209 = vld [vmem:[%s174 + $0x38] sm:$0xff]
        %v210 = vld [vmem:[%s174 + $0x40] sm:$0xff]
        %v211 = vld [vmem:[%s174 + $0x48] sm:$0xff]
        %v212 = vld [vmem:[%s174 + $0x50] sm:$0xff]
        %v213 = vld [vmem:[%s174 + $0x58] sm:$0xff]
        %v214 = vld [vmem:[%s174 + $0x60] sm:$0xff]
        %v215 = vld [vmem:[%s174 + $0x68] sm:$0xff]
        %v216 = vld [vmem:[%s174 + $0x70] sm:$0xff]
        %v217 = vld [vmem:[%s174 + $0x78] sm:$0xff]
        %v218 = vld [vmem:[%s174 + $0x80] sm:$0xff]
        %v219 = vld [vmem:[%s174 + $0x88] sm:$0xff]
        %v220 = vld [vmem:[%s174 + $0x90] sm:$0xff]
        %v221 = vld [vmem:[%s174 + $0x98] sm:$0xff]
        %v222 = vld [vmem:[%s174 + $0xa0] sm:$0xff]
        %v223 = vld [vmem:[%s174 + $0xa8] sm:$0xff]
        %v224 = vld [vmem:[%s174 + $0xb0] sm:$0xff]
        %v225 = vld [vmem:[%s174 + $0xb8] sm:$0xff]
        %v226 = vld [vmem:[%s174 + $0xc0] sm:$0xff]
        %v227 = vld [vmem:[%s174 + $0xc8] sm:$0xff]
        %v228 = vld [vmem:[%s174 + $0xd0] sm:$0xff]
        %v229 = vld [vmem:[%s174 + $0xd8] sm:$0xff]
        %v230 = vld [vmem:[%s174 + $0xe0] sm:$0xff]
        %v231 = vld [vmem:[%s174 + $0xe8] sm:$0xff]
        %v232 = vld [vmem:[%s174 + $0xf0] sm:$0xff]
        %v233 = vld [vmem:[%s174 + $0xf8] sm:$0xff]
        %v234 = vld [vmem:[%s174 + $0x100] sm:$0xff]
        %v235 = vld [vmem:[%s174 + $0x108] sm:$0xff]
        %v236 = vld [vmem:[%s174 + $0x110] sm:$0xff]
        %v237 = vld [vmem:[%s174 + $0x118] sm:$0xff]
        %v238 = vld [vmem:[%s174 + $0x120] sm:$0xff]
        %v239 = vld [vmem:[%s174 + $0x128] sm:$0xff]
        %v240 = vld [vmem:[%s174 + $0x130] sm:$0xff]
        %v241 = vld [vmem:[%s174 + $0x138] sm:$0xff]
        %v242 = vld [vmem:[%s174 + $0x140] sm:$0xff]
        %v243 = vld [vmem:[%s174 + $0x148] sm:$0xff]
        %v244 = vld [vmem:[%s174 + $0x150] sm:$0xff]
        %v245 = vld [vmem:[%s174 + $0x158] sm:$0xff]
        %v246 = vld [vmem:[%s174 + $0x160] sm:$0xff]
        %v247 = vld [vmem:[%s174 + $0x168] sm:$0xff]
        %v248 = vld [vmem:[%s174 + $0x170] sm:$0xff]
        %v249 = vld [vmem:[%s174 + $0x178] sm:$0xff]
        %v250 = vld [vmem:[%s174 + $0x180] sm:$0xff]
        %v251 = vld [vmem:[%s174 + $0x188] sm:$0xff]
        %v252 = vld [vmem:[%s174 + $0x190] sm:$0xff]
        %v253 = vld [vmem:[%s174 + $0x198] sm:$0xff]
        %v254 = vld [vmem:[%s174 + $0x1a0] sm:$0xff]
        %v255 = vld [vmem:[%s174 + $0x1a8] sm:$0xff]
        %v256 = vld [vmem:[%s174 + $0x1b0] sm:$0xff]
        %v257 = vld [vmem:[%s174 + $0x1b8] sm:$0xff]
        %v258 = vld [vmem:[%s174 + $0x1c0] sm:$0xff]
        %v259 = vld [vmem:[%s174 + $0x1c8] sm:$0xff]
        %v260 = vld [vmem:[%s174 + $0x1d0] sm:$0xff]
        %v261 = vld [vmem:[%s174 + $0x1d8] sm:$0xff]
        %v262 = vld [vmem:[%s174 + $0x1e0] sm:$0xff]
        %v263 = vld [vmem:[%s174 + $0x1e8] sm:$0xff]
        %v264 = vld [vmem:[%s174 + $0x1f0] sm:$0xff]
        %v265 = vld [vmem:[%s174 + $0x1f8] sm:$0xff]
        %v266 = vld [vmem:[#allocation5] sm:$0xf]
        %v267 = vld [vmem:[#allocation5 + $0x4] sm:$0xf]
        %v268 = vld [vmem:[#allocation5 + $0x8] sm:$0xf]
        %v269 = vld [vmem:[#allocation5 + $0xc] sm:$0xf]
        %v270 = vld [vmem:[#allocation5 + $0x10] sm:$0xf]
        %v271 = vld [vmem:[#allocation5 + $0x14] sm:$0xf]
        %v272 = vld [vmem:[#allocation5 + $0x18] sm:$0xf]
        %v273 = vld [vmem:[#allocation5 + $0x1c] sm:$0xf]
        %v274 = vld [vmem:[#allocation5 + $0x20] sm:$0xf]
        %v275 = vld [vmem:[#allocation5 + $0x24] sm:$0xf]
        %v276 = vld [vmem:[#allocation5 + $0x28] sm:$0xf]
        %v277 = vld [vmem:[#allocation5 + $0x2c] sm:$0xf]
        %v278 = vld [vmem:[#allocation5 + $0x30] sm:$0xf]
        %v279 = vld [vmem:[#allocation5 + $0x34] sm:$0xf]
        %v280 = vld [vmem:[#allocation5 + $0x38] sm:$0xf]
        %v281 = vld [vmem:[#allocation5 + $0x3c] sm:$0xf]
        %v282 = vld [vmem:[#allocation5 + $0x40] sm:$0xf]
        %v283 = vld [vmem:[#allocation5 + $0x44] sm:$0xf]
        %v284 = vld [vmem:[#allocation5 + $0x48] sm:$0xf]
        %v285 = vld [vmem:[#allocation5 + $0x4c] sm:$0xf]
        %v286 = vld [vmem:[#allocation5 + $0x50] sm:$0xf]
        %v287 = vld [vmem:[#allocation5 + $0x54] sm:$0xf]
        %v288 = vld [vmem:[#allocation5 + $0x58] sm:$0xf]
        %v289 = vld [vmem:[#allocation5 + $0x5c] sm:$0xf]
        %v290 = vld [vmem:[#allocation5 + $0x60] sm:$0xf]
        %v291 = vld [vmem:[#allocation5 + $0x64] sm:$0xf]
        %v292 = vld [vmem:[#allocation5 + $0x68] sm:$0xf]
        %v293 = vld [vmem:[#allocation5 + $0x6c] sm:$0xf]
        %v294 = vld [vmem:[#allocation5 + $0x70] sm:$0xf]
        %v295 = vld [vmem:[#allocation5 + $0x74] sm:$0xf]
        %v296 = vld [vmem:[#allocation5 + $0x78] sm:$0xf]
        %v297 = vld [vmem:[#allocation5 + $0x7c] sm:$0xf]
        %v362 = vunpack.c.l.b16 %v202
        %v363 = vunpack.c.h.b16 %v202
        %v364 = vunpack.c.l.b16 %v203
        %v365 = vunpack.c.h.b16 %v203
        %v366 = vunpack.c.l.b16 %v204
        %v367 = vunpack.c.h.b16 %v204
        %v368 = vunpack.c.l.b16 %v205
        %v369 = vunpack.c.h.b16 %v205
        %v370 = vunpack.c.l.b16 %v206
        %v371 = vunpack.c.h.b16 %v206
        %v372 = vunpack.c.l.b16 %v207
        %v373 = vunpack.c.h.b16 %v207
        %v374 = vunpack.c.l.b16 %v208
        %v375 = vunpack.c.h.b16 %v208
        %v376 = vunpack.c.l.b16 %v209
        %v377 = vunpack.c.h.b16 %v209
        %v378 = vunpack.c.l.b16 %v210
        %v379 = vunpack.c.h.b16 %v210
        %v380 = vunpack.c.l.b16 %v211
        %v381 = vunpack.c.h.b16 %v211
        %v382 = vunpack.c.l.b16 %v212
        %v383 = vunpack.c.h.b16 %v212
        %v384 = vunpack.c.l.b16 %v213
        %v385 = vunpack.c.h.b16 %v213
        %v386 = vunpack.c.l.b16 %v214
        %v387 = vunpack.c.h.b16 %v214
        %v388 = vunpack.c.l.b16 %v215
        %v389 = vunpack.c.h.b16 %v215
        %v390 = vunpack.c.l.b16 %v216
        %v391 = vunpack.c.h.b16 %v216
        %v392 = vunpack.c.l.b16 %v217
        %v393 = vunpack.c.h.b16 %v217
        %v394 = vunpack.c.l.b16 %v218
        %v395 = vunpack.c.h.b16 %v218
        %v396 = vunpack.c.l.b16 %v219
        %v397 = vunpack.c.h.b16 %v219
        %v398 = vunpack.c.l.b16 %v220
        %v399 = vunpack.c.h.b16 %v220
        %v400 = vunpack.c.l.b16 %v221
        %v401 = vunpack.c.h.b16 %v221
        %v402 = vunpack.c.l.b16 %v222
        %v403 = vunpack.c.h.b16 %v222
        %v404 = vunpack.c.l.b16 %v223
        %v405 = vunpack.c.h.b16 %v223
        %v406 = vunpack.c.l.b16 %v224
        %v407 = vunpack.c.h.b16 %v224
        %v408 = vunpack.c.l.b16 %v225
        %v409 = vunpack.c.h.b16 %v225
        %v410 = vunpack.c.l.b16 %v226
        %v411 = vunpack.c.h.b16 %v226
        %v412 = vunpack.c.l.b16 %v227
        %v413 = vunpack.c.h.b16 %v227
        %v414 = vunpack.c.l.b16 %v228
        %v415 = vunpack.c.h.b16 %v228
        %v416 = vunpack.c.l.b16 %v229
        %v417 = vunpack.c.h.b16 %v229
        %v418 = vunpack.c.l.b16 %v230
        %v419 = vunpack.c.h.b16 %v230
        %v420 = vunpack.c.l.b16 %v231
        %v421 = vunpack.c.h.b16 %v231
        %v422 = vunpack.c.l.b16 %v232
        %v423 = vunpack.c.h.b16 %v232
        %v424 = vunpack.c.l.b16 %v233
        %v425 = vunpack.c.h.b16 %v233
        %v426 = vunpack.c.l.b16 %v234
        %v427 = vunpack.c.h.b16 %v234
        %v428 = vunpack.c.l.b16 %v235
        %v429 = vunpack.c.h.b16 %v235
        %v430 = vunpack.c.l.b16 %v236
        %v431 = vunpack.c.h.b16 %v236
        %v432 = vunpack.c.l.b16 %v237
        %v433 = vunpack.c.h.b16 %v237
        %v434 = vunpack.c.l.b16 %v238
        %v435 = vunpack.c.h.b16 %v238
        %v436 = vunpack.c.l.b16 %v239
        %v437 = vunpack.c.h.b16 %v239
        %v438 = vunpack.c.l.b16 %v240
        %v439 = vunpack.c.h.b16 %v240
        %v440 = vunpack.c.l.b16 %v241
        %v441 = vunpack.c.h.b16 %v241
        %v442 = vunpack.c.l.b16 %v242
        %v443 = vunpack.c.h.b16 %v242
        %v444 = vunpack.c.l.b16 %v243
        %v445 = vunpack.c.h.b16 %v243
        %v446 = vunpack.c.l.b16 %v244
        %v447 = vunpack.c.h.b16 %v244
        %v448 = vunpack.c.l.b16 %v245
        %v449 = vunpack.c.h.b16 %v245
        %v450 = vunpack.c.l.b16 %v246
        %v451 = vunpack.c.h.b16 %v246
        %v452 = vunpack.c.l.b16 %v247
        %v453 = vunpack.c.h.b16 %v247
        %v454 = vunpack.c.l.b16 %v248
        %v455 = vunpack.c.h.b16 %v248
        %v456 = vunpack.c.l.b16 %v249
        %v457 = vunpack.c.h.b16 %v249
        %v458 = vunpack.c.l.b16 %v250
        %v459 = vunpack.c.h.b16 %v250
        %v460 = vunpack.c.l.b16 %v251
        %v461 = vunpack.c.h.b16 %v251
        %v462 = vunpack.c.l.b16 %v252
        %v463 = vunpack.c.h.b16 %v252
        %v464 = vunpack.c.l.b16 %v253
        %v465 = vunpack.c.h.b16 %v253
        %v466 = vunpack.c.l.b16 %v254
        %v467 = vunpack.c.h.b16 %v254
        %v468 = vunpack.c.l.b16 %v255
        %v469 = vunpack.c.h.b16 %v255
        %v470 = vunpack.c.l.b16 %v256
        %v471 = vunpack.c.h.b16 %v256
        %v472 = vunpack.c.l.b16 %v257
        %v473 = vunpack.c.h.b16 %v257
        %v474 = vunpack.c.l.b16 %v258
        %v475 = vunpack.c.h.b16 %v258
        %v476 = vunpack.c.l.b16 %v259
        %v477 = vunpack.c.h.b16 %v259
        %v478 = vunpack.c.l.b16 %v260
        %v479 = vunpack.c.h.b16 %v260
        %v480 = vunpack.c.l.b16 %v261
        %v481 = vunpack.c.h.b16 %v261
        %v482 = vunpack.c.l.b16 %v262
        %v483 = vunpack.c.h.b16 %v262
        %v484 = vunpack.c.l.b16 %v263
        %v485 = vunpack.c.h.b16 %v263
        %v486 = vunpack.c.l.b16 %v264
        %v487 = vunpack.c.h.b16 %v264
        %v488 = vunpack.c.l.b16 %v265
        %v489 = vunpack.c.h.b16 %v265
        %v490 = vpack.c.b16 %v364, %v362
        %v491 = vpack.c.b16 %v365, %v363
        %v492 = vpack.c.b16 %v368, %v366
        %v493 = vpack.c.b16 %v369, %v367
        %v494 = vpack.c.b16 %v372, %v370
        %v495 = vpack.c.b16 %v373, %v371
        %v496 = vpack.c.b16 %v376, %v374
        %v497 = vpack.c.b16 %v377, %v375
        %v498 = vpack.c.b16 %v380, %v378
        %v499 = vpack.c.b16 %v381, %v379
        %v500 = vpack.c.b16 %v384, %v382
        %v501 = vpack.c.b16 %v385, %v383
        %v502 = vpack.c.b16 %v388, %v386
        %v503 = vpack.c.b16 %v389, %v387
        %v504 = vpack.c.b16 %v392, %v390
        %v505 = vpack.c.b16 %v393, %v391
        %v506 = vpack.c.b16 %v396, %v394
        %v507 = vpack.c.b16 %v397, %v395
        %v508 = vpack.c.b16 %v400, %v398
        %v509 = vpack.c.b16 %v401, %v399
        %v510 = vpack.c.b16 %v404, %v402
        %v511 = vpack.c.b16 %v405, %v403
        %v512 = vpack.c.b16 %v408, %v406
        %v513 = vpack.c.b16 %v409, %v407
        %v514 = vpack.c.b16 %v412, %v410
        %v515 = vpack.c.b16 %v413, %v411
        %v516 = vpack.c.b16 %v416, %v414
        %v517 = vpack.c.b16 %v417, %v415
        %v518 = vpack.c.b16 %v420, %v418
        %v519 = vpack.c.b16 %v421, %v419
        %v520 = vpack.c.b16 %v424, %v422
        %v521 = vpack.c.b16 %v425, %v423
        %v522 = vpack.c.b16 %v428, %v426
        %v523 = vpack.c.b16 %v429, %v427
        %v524 = vpack.c.b16 %v432, %v430
        %v525 = vpack.c.b16 %v433, %v431
        %v526 = vpack.c.b16 %v436, %v434
        %v527 = vpack.c.b16 %v437, %v435
        %v528 = vpack.c.b16 %v440, %v438
        %v529 = vpack.c.b16 %v441, %v439
        %v530 = vpack.c.b16 %v444, %v442
        %v531 = vpack.c.b16 %v445, %v443
        %v532 = vpack.c.b16 %v448, %v446
        %v533 = vpack.c.b16 %v449, %v447
        %v534 = vpack.c.b16 %v452, %v450
        %v535 = vpack.c.b16 %v453, %v451
        %v536 = vpack.c.b16 %v456, %v454
        %v537 = vpack.c.b16 %v457, %v455
        %v538 = vpack.c.b16 %v460, %v458
        %v539 = vpack.c.b16 %v461, %v459
        %v540 = vpack.c.b16 %v464, %v462
        %v541 = vpack.c.b16 %v465, %v463
        %v542 = vpack.c.b16 %v468, %v466
        %v543 = vpack.c.b16 %v469, %v467
        %v544 = vpack.c.b16 %v472, %v470
        %v545 = vpack.c.b16 %v473, %v471
        %v546 = vpack.c.b16 %v476, %v474
        %v547 = vpack.c.b16 %v477, %v475
        %v548 = vpack.c.b16 %v480, %v478
        %v549 = vpack.c.b16 %v481, %v479
        %v550 = vpack.c.b16 %v484, %v482
        %v551 = vpack.c.b16 %v485, %v483
        %v552 = vpack.c.b16 %v488, %v486
        %v553 = vpack.c.b16 %v489, %v487
        %v650 = vunpack.c.l.b16 %v266
        %v651 = vunpack.c.l.b16 %v267
        %v652 = vunpack.c.l.b16 %v268
        %v653 = vunpack.c.l.b16 %v269
        %v654 = vunpack.c.l.b16 %v270
        %v655 = vunpack.c.l.b16 %v271
        %v656 = vunpack.c.l.b16 %v272
        %v657 = vunpack.c.l.b16 %v273
        %v658 = vunpack.c.l.b16 %v274
        %v659 = vunpack.c.l.b16 %v275
        %v660 = vunpack.c.l.b16 %v276
        %v661 = vunpack.c.l.b16 %v277
        %v662 = vunpack.c.l.b16 %v278
        %v663 = vunpack.c.l.b16 %v279
        %v664 = vunpack.c.l.b16 %v280
        %v665 = vunpack.c.l.b16 %v281
        %v666 = vunpack.c.l.b16 %v282
        %v667 = vunpack.c.l.b16 %v283
        %v668 = vunpack.c.l.b16 %v284
        %v669 = vunpack.c.l.b16 %v285
        %v670 = vunpack.c.l.b16 %v286
        %v671 = vunpack.c.l.b16 %v287
        %v672 = vunpack.c.l.b16 %v288
        %v673 = vunpack.c.l.b16 %v289
        %v674 = vunpack.c.l.b16 %v290
        %v675 = vunpack.c.l.b16 %v291
        %v676 = vunpack.c.l.b16 %v292
        %v677 = vunpack.c.l.b16 %v293
        %v678 = vunpack.c.l.b16 %v294
        %v679 = vunpack.c.l.b16 %v295
        %v680 = vunpack.c.l.b16 %v296
        %v681 = vunpack.c.l.b16 %v297
        %v682 = vpack.c.b16 %v651, %v650
        %v683 = vpack.c.b16 %v653, %v652
        %v684 = vpack.c.b16 %v655, %v654
        %v685 = vpack.c.b16 %v657, %v656
        %v686 = vpack.c.b16 %v659, %v658
        %v687 = vpack.c.b16 %v661, %v660
        %v688 = vpack.c.b16 %v663, %v662
        %v689 = vpack.c.b16 %v665, %v664
        %v690 = vpack.c.b16 %v667, %v666
        %v691 = vpack.c.b16 %v669, %v668
        %v692 = vpack.c.b16 %v671, %v670
        %v693 = vpack.c.b16 %v673, %v672
        %v694 = vpack.c.b16 %v675, %v674
        %v695 = vpack.c.b16 %v677, %v676
        %v696 = vpack.c.b16 %v679, %v678
        %v697 = vpack.c.b16 %v681, %v680
        %714 = vmatprep.subr.bf16.mxu0 0
        %715 = vmatpush1.bf16.msra.mxu0 %v682
        %716 = vmatprep.subr.bf16.mxu0 0
        %717 = vmatpush1.bf16.msra.mxu0 %v683
        %718 = vmatprep.subr.bf16.mxu0 0
        %719 = vmatpush1.bf16.msra.mxu0 %v684
        %720 = vmatprep.subr.bf16.mxu0 0
        %721 = vmatpush1.bf16.msra.mxu0 %v685
        %722 = vmatprep.subr.bf16.mxu0 0
        %723 = vmatpush1.bf16.msra.mxu0 %v686
        %724 = vmatprep.subr.bf16.mxu0 0
        %725 = vmatpush1.bf16.msra.mxu0 %v687
        %726 = vmatprep.subr.bf16.mxu0 0
        %727 = vmatpush1.bf16.msra.mxu0 %v688
        %728 = vmatprep.subr.bf16.mxu0 0
        %729 = vmatpush1.bf16.msra.mxu0 %v689
        %730 = vmatprep.subr.bf16.mxu0 0
        %731 = vmatpush1.bf16.msra.mxu0 %v690
        %732 = vmatprep.subr.bf16.mxu0 0
        %733 = vmatpush1.bf16.msra.mxu0 %v691
        %734 = vmatprep.subr.bf16.mxu0 0
        %735 = vmatpush1.bf16.msra.mxu0 %v692
        %736 = vmatprep.subr.bf16.mxu0 0
        %737 = vmatpush1.bf16.msra.mxu0 %v693
        %738 = vmatprep.subr.bf16.mxu0 0
        %739 = vmatpush1.bf16.msra.mxu0 %v694
        %740 = vmatprep.subr.bf16.mxu0 0
        %741 = vmatpush1.bf16.msra.mxu0 %v695
        %742 = vmatprep.subr.bf16.mxu0 0
        %743 = vmatpush1.bf16.msra.mxu0 %v696
        %744 = vmatprep.subr.bf16.mxu0 0
        %745 = vmatpush1.bf16.msra.mxu0 %v697
        %746 = vmatprep.mubr.bf16.mxu0 %v491
        %747 = vmatmul.mubr.bf16.gmra.mrb[0].mxu0 %v490
        %v748 = vpop.f32.mrb[0].mxu0
        %v749 = vadd.f32 0.0, %v748
        %v750 = vpop.f32.mrb[0].mxu0
        %v751 = vpop.f32.mrb[0].mxu0
        %v752 = vadd.f32 0.0, %v751
        %v753 = vpop.f32.mrb[0].mxu0
        %754 = vmatprep.mubr.bf16.mxu0 %v493
        %755 = vmatmul.mubr.bf16.gmra.mrb[0].mxu0 %v492
        %v756 = vpop.f32.mrb[0].mxu0
        %v757 = vadd.f32 0.0, %v756
        %v758 = vpop.f32.mrb[0].mxu0
        %v759 = vpop.f32.mrb[0].mxu0
        %v760 = vadd.f32 0.0, %v759
        %v761 = vpop.f32.mrb[0].mxu0
        %762 = vmatprep.mubr.bf16.mxu0 %v495
        %763 = vmatmul.mubr.bf16.gmra.mrb[0].mxu0 %v494
        %v764 = vpop.f32.mrb[0].mxu0
        %v765 = vadd.f32 0.0, %v764
        %v766 = vpop.f32.mrb[0].mxu0
        %v767 = vpop.f32.mrb[0].mxu0
        %v768 = vadd.f32 0.0, %v767
        %v769 = vpop.f32.mrb[0].mxu0
        %770 = vmatprep.mubr.bf16.mxu0 %v497
        %771 = vmatmul.mubr.bf16.gmra.mrb[0].mxu0 %v496
        %v772 = vpop.f32.mrb[0].mxu0
        %v773 = vadd.f32 0.0, %v772
        %v774 = vpop.f32.mrb[0].mxu0
        %v775 = vpop.f32.mrb[0].mxu0
        %v776 = vadd.f32 0.0, %v775
        %v777 = vpop.f32.mrb[0].mxu0
        %778 = vmatprep.mubr.bf16.mxu0 %v499
        %779 = vmatmul.mubr.bf16.gmra.mrb[0].mxu0 %v498
        %v780 = vpop.f32.mrb[0].mxu0
        %v781 = vadd.f32 0.0, %v780
        %v782 = vpop.f32.mrb[0].mxu0
        %v783 = vpop.f32.mrb[0].mxu0
        %v784 = vadd.f32 0.0, %v783
        %v785 = vpop.f32.mrb[0].mxu0
        %786 = vmatprep.mubr.bf16.mxu0 %v501
        %787 = vmatmul.mubr.bf16.gmra.mrb[0].mxu0 %v500
        %v788 = vpop.f32.mrb[0].mxu0
        %v789 = vadd.f32 0.0, %v788
        %v790 = vpop.f32.mrb[0].mxu0
        %v791 = vpop.f32.mrb[0].mxu0
        %v792 = vadd.f32 0.0, %v791
        %v793 = vpop.f32.mrb[0].mxu0
        %794 = vmatprep.mubr.bf16.mxu0 %v503
        %795 = vmatmul.mubr.bf16.gmra.mrb[0].mxu0 %v502
        %v796 = vpop.f32.mrb[0].mxu0
        %v797 = vadd.f32 0.0, %v796
        %v798 = vpop.f32.mrb[0].mxu0
        %v799 = vpop.f32.mrb[0].mxu0
        %v800 = vadd.f32 0.0, %v799
        %v801 = vpop.f32.mrb[0].mxu0
        %802 = vmatprep.mubr.bf16.mxu0 %v505
        %803 = vmatmul.mubr.bf16.gmra.mrb[0].mxu0 %v504
        %v804 = vpop.f32.mrb[0].mxu0
        %v805 = vadd.f32 0.0, %v804
        %v806 = vpop.f32.mrb[0].mxu0
        %v807 = vpop.f32.mrb[0].mxu0
        %v808 = vadd.f32 0.0, %v807
        %v809 = vpop.f32.mrb[0].mxu0
        %810 = vmatprep.mubr.bf16.mxu0 %v507
        %811 = vmatmul.mubr.bf16.gmra.mrb[0].mxu0 %v506
        %v812 = vpop.f32.mrb[0].mxu0
        %v813 = vadd.f32 0.0, %v812
        %v814 = vpop.f32.mrb[0].mxu0
        %v815 = vpop.f32.mrb[0].mxu0
        %v816 = vadd.f32 0.0, %v815
        %v817 = vpop.f32.mrb[0].mxu0
        %818 = vmatprep.mubr.bf16.mxu0 %v509
        %819 = vmatmul.mubr.bf16.gmra.mrb[0].mxu0 %v508
        %v820 = vpop.f32.mrb[0].mxu0
        %v821 = vadd.f32 0.0, %v820
        %v822 = vpop.f32.mrb[0].mxu0
        %v823 = vpop.f32.mrb[0].mxu0
        %v824 = vadd.f32 0.0, %v823
        %v825 = vpop.f32.mrb[0].mxu0
        %826 = vmatprep.mubr.bf16.mxu0 %v511
        %827 = vmatmul.mubr.bf16.gmra.mrb[0].mxu0 %v510
        %v828 = vpop.f32.mrb[0].mxu0
        %v829 = vadd.f32 0.0, %v828
        %v830 = vpop.f32.mrb[0].mxu0
        %v831 = vpop.f32.mrb[0].mxu0
        %v832 = vadd.f32 0.0, %v831
        %v833 = vpop.f32.mrb[0].mxu0
        %834 = vmatprep.mubr.bf16.mxu0 %v513
        %835 = vmatmul.mubr.bf16.gmra.mrb[0].mxu0 %v512
        %v836 = vpop.f32.mrb[0].mxu0
        %v837 = vadd.f32 0.0, %v836
        %v838 = vpop.f32.mrb[0].mxu0
        %v839 = vpop.f32.mrb[0].mxu0
        %v840 = vadd.f32 0.0, %v839
        %v841 = vpop.f32.mrb[0].mxu0
        %842 = vmatprep.mubr.bf16.mxu0 %v515
        %843 = vmatmul.mubr.bf16.gmra.mrb[0].mxu0 %v514
        %v844 = vpop.f32.mrb[0].mxu0
        %v845 = vadd.f32 0.0, %v844
        %v846 = vpop.f32.mrb[0].mxu0
        %v847 = vpop.f32.mrb[0].mxu0
        %v848 = vadd.f32 0.0, %v847
        %v849 = vpop.f32.mrb[0].mxu0
        %850 = vmatprep.mubr.bf16.mxu0 %v517
        %851 = vmatmul.mubr.bf16.gmra.mrb[0].mxu0 %v516
        %v852 = vpop.f32.mrb[0].mxu0
        %v853 = vadd.f32 0.0, %v852
        %v854 = vpop.f32.mrb[0].mxu0
        %v855 = vpop.f32.mrb[0].mxu0
        %v856 = vadd.f32 0.0, %v855
        %v857 = vpop.f32.mrb[0].mxu0
        %858 = vmatprep.mubr.bf16.mxu0 %v519
        %859 = vmatmul.mubr.bf16.gmra.mrb[0].mxu0 %v518
        %v860 = vpop.f32.mrb[0].mxu0
        %v861 = vadd.f32 0.0, %v860
        %v862 = vpop.f32.mrb[0].mxu0
        %v863 = vpop.f32.mrb[0].mxu0
        %v864 = vadd.f32 0.0, %v863
        %v865 = vpop.f32.mrb[0].mxu0
        %866 = vmatprep.mubr.bf16.mxu0 %v521
        %867 = vmatmul.mubr.bf16.gmra.mrb[0].mxu0 %v520
        %v868 = vpop.f32.mrb[0].mxu0
        %v869 = vadd.f32 0.0, %v868
        %v870 = vpop.f32.mrb[0].mxu0
        %v871 = vpop.f32.mrb[0].mxu0
        %v872 = vadd.f32 0.0, %v871
        %v873 = vpop.f32.mrb[0].mxu0
        %874 = vmatprep.mubr.bf16.mxu0 %v523
        %875 = vmatmul.mubr.bf16.gmra.mrb[0].mxu0 %v522
        %v876 = vpop.f32.mrb[0].mxu0
        %v877 = vadd.f32 0.0, %v876
        %v878 = vpop.f32.mrb[0].mxu0
        %v879 = vpop.f32.mrb[0].mxu0
        %v880 = vadd.f32 0.0, %v879
        %v881 = vpop.f32.mrb[0].mxu0
        %882 = vmatprep.mubr.bf16.mxu0 %v525
        %883 = vmatmul.mubr.bf16.gmra.mrb[0].mxu0 %v524
        %v884 = vpop.f32.mrb[0].mxu0
        %v885 = vadd.f32 0.0, %v884
        %v886 = vpop.f32.mrb[0].mxu0
        %v887 = vpop.f32.mrb[0].mxu0
        %v888 = vadd.f32 0.0, %v887
        %v889 = vpop.f32.mrb[0].mxu0
        %890 = vmatprep.mubr.bf16.mxu0 %v527
        %891 = vmatmul.mubr.bf16.gmra.mrb[0].mxu0 %v526
        %v892 = vpop.f32.mrb[0].mxu0
        %v893 = vadd.f32 0.0, %v892
        %v894 = vpop.f32.mrb[0].mxu0
        %v895 = vpop.f32.mrb[0].mxu0
        %v896 = vadd.f32 0.0, %v895
        %v897 = vpop.f32.mrb[0].mxu0
        %898 = vmatprep.mubr.bf16.mxu0 %v529
        %899 = vmatmul.mubr.bf16.gmra.mrb[0].mxu0 %v528
        %v900 = vpop.f32.mrb[0].mxu0
        %v901 = vadd.f32 0.0, %v900
        %v902 = vpop.f32.mrb[0].mxu0
        %v903 = vpop.f32.mrb[0].mxu0
        %v904 = vadd.f32 0.0, %v903
        %v905 = vpop.f32.mrb[0].mxu0
        %906 = vmatprep.mubr.bf16.mxu0 %v531
        %907 = vmatmul.mubr.bf16.gmra.mrb[0].mxu0 %v530
        %v908 = vpop.f32.mrb[0].mxu0
        %v909 = vadd.f32 0.0, %v908
        %v910 = vpop.f32.mrb[0].mxu0
        %v911 = vpop.f32.mrb[0].mxu0
        %v912 = vadd.f32 0.0, %v911
        %v913 = vpop.f32.mrb[0].mxu0
        %914 = vmatprep.mubr.bf16.mxu0 %v533
        %915 = vmatmul.mubr.bf16.gmra.mrb[0].mxu0 %v532
        %v916 = vpop.f32.mrb[0].mxu0
        %v917 = vadd.f32 0.0, %v916
        %v918 = vpop.f32.mrb[0].mxu0
        %v919 = vpop.f32.mrb[0].mxu0
        %v920 = vadd.f32 0.0, %v919
        %v921 = vpop.f32.mrb[0].mxu0
        %922 = vmatprep.mubr.bf16.mxu0 %v535
        %923 = vmatmul.mubr.bf16.gmra.mrb[0].mxu0 %v534
        %v924 = vpop.f32.mrb[0].mxu0
        %v925 = vadd.f32 0.0, %v924
        %v926 = vpop.f32.mrb[0].mxu0
        %v927 = vpop.f32.mrb[0].mxu0
        %v928 = vadd.f32 0.0, %v927
        %v929 = vpop.f32.mrb[0].mxu0
        %930 = vmatprep.mubr.bf16.mxu0 %v537
        %931 = vmatmul.mubr.bf16.gmra.mrb[0].mxu0 %v536
        %v932 = vpop.f32.mrb[0].mxu0
        %v933 = vadd.f32 0.0, %v932
        %v934 = vpop.f32.mrb[0].mxu0
        %v935 = vpop.f32.mrb[0].mxu0
        %v936 = vadd.f32 0.0, %v935
        %v937 = vpop.f32.mrb[0].mxu0
        %938 = vmatprep.mubr.bf16.mxu0 %v539
        %939 = vmatmul.mubr.bf16.gmra.mrb[0].mxu0 %v538
        %v940 = vpop.f32.mrb[0].mxu0
        %v941 = vadd.f32 0.0, %v940
        %v942 = vpop.f32.mrb[0].mxu0
        %v943 = vpop.f32.mrb[0].mxu0
        %v944 = vadd.f32 0.0, %v943
        %v945 = vpop.f32.mrb[0].mxu0
        %946 = vmatprep.mubr.bf16.mxu0 %v541
        %947 = vmatmul.mubr.bf16.gmra.mrb[0].mxu0 %v540
        %v948 = vpop.f32.mrb[0].mxu0
        %v949 = vadd.f32 0.0, %v948
        %v950 = vpop.f32.mrb[0].mxu0
        %v951 = vpop.f32.mrb[0].mxu0
        %v952 = vadd.f32 0.0, %v951
        %v953 = vpop.f32.mrb[0].mxu0
        %954 = vmatprep.mubr.bf16.mxu0 %v543
        %955 = vmatmul.mubr.bf16.gmra.mrb[0].mxu0 %v542
        %v956 = vpop.f32.mrb[0].mxu0
        %v957 = vadd.f32 0.0, %v956
        %v958 = vpop.f32.mrb[0].mxu0
        %v959 = vpop.f32.mrb[0].mxu0
        %v960 = vadd.f32 0.0, %v959
        %v961 = vpop.f32.mrb[0].mxu0
        %962 = vmatprep.mubr.bf16.mxu0 %v545
        %963 = vmatmul.mubr.bf16.gmra.mrb[0].mxu0 %v544
        %v964 = vpop.f32.mrb[0].mxu0
        %v965 = vadd.f32 0.0, %v964
        %v966 = vpop.f32.mrb[0].mxu0
        %v967 = vpop.f32.mrb[0].mxu0
        %v968 = vadd.f32 0.0, %v967
        %v969 = vpop.f32.mrb[0].mxu0
        %970 = vmatprep.mubr.bf16.mxu0 %v547
        %971 = vmatmul.mubr.bf16.gmra.mrb[0].mxu0 %v546
        %v972 = vpop.f32.mrb[0].mxu0
        %v973 = vadd.f32 0.0, %v972
        %v974 = vpop.f32.mrb[0].mxu0
        %v975 = vpop.f32.mrb[0].mxu0
        %v976 = vadd.f32 0.0, %v975
        %v977 = vpop.f32.mrb[0].mxu0
        %978 = vmatprep.mubr.bf16.mxu0 %v549
        %979 = vmatmul.mubr.bf16.gmra.mrb[0].mxu0 %v548
        %v980 = vpop.f32.mrb[0].mxu0
        %v981 = vadd.f32 0.0, %v980
        %v982 = vpop.f32.mrb[0].mxu0
        %v983 = vpop.f32.mrb[0].mxu0
        %v984 = vadd.f32 0.0, %v983
        %v985 = vpop.f32.mrb[0].mxu0
        %986 = vmatprep.mubr.bf16.mxu0 %v551
        %987 = vmatmul.mubr.bf16.gmra.mrb[0].mxu0 %v550
        %v988 = vpop.f32.mrb[0].mxu0
        %v989 = vadd.f32 0.0, %v988
        %v990 = vpop.f32.mrb[0].mxu0
        %v991 = vpop.f32.mrb[0].mxu0
        %v992 = vadd.f32 0.0, %v991
        %v993 = vpop.f32.mrb[0].mxu0
        %994 = vmatprep.mubr.bf16.mxu0 %v553
        %995 = vmatmul.mubr.bf16.gmra.mrb[0].mxu0 %v552
        %v996 = vpop.f32.mrb[0].mxu0
        %v997 = vadd.f32 0.0, %v996
        %v998 = vpop.f32.mrb[0].mxu0
        %v999 = vpop.f32.mrb[0].mxu0
        %v1000 = vadd.f32 0.0, %v999
        %v1001 = vpop.f32.mrb[0].mxu0
        %1002 = vdwg.mxu0
        %v1003 = vtanh.pop %v749
        %v1004 = vtanh.pop %v752
        %v1005 = vtanh.pop %v757
        %v1006 = vtanh.pop %v760
        %v1007 = vtanh.pop %v765
        %v1008 = vtanh.pop %v768
        %v1009 = vtanh.pop %v773
        %v1010 = vtanh.pop %v776
        %v1011 = vtanh.pop %v781
        %v1012 = vtanh.pop %v784
        %v1013 = vtanh.pop %v789
        %v1014 = vtanh.pop %v792
        %v1015 = vtanh.pop %v797
        %v1016 = vtanh.pop %v800
        %v1017 = vtanh.pop %v805
        %v1018 = vtanh.pop %v808
        %v1019 = vtanh.pop %v813
        %v1020 = vtanh.pop %v816
        %v1021 = vtanh.pop %v821
        %v1022 = vtanh.pop %v824
        %v1023 = vtanh.pop %v829
        %v1024 = vtanh.pop %v832
        %v1025 = vtanh.pop %v837
        %v1026 = vtanh.pop %v840
        %v1027 = vtanh.pop %v845
        %v1028 = vtanh.pop %v848
        %v1029 = vtanh.pop %v853
        %v1030 = vtanh.pop %v856
        %v1031 = vtanh.pop %v861
        %v1032 = vtanh.pop %v864
        %v1033 = vtanh.pop %v869
        %v1034 = vtanh.pop %v872
        %v1035 = vtanh.pop %v877
        %v1036 = vtanh.pop %v880
        %v1037 = vtanh.pop %v885
        %v1038 = vtanh.pop %v888
        %v1039 = vtanh.pop %v893
        %v1040 = vtanh.pop %v896
        %v1041 = vtanh.pop %v901
        %v1042 = vtanh.pop %v904
        %v1043 = vtanh.pop %v909
        %v1044 = vtanh.pop %v912
        %v1045 = vtanh.pop %v917
        %v1046 = vtanh.pop %v920
        %v1047 = vtanh.pop %v925
        %v1048 = vtanh.pop %v928
        %v1049 = vtanh.pop %v933
        %v1050 = vtanh.pop %v936
        %v1051 = vtanh.pop %v941
        %v1052 = vtanh.pop %v944
        %v1053 = vtanh.pop %v949
        %v1054 = vtanh.pop %v952
        %v1055 = vtanh.pop %v957
        %v1056 = vtanh.pop %v960
        %v1057 = vtanh.pop %v965
        %v1058 = vtanh.pop %v968
        %v1059 = vtanh.pop %v973
        %v1060 = vtanh.pop %v976
        %v1061 = vtanh.pop %v981
        %v1062 = vtanh.pop %v984
        %v1063 = vtanh.pop %v989
        %v1064 = vtanh.pop %v992
        %v1065 = vtanh.pop %v997
        %v1066 = vtanh.pop %v1000
        %1067 = vst [vmem:[%s198] sm:$0xff] %v1003
        %1068 = vst [vmem:[%s198 + $0x8] sm:$0xff] %v1004
        %1069 = vst [vmem:[%s198 + $0x10] sm:$0xff] %v1005
        %1070 = vst [vmem:[%s198 + $0x18] sm:$0xff] %v1006
        %1071 = vst [vmem:[%s198 + $0x20] sm:$0xff] %v1007
        %1072 = vst [vmem:[%s198 + $0x28] sm:$0xff] %v1008
        %1073 = vst [vmem:[%s198 + $0x30] sm:$0xff] %v1009
        %1074 = vst [vmem:[%s198 + $0x38] sm:$0xff] %v1010
        %1075 = vst [vmem:[%s198 + $0x40] sm:$0xff] %v1011
        %1076 = vst [vmem:[%s198 + $0x48] sm:$0xff] %v1012
        %1077 = vst [vmem:[%s198 + $0x50] sm:$0xff] %v1013
        %1078 = vst [vmem:[%s198 + $0x58] sm:$0xff] %v1014
        %1079 = vst [vmem:[%s198 + $0x60] sm:$0xff] %v1015
        %1080 = vst [vmem:[%s198 + $0x68] sm:$0xff] %v1016
        %1081 = vst [vmem:[%s198 + $0x70] sm:$0xff] %v1017
        %1082 = vst [vmem:[%s198 + $0x78] sm:$0xff] %v1018
        %1083 = vst [vmem:[%s198 + $0x80] sm:$0xff] %v1019
        %1084 = vst [vmem:[%s198 + $0x88] sm:$0xff] %v1020
        %1085 = vst [vmem:[%s198 + $0x90] sm:$0xff] %v1021
        %1086 = vst [vmem:[%s198 + $0x98] sm:$0xff] %v1022
        %1087 = vst [vmem:[%s198 + $0xa0] sm:$0xff] %v1023
        %1088 = vst [vmem:[%s198 + $0xa8] sm:$0xff] %v1024
        %1089 = vst [vmem:[%s198 + $0xb0] sm:$0xff] %v1025
        %1090 = vst [vmem:[%s198 + $0xb8] sm:$0xff] %v1026
        %1091 = vst [vmem:[%s198 + $0xc0] sm:$0xff] %v1027
        %1092 = vst [vmem:[%s198 + $0xc8] sm:$0xff] %v1028
        %1093 = vst [vmem:[%s198 + $0xd0] sm:$0xff] %v1029
        %1094 = vst [vmem:[%s198 + $0xd8] sm:$0xff] %v1030
        %1095 = vst [vmem:[%s198 + $0xe0] sm:$0xff] %v1031
        %1096 = vst [vmem:[%s198 + $0xe8] sm:$0xff] %v1032
        %1097 = vst [vmem:[%s198 + $0xf0] sm:$0xff] %v1033
        %1098 = vst [vmem:[%s198 + $0xf8] sm:$0xff] %v1034
        %1099 = vst [vmem:[%s198 + $0x100] sm:$0xff] %v1035
        %1100 = vst [vmem:[%s198 + $0x108] sm:$0xff] %v1036
        %1101 = vst [vmem:[%s198 + $0x110] sm:$0xff] %v1037
        %1102 = vst [vmem:[%s198 + $0x118] sm:$0xff] %v1038
        %1103 = vst [vmem:[%s198 + $0x120] sm:$0xff] %v1039
        %1104 = vst [vmem:[%s198 + $0x128] sm:$0xff] %v1040
        %1105 = vst [vmem:[%s198 + $0x130] sm:$0xff] %v1041
        %1106 = vst [vmem:[%s198 + $0x138] sm:$0xff] %v1042
        %1107 = vst [vmem:[%s198 + $0x140] sm:$0xff] %v1043
        %1108 = vst [vmem:[%s198 + $0x148] sm:$0xff] %v1044
        %1109 = vst [vmem:[%s198 + $0x150] sm:$0xff] %v1045
        %1110 = vst [vmem:[%s198 + $0x158] sm:$0xff] %v1046
        %1111 = vst [vmem:[%s198 + $0x160] sm:$0xff] %v1047
        %1112 = vst [vmem:[%s198 + $0x168] sm:$0xff] %v1048
        %1113 = vst [vmem:[%s198 + $0x170] sm:$0xff] %v1049
        %1114 = vst [vmem:[%s198 + $0x178] sm:$0xff] %v1050
        %1115 = vst [vmem:[%s198 + $0x180] sm:$0xff] %v1051
        %1116 = vst [vmem:[%s198 + $0x188] sm:$0xff] %v1052
        %1117 = vst [vmem:[%s198 + $0x190] sm:$0xff] %v1053
        %1118 = vst [vmem:[%s198 + $0x198] sm:$0xff] %v1054
        %1119 = vst [vmem:[%s198 + $0x1a0] sm:$0xff] %v1055
        %1120 = vst [vmem:[%s198 + $0x1a8] sm:$0xff] %v1056
        %1121 = vst [vmem:[%s198 + $0x1b0] sm:$0xff] %v1057
        %1122 = vst [vmem:[%s198 + $0x1b8] sm:$0xff] %v1058
        %1123 = vst [vmem:[%s198 + $0x1c0] sm:$0xff] %v1059
        %1124 = vst [vmem:[%s198 + $0x1c8] sm:$0xff] %v1060
        %1125 = vst [vmem:[%s198 + $0x1d0] sm:$0xff] %v1061
        %1126 = vst [vmem:[%s198 + $0x1d8] sm:$0xff] %v1062
        %1127 = vst [vmem:[%s198 + $0x1e0] sm:$0xff] %v1063
        %1128 = vst [vmem:[%s198 + $0x1e8] sm:$0xff] %v1064
        %1129 = vst [vmem:[%s198 + $0x1f0] sm:$0xff] %v1065
        %1130 = vst [vmem:[%s198 + $0x1f8] sm:$0xff] %v1066
        %s1131 = sand.u32 %s94, 1
        %s1132 = scalar_lea.sflag [#allocation4], %s1131
        %s1133 = sand.u32 %s94, 1
        %s1134 = smul.addr %s1133, 512
        %s1135 = scalar_lea.vmem [#allocation7], %s1134
        // Predicated region
        $region37: #{generator_forward.7} parent=27 // pred_check
          %p1136 = pneg %p104
        $region38: #{generator_forward.7} parent=27 // pred_check_branch
          %1138 = sbr.rel (%p1136) target = $region40
        $region39: #{generator_forward.7} parent=27 // pred_region
          %s1139 = smul.u32 64, %s24
          %s1141 = ssub.s32 8192, 8192
          %1142 = vsyncadd %s1132, %s1141
          %s1143 = sadd.s32 %s25, %s1139
          %s1144 = smul.addr %s1143, 128
          %s1145 = scalar_lea.hbm %s2, %s1144
          %s1146 = sshll.u32 %s1135, 4
          %s1147 = int_to_ptr.vmem [resolvable:$true] %s1146
          %1152 = dma.vmem_to_hbm [thread:$0]  %s1147, 8192, %s1145, %s1132, 128, 128, 8
        $region40: #{generator_forward.7} parent=27 // pred_fallthru
          _
      $region28: #{generator_forward.7} parent=5 // pred_fallthru
        _
      %p1153 = scmp.le.s32.totalorder 2, %s15
      // Predicated region
      $region41: #{generator_forward.7} parent=5 // pred_check
        %p1154 = pneg %p1153
      $region42: #{generator_forward.7} parent=5 // pred_check_branch
        %1156 = sbr.rel (%p1154) target = $region44
      $region43: #{generator_forward.7} parent=5 // pred_region
        %s1157 = ssub.s32 %s15, 2
        // Predicated region
        $region45: #{generator_forward.7} parent=43 // pred_check
          %p1158 = pneg %p110
        $region46: #{generator_forward.7} parent=43 // pred_check_branch
          %1160 = sbr.rel (%p1158) target = $region48
        $region47: #{generator_forward.7} parent=43 // pred_region
          %s1161 = sand.u32 %s95, 1
          %s1162 = scalar_lea.sflag [#allocation4], %s1161
          %s1163 = sand.u32 %s95, 1
          %s1164 = smul.addr %s1163, 512
          %s1165 = scalar_lea.vmem [#allocation7], %s1164
          %1166 = dma.done %s1162, 8192
        $region48: #{generator_forward.7} parent=43 // pred_fallthru
          _
      $region44: #{generator_forward.7} parent=5 // pred_fallthru
        _
    $region6: #{generator_forward.7} parent=1 // loop_footer
      %s19 = sadd.s32 1, %s15
    $region7: #{generator_forward.7} parent=1 // loop_footer_branch
      %14 = sbr.rel target = $region3
    $region8: #{generator_forward.7} parent=1 // loop_exit
      _
    %1167 = vsyncpa [#allocation3], 1
    %s1168 = scalar_lea.sflag [#allocation3], 1
    %1169 = vsyncpa %s1168, 1
    %1170 = vsyncpa [#allocation6], 1
    %1171 = vsyncpa [#allocation4], 1
    %s1172 = scalar_lea.sflag [#allocation4], 1
    %1173 = vsyncpa %s1172, 1

</llo_original>
